<compile_context>
chip_gen: v7x
topology: tpu7x:2x2x1
jax: 0.10.0
libtpu: 0.0.40
codegen_flags: <defaults>
</compile_context>

<pallas_src>
import numpy as np
import jax
import jax.numpy as jnp
from jax.experimental import pallas as pl
from jax.experimental.pallas import tpu as pltpu


# ----------------------------------------------------------------------------
# Pallas kernel: full forward pass (up to the set-pooled features) for ONE batch
# element per grid step.
# ----------------------------------------------------------------------------
def _make_kernel(n, hid, out_dim):
    n3 = n * n * n
    f32 = jnp.float32

    def eq_layer(t4, w_ref, b_ref, hin):
        """Equivariant 3->3 layer on a (n, n, n, hin) channels-last tensor.

        Basis = identity + mean-pool over every non-empty subset of the three set
        axes (broadcast back).  The 8 basis outputs are concatenated along the
        channel (lane) axis and mixed with ONE stacked (8*hin, hout) MXU matmul.
        """
        full = (n, n, n, hin)
        m_i = jnp.mean(t4, axis=0, keepdims=True)        # pool over i
        m_j = jnp.mean(t4, axis=1, keepdims=True)        # pool over j
        m_k = jnp.mean(t4, axis=2, keepdims=True)        # pool over k
        m_ij = jnp.mean(m_i, axis=1, keepdims=True)      # pool over i,j
        m_ik = jnp.mean(m_i, axis=2, keepdims=True)      # pool over i,k
        m_jk = jnp.mean(m_j, axis=2, keepdims=True)      # pool over j,k
        m_ijk = jnp.mean(m_ij, axis=2, keepdims=True)    # pool over i,j,k
        parts = (t4, m_i, m_j, m_k, m_ij, m_ik, m_jk, m_ijk)
        stacked = jnp.concatenate(
            [jnp.broadcast_to(p, full).reshape(n3, hin) for p in parts], axis=-1)
        out = jnp.dot(stacked, w_ref[...], preferred_element_type=f32)
        return out + b_ref[...]                          # (n3, hout)

    def kernel(x_ref, w1_ref, b1_ref, w2_ref, b2_ref,
               eq1w_ref, eq1b_ref, eq2w_ref, eq2b_ref, o_ref):
        x = x_ref[0]                                                     # (n, in_dim)

        # ---- embed: Linear -> ReLU -> Linear -> ReLU ----------------------------------
        e = jnp.dot(x, w1_ref[...], preferred_element_type=f32) + b1_ref[...]
        e = jnp.maximum(e, 0.0)
        e = jnp.dot(e, w2_ref[...], preferred_element_type=f32) + b2_ref[...]
        e = jnp.maximum(e, 0.0)                                          # (n, hid)

        # ---- triple outer product (channels-last): t[i,j,k,d] = e[i,d]*e[j,d]*e[k,d] --
        t4 = (e[:, None, None, :] * e[None, :, None, :]) * e[None, None, :, :]

        # ---- two equivariant 3->3 layers -----------------------------------------------
        h = jnp.maximum(eq_layer(t4, eq1w_ref, eq1b_ref, hid), 0.0)      # (n3, hid)
        y = eq_layer(h.reshape(n, n, n, hid), eq2w_ref, eq2b_ref, hid)   # (n3, out_dim)
        y = jnp.maximum(y, 0.0)

        # ---- sum over the three set axes (ones-row matmul keeps it on the MXU), ReLU ---
        ones_row = jnp.ones((1, n3), f32)
        pooled = jnp.dot(ones_row, y, preferred_element_type=f32)        # (1, out_dim)
        pooled = jnp.maximum(pooled, 0.0)
        o_ref[...] = pooled.reshape(o_ref.shape)

    return kernel


# ----------------------------------------------------------------------------
# Host-side glue.
# ----------------------------------------------------------------------------
def init_params(key, in_dim, hid, out_dim):
    ks = jax.random.split(key, 10)
    s, bs = 0.2, 0.05
    return dict(
        w1=jax.random.normal(ks[0], (in_dim, hid), jnp.float32) * s,
        b1=jax.random.normal(ks[1], (1, hid), jnp.float32) * bs,
        w2=jax.random.normal(ks[2], (hid, hid), jnp.float32) * s,
        b2=jax.random.normal(ks[3], (1, hid), jnp.float32) * bs,
        eq1_w=jax.random.normal(ks[4], (8, hid, hid), jnp.float32) * s,
        eq1_b=jax.random.normal(ks[5], (1, hid), jnp.float32) * bs,
        eq2_w=jax.random.normal(ks[6], (8, hid, out_dim), jnp.float32) * s,
        eq2_b=jax.random.normal(ks[7], (1, out_dim), jnp.float32) * bs,
        wo=jax.random.normal(ks[8], (out_dim, 1), jnp.float32) * s,
        bo=jax.random.normal(ks[9], (1, 1), jnp.float32) * bs,
    )


def unique_eq3_forward(x, params):
    B, N, in_dim = x.shape
    H = params["w1"].shape[1]
    out_dim = params["eq2_w"].shape[2]

    # Stack the 8 per-basis channel-mixing weights into one (8H, hout) matrix so each
    # equivariant layer is a single K=8H MXU matmul inside the kernel.
    eq1_ws = params["eq1_w"].reshape(8 * H, H)
    eq2_ws = params["eq2_w"].reshape(8 * H, out_dim)

    kernel = _make_kernel(N, H, out_dim)

    in_specs = [
        pl.BlockSpec((1, N, in_dim), lambda b: (b, 0, 0)),    # x: one batch element/step
        pl.BlockSpec((in_dim, H), lambda b: (0, 0)),          # w1
        pl.BlockSpec((1, H), lambda b: (0, 0)),               # b1
        pl.BlockSpec((H, H), lambda b: (0, 0)),               # w2
        pl.BlockSpec((1, H), lambda b: (0, 0)),               # b2
        pl.BlockSpec((8 * H, H), lambda b: (0, 0)),           # eq layer 1 stacked weights
        pl.BlockSpec((1, H), lambda b: (0, 0)),               # eq layer 1 bias
        pl.BlockSpec((8 * H, out_dim), lambda b: (0, 0)),     # eq layer 2 stacked weights
        pl.BlockSpec((1, out_dim), lambda b: (0, 0)),         # eq layer 2 bias
    ]
    out_specs = pl.BlockSpec((1, 1, out_dim), lambda b: (b, 0, 0))

    pooled = pl.pallas_call(
        kernel,
        out_shape=jax.ShapeDtypeStruct((B, 1, out_dim), jnp.float32),
        grid_spec=pltpu.PrefetchScalarGridSpec(
            num_scalar_prefetch=0,
            grid=(B,),
            in_specs=in_specs,
            out_specs=out_specs,
        ),
        compiler_params=pltpu.CompilerParams(
            dimension_semantics=("parallel",),
        ),
    )(x, params["w1"], params["b1"], params["w2"], params["b2"],
      eq1_ws, params["eq1_b"], eq2_ws, params["eq2_b"])

    # Final Linear(out_dim, 1) on the tiny (B, out_dim) pooled features stays in XLA
    # (avoids lane-sparse (1,1) stores and a padded 16x1 matmul in the kernel).
    pooled = pooled.reshape(B, out_dim)
    return pooled @ params["wo"] + params["bo"]               # (B, 1)


# ----------------------------------------------------------------------------
# Pure-JAX reference (same math, explicit per-basis accumulation) for correctness.
# ----------------------------------------------------------------------------
def reference_forward(x, params):
    with jax.default_matmul_precision("highest"):
        def eq(t4, w, b):
            full = t4.shape
            pools = [
                t4,
                jnp.broadcast_to(jnp.mean(t4, axis=0, keepdims=True), full),
                jnp.broadcast_to(jnp.mean(t4, axis=1, keepdims=True), full),
                jnp.broadcast_to(jnp.mean(t4, axis=2, keepdims=True), full),
                jnp.broadcast_to(jnp.mean(t4, axis=(0, 1), keepdims=True), full),
                jnp.broadcast_to(jnp.mean(t4, axis=(0, 2), keepdims=True), full),
                jnp.broadcast_to(jnp.mean(t4, axis=(1, 2), keepdims=True), full),
                jnp.broadcast_to(jnp.mean(t4, axis=(0, 1, 2), keepdims=True), full),
            ]
            out = sum(jnp.einsum('ijkc,cd->ijkd', p, w[s]) for s, p in enumerate(pools))
            return out + b[0]

        def one(xb):
            e = jax.nn.relu(xb @ params["w1"] + params["b1"][0])
            e = jax.nn.relu(e @ params["w2"] + params["b2"][0])
            t = e[:, None, None, :] * e[None, :, None, :] * e[None, None, :, :]
            h = jax.nn.relu(eq(t, params["eq1_w"], params["eq1_b"]))
            y = jax.nn.relu(eq(h, params["eq2_w"], params["eq2_b"]))
            pooled = jax.nn.relu(jnp.sum(y, axis=(0, 1, 2)))
            return pooled @ params["wo"][:, 0] + params["bo"][0, 0]

        return jax.vmap(one)(x)[:, None]


if __name__ == "__main__":
    B, N, in_dim, hid, out_dim = 2, 8, 8, 32, 16

    key = jax.random.PRNGKey(0)
    kx, kp = jax.random.split(key)
    x = jax.random.normal(kx, (B, N, in_dim), jnp.float32)
    params = init_params(kp, in_dim, hid, out_dim)

    out = unique_eq3_forward(x, params)
    out = jax.block_until_ready(out)

    ref = reference_forward(x, params)
    np.testing.assert_allclose(np.asarray(out), np.asarray(ref), rtol=2e-2, atol=1e-2)
    print("KERNEL_OK")
</pallas_src>

<mosaic_0001>
module attributes {stable_mosaic.version = 11 : i64} {
  func.func @kernel(%arg0: i32, %arg1: memref<1x8x8xf32, #tpu.memory_space<vmem>>, %arg2: memref<8x32xf32, #tpu.memory_space<vmem>>, %arg3: memref<1x32xf32, #tpu.memory_space<vmem>>, %arg4: memref<32x32xf32, #tpu.memory_space<vmem>>, %arg5: memref<1x32xf32, #tpu.memory_space<vmem>>, %arg6: memref<256x32xf32, #tpu.memory_space<vmem>>, %arg7: memref<1x32xf32, #tpu.memory_space<vmem>>, %arg8: memref<256x16xf32, #tpu.memory_space<vmem>>, %arg9: memref<1x16xf32, #tpu.memory_space<vmem>>, %arg10: memref<1x1x16xf32, #tpu.memory_space<vmem>>) attributes {dimension_semantics = [#tpu.dimension_semantics<parallel>], iteration_bounds = array<i64: 2>, scalar_prefetch = 0 : i64, scratch_operands = 0 : i64, tpu.core_type = #tpu.core_type<tc>, window_params = [{transform_indices = @transform_0, window_bounds = array<i64: 1, 8, 8>}, {pipeline_mode = #tpu.pipeline_mode<synchronous>, transform_indices = @transform_1, window_bounds = array<i64: 8, 32>}, {pipeline_mode = #tpu.pipeline_mode<synchronous>, transform_indices = @transform_2, window_bounds = array<i64: 1, 32>}, {pipeline_mode = #tpu.pipeline_mode<synchronous>, transform_indices = @transform_3, window_bounds = array<i64: 32, 32>}, {pipeline_mode = #tpu.pipeline_mode<synchronous>, transform_indices = @transform_4, window_bounds = array<i64: 1, 32>}, {pipeline_mode = #tpu.pipeline_mode<synchronous>, transform_indices = @transform_5, window_bounds = array<i64: 256, 32>}, {pipeline_mode = #tpu.pipeline_mode<synchronous>, transform_indices = @transform_6, window_bounds = array<i64: 1, 32>}, {pipeline_mode = #tpu.pipeline_mode<synchronous>, transform_indices = @transform_7, window_bounds = array<i64: 256, 16>}, {pipeline_mode = #tpu.pipeline_mode<synchronous>, transform_indices = @transform_8, window_bounds = array<i64: 1, 16>}, {transform_indices = @transform_9, window_bounds = array<i64: 1, 1, 16>}]} {
    %c0 = arith.constant 0 : index
    %c0_0 = arith.constant 0 : index
    %c0_1 = arith.constant 0 : index
    %0 = vector.load %arg1[%c0, %c0_0, %c0_1] : memref<1x8x8xf32, #tpu.memory_space<vmem>>, vector<1x8x8xf32>
    %1 = vector.shape_cast %0 : vector<1x8x8xf32> to vector<8x8xf32>
    %c0_2 = arith.constant 0 : index
    %c0_3 = arith.constant 0 : index
    %2 = vector.load %arg2[%c0_2, %c0_3] : memref<8x32xf32, #tpu.memory_space<vmem>>, vector<8x32xf32>
    %cst = arith.constant dense<0.000000e+00> : vector<8x32xf32>
    %3 = tpu.matmul %1, %2, %cst {dimension_numbers = #tpu.dot_dimension_numbers<[1], [0], [0], [1], [0, 0, 1, 1], [], []>} : vector<8x8xf32>, vector<8x32xf32>, vector<8x32xf32> -> vector<8x32xf32>
    %c0_4 = arith.constant 0 : index
    %c0_5 = arith.constant 0 : index
    %4 = vector.load %arg3[%c0_4, %c0_5] : memref<1x32xf32, #tpu.memory_space<vmem>>, vector<1x32xf32>
    %5 = vector.broadcast %4 : vector<1x32xf32> to vector<8x32xf32>
    %6 = arith.addf %3, %5 : vector<8x32xf32>
    %cst_6 = arith.constant 0.000000e+00 : f32
    %7 = vector.broadcast %cst_6 : f32 to vector<8x32xf32>
    %8 = arith.maximumf %6, %7 : vector<8x32xf32>
    %c0_7 = arith.constant 0 : index
    %c0_8 = arith.constant 0 : index
    %9 = vector.load %arg4[%c0_7, %c0_8] : memref<32x32xf32, #tpu.memory_space<vmem>>, vector<32x32xf32>
    %cst_9 = arith.constant dense<0.000000e+00> : vector<8x32xf32>
    %10 = tpu.matmul %8, %9, %cst_9 {dimension_numbers = #tpu.dot_dimension_numbers<[1], [0], [0], [1], [0, 0, 1, 1], [], []>} : vector<8x32xf32>, vector<32x32xf32>, vector<8x32xf32> -> vector<8x32xf32>
    %c0_10 = arith.constant 0 : index
    %c0_11 = arith.constant 0 : index
    %11 = vector.load %arg5[%c0_10, %c0_11] : memref<1x32xf32, #tpu.memory_space<vmem>>, vector<1x32xf32>
    %12 = vector.broadcast %11 : vector<1x32xf32> to vector<8x32xf32>
    %13 = arith.addf %10, %12 : vector<8x32xf32>
    %cst_12 = arith.constant 0.000000e+00 : f32
    %14 = vector.broadcast %cst_12 : f32 to vector<8x32xf32>
    %15 = arith.maximumf %13, %14 : vector<8x32xf32>
    %16 = vector.shape_cast %15 : vector<8x32xf32> to vector<8x1x1x32xf32>
    %17 = vector.shape_cast %15 : vector<8x32xf32> to vector<1x8x1x32xf32>
    %18 = vector.broadcast %16 : vector<8x1x1x32xf32> to vector<8x8x1x32xf32>
    %19 = vector.broadcast %17 : vector<1x8x1x32xf32> to vector<8x8x1x32xf32>
    %20 = arith.mulf %18, %19 : vector<8x8x1x32xf32>
    %21 = vector.shape_cast %15 : vector<8x32xf32> to vector<1x1x8x32xf32>
    %22 = vector.broadcast %20 : vector<8x8x1x32xf32> to vector<8x8x8x32xf32>
    %23 = vector.broadcast %21 : vector<1x1x8x32xf32> to vector<8x8x8x32xf32>
    %24 = arith.mulf %22, %23 : vector<8x8x8x32xf32>
    %cst_13 = arith.constant dense<0.000000e+00> : vector<8x8x32xf32>
    %25 = vector.multi_reduction <add>, %24, %cst_13 [0] : vector<8x8x8x32xf32> to vector<8x8x32xf32>
    %26 = vector.shape_cast %25 : vector<8x8x32xf32> to vector<1x8x8x32xf32>
    %cst_14 = arith.constant 8.000000e+00 : f32
    %27 = vector.broadcast %cst_14 : f32 to vector<1x8x8x32xf32>
    %28 = arith.divf %26, %27 : vector<1x8x8x32xf32>
    %cst_15 = arith.constant dense<0.000000e+00> : vector<8x8x32xf32>
    %29 = vector.multi_reduction <add>, %24, %cst_15 [1] : vector<8x8x8x32xf32> to vector<8x8x32xf32>
    %30 = vector.shape_cast %29 : vector<8x8x32xf32> to vector<8x1x8x32xf32>
    %cst_16 = arith.constant 8.000000e+00 : f32
    %31 = vector.broadcast %cst_16 : f32 to vector<8x1x8x32xf32>
    %32 = arith.divf %30, %31 : vector<8x1x8x32xf32>
    %cst_17 = arith.constant dense<0.000000e+00> : vector<8x8x32xf32>
    %33 = vector.multi_reduction <add>, %24, %cst_17 [2] : vector<8x8x8x32xf32> to vector<8x8x32xf32>
    %34 = vector.shape_cast %33 : vector<8x8x32xf32> to vector<8x8x1x32xf32>
    %cst_18 = arith.constant 8.000000e+00 : f32
    %35 = vector.broadcast %cst_18 : f32 to vector<8x8x1x32xf32>
    %36 = arith.divf %34, %35 : vector<8x8x1x32xf32>
    %cst_19 = arith.constant dense<0.000000e+00> : vector<1x8x32xf32>
    %37 = vector.multi_reduction <add>, %28, %cst_19 [1] : vector<1x8x8x32xf32> to vector<1x8x32xf32>
    %38 = vector.shape_cast %37 : vector<1x8x32xf32> to vector<1x1x8x32xf32>
    %cst_20 = arith.constant 8.000000e+00 : f32
    %39 = vector.broadcast %cst_20 : f32 to vector<1x1x8x32xf32>
    %40 = arith.divf %38, %39 : vector<1x1x8x32xf32>
    %cst_21 = arith.constant dense<0.000000e+00> : vector<1x8x32xf32>
    %41 = vector.multi_reduction <add>, %28, %cst_21 [2] : vector<1x8x8x32xf32> to vector<1x8x32xf32>
    %42 = vector.shape_cast %41 : vector<1x8x32xf32> to vector<1x8x1x32xf32>
    %cst_22 = arith.constant 8.000000e+00 : f32
    %43 = vector.broadcast %cst_22 : f32 to vector<1x8x1x32xf32>
    %44 = arith.divf %42, %43 : vector<1x8x1x32xf32>
    %cst_23 = arith.constant dense<0.000000e+00> : vector<8x1x32xf32>
    %45 = vector.multi_reduction <add>, %32, %cst_23 [2] : vector<8x1x8x32xf32> to vector<8x1x32xf32>
    %46 = vector.shape_cast %45 : vector<8x1x32xf32> to vector<8x1x1x32xf32>
    %cst_24 = arith.constant 8.000000e+00 : f32
    %47 = vector.broadcast %cst_24 : f32 to vector<8x1x1x32xf32>
    %48 = arith.divf %46, %47 : vector<8x1x1x32xf32>
    %cst_25 = arith.constant dense<0.000000e+00> : vector<1x1x32xf32>
    %49 = vector.multi_reduction <add>, %40, %cst_25 [2] : vector<1x1x8x32xf32> to vector<1x1x32xf32>
    %50 = vector.shape_cast %49 : vector<1x1x32xf32> to vector<1x1x1x32xf32>
    %cst_26 = arith.constant 8.000000e+00 : f32
    %51 = vector.broadcast %cst_26 : f32 to vector<1x1x1x32xf32>
    %52 = arith.divf %50, %51 : vector<1x1x1x32xf32>
    %53 = vector.shape_cast %24 : vector<8x8x8x32xf32> to vector<512x32xf32>
    %54 = vector.shape_cast %28 : vector<1x8x8x32xf32> to vector<1x8x8x32xf32>
    %55 = vector.broadcast %54 : vector<1x8x8x32xf32> to vector<8x8x8x32xf32>
    %56 = vector.shape_cast %55 : vector<8x8x8x32xf32> to vector<512x32xf32>
    %57 = vector.shape_cast %32 : vector<8x1x8x32xf32> to vector<8x1x8x32xf32>
    %58 = vector.broadcast %57 : vector<8x1x8x32xf32> to vector<8x8x8x32xf32>
    %59 = vector.shape_cast %58 : vector<8x8x8x32xf32> to vector<512x32xf32>
    %60 = vector.shape_cast %36 : vector<8x8x1x32xf32> to vector<8x8x1x32xf32>
    %61 = vector.broadcast %60 : vector<8x8x1x32xf32> to vector<8x8x8x32xf32>
    %62 = vector.shape_cast %61 : vector<8x8x8x32xf32> to vector<512x32xf32>
    %63 = vector.shape_cast %40 : vector<1x1x8x32xf32> to vector<1x1x8x32xf32>
    %64 = vector.broadcast %63 : vector<1x1x8x32xf32> to vector<8x8x8x32xf32>
    %65 = vector.shape_cast %64 : vector<8x8x8x32xf32> to vector<512x32xf32>
    %66 = vector.shape_cast %44 : vector<1x8x1x32xf32> to vector<1x8x1x32xf32>
    %67 = vector.broadcast %66 : vector<1x8x1x32xf32> to vector<8x8x8x32xf32>
    %68 = vector.shape_cast %67 : vector<8x8x8x32xf32> to vector<512x32xf32>
    %69 = vector.shape_cast %48 : vector<8x1x1x32xf32> to vector<8x1x1x32xf32>
    %70 = vector.broadcast %69 : vector<8x1x1x32xf32> to vector<8x8x8x32xf32>
    %71 = vector.shape_cast %70 : vector<8x8x8x32xf32> to vector<512x32xf32>
    %72 = vector.shape_cast %52 : vector<1x1x1x32xf32> to vector<1x1x1x32xf32>
    %73 = vector.broadcast %72 : vector<1x1x1x32xf32> to vector<8x8x8x32xf32>
    %74 = vector.shape_cast %73 : vector<8x8x8x32xf32> to vector<512x32xf32>
    %75 = tpu.concatenate %53, %56, %59, %62, %65, %68, %71, %74 in 1 : vector<512x32xf32>, vector<512x32xf32>, vector<512x32xf32>, vector<512x32xf32>, vector<512x32xf32>, vector<512x32xf32>, vector<512x32xf32>, vector<512x32xf32> -> vector<512x256xf32>
    %c0_27 = arith.constant 0 : index
    %c0_28 = arith.constant 0 : index
    %76 = vector.load %arg6[%c0_27, %c0_28] : memref<256x32xf32, #tpu.memory_space<vmem>>, vector<256x32xf32>
    %cst_29 = arith.constant dense<0.000000e+00> : vector<512x32xf32>
    %77 = tpu.matmul %75, %76, %cst_29 {dimension_numbers = #tpu.dot_dimension_numbers<[1], [0], [0], [1], [0, 0, 1, 1], [], []>} : vector<512x256xf32>, vector<256x32xf32>, vector<512x32xf32> -> vector<512x32xf32>
    %c0_30 = arith.constant 0 : index
    %c0_31 = arith.constant 0 : index
    %78 = vector.load %arg7[%c0_30, %c0_31] : memref<1x32xf32, #tpu.memory_space<vmem>>, vector<1x32xf32>
    %79 = vector.broadcast %78 : vector<1x32xf32> to vector<512x32xf32>
    %80 = arith.addf %77, %79 : vector<512x32xf32>
    %cst_32 = arith.constant 0.000000e+00 : f32
    %81 = vector.broadcast %cst_32 : f32 to vector<512x32xf32>
    %82 = arith.maximumf %80, %81 : vector<512x32xf32>
    %83 = vector.shape_cast %82 : vector<512x32xf32> to vector<8x8x8x32xf32>
    %cst_33 = arith.constant dense<0.000000e+00> : vector<8x8x32xf32>
    %84 = vector.multi_reduction <add>, %83, %cst_33 [0] : vector<8x8x8x32xf32> to vector<8x8x32xf32>
    %85 = vector.shape_cast %84 : vector<8x8x32xf32> to vector<1x8x8x32xf32>
    %cst_34 = arith.constant 8.000000e+00 : f32
    %86 = vector.broadcast %cst_34 : f32 to vector<1x8x8x32xf32>
    %87 = arith.divf %85, %86 : vector<1x8x8x32xf32>
    %cst_35 = arith.constant dense<0.000000e+00> : vector<8x8x32xf32>
    %88 = vector.multi_reduction <add>, %83, %cst_35 [1] : vector<8x8x8x32xf32> to vector<8x8x32xf32>
    %89 = vector.shape_cast %88 : vector<8x8x32xf32> to vector<8x1x8x32xf32>
    %cst_36 = arith.constant 8.000000e+00 : f32
    %90 = vector.broadcast %cst_36 : f32 to vector<8x1x8x32xf32>
    %91 = arith.divf %89, %90 : vector<8x1x8x32xf32>
    %cst_37 = arith.constant dense<0.000000e+00> : vector<8x8x32xf32>
    %92 = vector.multi_reduction <add>, %83, %cst_37 [2] : vector<8x8x8x32xf32> to vector<8x8x32xf32>
    %93 = vector.shape_cast %92 : vector<8x8x32xf32> to vector<8x8x1x32xf32>
    %cst_38 = arith.constant 8.000000e+00 : f32
    %94 = vector.broadcast %cst_38 : f32 to vector<8x8x1x32xf32>
    %95 = arith.divf %93, %94 : vector<8x8x1x32xf32>
    %cst_39 = arith.constant dense<0.000000e+00> : vector<1x8x32xf32>
    %96 = vector.multi_reduction <add>, %87, %cst_39 [1] : vector<1x8x8x32xf32> to vector<1x8x32xf32>
    %97 = vector.shape_cast %96 : vector<1x8x32xf32> to vector<1x1x8x32xf32>
    %cst_40 = arith.constant 8.000000e+00 : f32
    %98 = vector.broadcast %cst_40 : f32 to vector<1x1x8x32xf32>
    %99 = arith.divf %97, %98 : vector<1x1x8x32xf32>
    %cst_41 = arith.constant dense<0.000000e+00> : vector<1x8x32xf32>
    %100 = vector.multi_reduction <add>, %87, %cst_41 [2] : vector<1x8x8x32xf32> to vector<1x8x32xf32>
    %101 = vector.shape_cast %100 : vector<1x8x32xf32> to vector<1x8x1x32xf32>
    %cst_42 = arith.constant 8.000000e+00 : f32
    %102 = vector.broadcast %cst_42 : f32 to vector<1x8x1x32xf32>
    %103 = arith.divf %101, %102 : vector<1x8x1x32xf32>
    %cst_43 = arith.constant dense<0.000000e+00> : vector<8x1x32xf32>
    %104 = vector.multi_reduction <add>, %91, %cst_43 [2] : vector<8x1x8x32xf32> to vector<8x1x32xf32>
    %105 = vector.shape_cast %104 : vector<8x1x32xf32> to vector<8x1x1x32xf32>
    %cst_44 = arith.constant 8.000000e+00 : f32
    %106 = vector.broadcast %cst_44 : f32 to vector<8x1x1x32xf32>
    %107 = arith.divf %105, %106 : vector<8x1x1x32xf32>
    %cst_45 = arith.constant dense<0.000000e+00> : vector<1x1x32xf32>
    %108 = vector.multi_reduction <add>, %99, %cst_45 [2] : vector<1x1x8x32xf32> to vector<1x1x32xf32>
    %109 = vector.shape_cast %108 : vector<1x1x32xf32> to vector<1x1x1x32xf32>
    %cst_46 = arith.constant 8.000000e+00 : f32
    %110 = vector.broadcast %cst_46 : f32 to vector<1x1x1x32xf32>
    %111 = arith.divf %109, %110 : vector<1x1x1x32xf32>
    %112 = vector.shape_cast %83 : vector<8x8x8x32xf32> to vector<512x32xf32>
    %113 = vector.shape_cast %87 : vector<1x8x8x32xf32> to vector<1x8x8x32xf32>
    %114 = vector.broadcast %113 : vector<1x8x8x32xf32> to vector<8x8x8x32xf32>
    %115 = vector.shape_cast %114 : vector<8x8x8x32xf32> to vector<512x32xf32>
    %116 = vector.shape_cast %91 : vector<8x1x8x32xf32> to vector<8x1x8x32xf32>
    %117 = vector.broadcast %116 : vector<8x1x8x32xf32> to vector<8x8x8x32xf32>
    %118 = vector.shape_cast %117 : vector<8x8x8x32xf32> to vector<512x32xf32>
    %119 = vector.shape_cast %95 : vector<8x8x1x32xf32> to vector<8x8x1x32xf32>
    %120 = vector.broadcast %119 : vector<8x8x1x32xf32> to vector<8x8x8x32xf32>
    %121 = vector.shape_cast %120 : vector<8x8x8x32xf32> to vector<512x32xf32>
    %122 = vector.shape_cast %99 : vector<1x1x8x32xf32> to vector<1x1x8x32xf32>
    %123 = vector.broadcast %122 : vector<1x1x8x32xf32> to vector<8x8x8x32xf32>
    %124 = vector.shape_cast %123 : vector<8x8x8x32xf32> to vector<512x32xf32>
    %125 = vector.shape_cast %103 : vector<1x8x1x32xf32> to vector<1x8x1x32xf32>
    %126 = vector.broadcast %125 : vector<1x8x1x32xf32> to vector<8x8x8x32xf32>
    %127 = vector.shape_cast %126 : vector<8x8x8x32xf32> to vector<512x32xf32>
    %128 = vector.shape_cast %107 : vector<8x1x1x32xf32> to vector<8x1x1x32xf32>
    %129 = vector.broadcast %128 : vector<8x1x1x32xf32> to vector<8x8x8x32xf32>
    %130 = vector.shape_cast %129 : vector<8x8x8x32xf32> to vector<512x32xf32>
    %131 = vector.shape_cast %111 : vector<1x1x1x32xf32> to vector<1x1x1x32xf32>
    %132 = vector.broadcast %131 : vector<1x1x1x32xf32> to vector<8x8x8x32xf32>
    %133 = vector.shape_cast %132 : vector<8x8x8x32xf32> to vector<512x32xf32>
    %134 = tpu.concatenate %112, %115, %118, %121, %124, %127, %130, %133 in 1 : vector<512x32xf32>, vector<512x32xf32>, vector<512x32xf32>, vector<512x32xf32>, vector<512x32xf32>, vector<512x32xf32>, vector<512x32xf32>, vector<512x32xf32> -> vector<512x256xf32>
    %c0_47 = arith.constant 0 : index
    %c0_48 = arith.constant 0 : index
    %135 = vector.load %arg8[%c0_47, %c0_48] : memref<256x16xf32, #tpu.memory_space<vmem>>, vector<256x16xf32>
    %cst_49 = arith.constant dense<0.000000e+00> : vector<512x16xf32>
    %136 = tpu.matmul %134, %135, %cst_49 {dimension_numbers = #tpu.dot_dimension_numbers<[1], [0], [0], [1], [0, 0, 1, 1], [], []>} : vector<512x256xf32>, vector<256x16xf32>, vector<512x16xf32> -> vector<512x16xf32>
    %c0_50 = arith.constant 0 : index
    %c0_51 = arith.constant 0 : index
    %137 = vector.load %arg9[%c0_50, %c0_51] : memref<1x16xf32, #tpu.memory_space<vmem>>, vector<1x16xf32>
    %138 = vector.broadcast %137 : vector<1x16xf32> to vector<512x16xf32>
    %139 = arith.addf %136, %138 : vector<512x16xf32>
    %cst_52 = arith.constant 0.000000e+00 : f32
    %140 = vector.broadcast %cst_52 : f32 to vector<512x16xf32>
    %141 = arith.maximumf %139, %140 : vector<512x16xf32>
    %cst_53 = arith.constant 1.000000e+00 : f32
    %142 = vector.broadcast %cst_53 : f32 to vector<1x512xf32>
    %cst_54 = arith.constant dense<0.000000e+00> : vector<1x16xf32>
    %143 = tpu.matmul %142, %141, %cst_54 {dimension_numbers = #tpu.dot_dimension_numbers<[1], [0], [0], [1], [0, 0, 1, 1], [], []>} : vector<1x512xf32>, vector<512x16xf32>, vector<1x16xf32> -> vector<1x16xf32>
    %cst_55 = arith.constant 0.000000e+00 : f32
    %144 = vector.broadcast %cst_55 : f32 to vector<1x16xf32>
    %145 = arith.maximumf %143, %144 : vector<1x16xf32>
    %146 = vector.shape_cast %145 : vector<1x16xf32> to vector<1x1x16xf32>
    %c0_56 = arith.constant 0 : index
    %c0_57 = arith.constant 0 : index
    %c0_58 = arith.constant 0 : index
    %147 = vector.load %arg10[%c0_56, %c0_57, %c0_58] : memref<1x1x16xf32, #tpu.memory_space<vmem>>, vector<1x1x16xf32>
    tpu.vector_store %arg10[%c0_56, %c0_57, %c0_58], %146 {strides = array<i32>} : memref<1x1x16xf32, #tpu.memory_space<vmem>>, vector<1x1x16xf32>,
    return
  }
  func.func @transform_0(%arg0: i32) -> (i32, i32, i32) {
    %c0_i32 = arith.constant 0 : i32
    %c0_i32_0 = arith.constant 0 : i32
    %c0_i32_1 = arith.constant 0 : i32
    return %arg0, %c0_i32, %c0_i32_0 : i32, i32, i32
  }
  func.func @transform_1(%arg0: i32) -> (i32, i32) {
    %c0_i32 = arith.constant 0 : i32
    %c0_i32_0 = arith.constant 0 : i32
    %c0_i32_1 = arith.constant 0 : i32
    return %c0_i32, %c0_i32_0 : i32, i32
  }
  func.func @transform_2(%arg0: i32) -> (i32, i32) {
    %c0_i32 = arith.constant 0 : i32
    %c0_i32_0 = arith.constant 0 : i32
    %c0_i32_1 = arith.constant 0 : i32
    return %c0_i32, %c0_i32_0 : i32, i32
  }
  func.func @transform_3(%arg0: i32) -> (i32, i32) {
    %c0_i32 = arith.constant 0 : i32
    %c0_i32_0 = arith.constant 0 : i32
    %c0_i32_1 = arith.constant 0 : i32
    return %c0_i32, %c0_i32_0 : i32, i32
  }
  func.func @transform_4(%arg0: i32) -> (i32, i32) {
    %c0_i32 = arith.constant 0 : i32
    %c0_i32_0 = arith.constant 0 : i32
    %c0_i32_1 = arith.constant 0 : i32
    return %c0_i32, %c0_i32_0 : i32, i32
  }
  func.func @transform_5(%arg0: i32) -> (i32, i32) {
    %c0_i32 = arith.constant 0 : i32
    %c0_i32_0 = arith.constant 0 : i32
    %c0_i32_1 = arith.constant 0 : i32
    return %c0_i32, %c0_i32_0 : i32, i32
  }
  func.func @transform_6(%arg0: i32) -> (i32, i32) {
    %c0_i32 = arith.constant 0 : i32
    %c0_i32_0 = arith.constant 0 : i32
    %c0_i32_1 = arith.constant 0 : i32
    return %c0_i32, %c0_i32_0 : i32, i32
  }
  func.func @transform_7(%arg0: i32) -> (i32, i32) {
    %c0_i32 = arith.constant 0 : i32
    %c0_i32_0 = arith.constant 0 : i32
    %c0_i32_1 = arith.constant 0 : i32
    return %c0_i32, %c0_i32_0 : i32, i32
  }
  func.func @transform_8(%arg0: i32) -> (i32, i32) {
    %c0_i32 = arith.constant 0 : i32
    %c0_i32_0 = arith.constant 0 : i32
    %c0_i32_1 = arith.constant 0 : i32
    return %c0_i32, %c0_i32_0 : i32, i32
  }
  func.func @transform_9(%arg0: i32) -> (i32, i32, i32) {
    %c0_i32 = arith.constant 0 : i32
    %c0_i32_0 = arith.constant 0 : i32
    %c0_i32_1 = arith.constant 0 : i32
    return %arg0, %c0_i32, %c0_i32_0 : i32, i32, i32
  }
}

</mosaic_0001>

<llo_original>
// kernel: tpu_custom_call.1
$region0: #{tpu_custom_call.1}
  #allocation0 [shape = 'u32[]', space=smem, size = 0x4, offset = 0x4, fixed_abs, tag = 'smem constant byte address 0x4 - core index']
  #allocation1 [shape = 'u32[144,128]{1,0:T(1,128)}', space=vmem, size = 0x12000, scoped, tag = 'internal scratch']
  %s0 = inlined_call_operand.vmem [shape: f32[2,8,8], index: 0, kind: input, shape index: {}]
  %s1 = inlined_call_operand.vmem [shape: f32[8,32], index: 1, kind: input, shape index: {}]
  %s2 = inlined_call_operand.vmem [shape: f32[1,32], index: 2, kind: input, shape index: {}]
  %s3 = inlined_call_operand.vmem [shape: f32[32,32], index: 3, kind: input, shape index: {}]
  %s4 = inlined_call_operand.vmem [shape: f32[1,32], index: 4, kind: input, shape index: {}]
  %s5 = inlined_call_operand.vmem [shape: f32[256,32], index: 5, kind: input, shape index: {}]
  %s6 = inlined_call_operand.vmem [shape: f32[1,32], index: 6, kind: input, shape index: {}]
  %s7 = inlined_call_operand.vmem [shape: f32[256,16], index: 7, kind: input, shape index: {}]
  %s8 = inlined_call_operand.vmem [shape: f32[1,16], index: 8, kind: input, shape index: {}]
  %s9 = inlined_call_operand.hbm [shape: f32[2,1,16], index: 9, kind: output, shape index: {}]
  %s10 = sld [smem:[#allocation0]]
  $region69: #{tpu_custom_call.1} parent=0
    _
  %s12 = ssub.s32 1, %s10
  %s13 = scalar_select 0, %s12, %s10
  $region1: #{tpu_custom_call.1} parent=0
    #allocation2 [shape = 'u8[1024]{0}', space=vmem, size = 0x400, scoped, tag = 'output window, operand 0']
    #allocation3 [shape = 's32[2]{0}', space=sflag, size = 0x8, scoped, tag = 'scoped memory for tpu_custom_call.1']
    %14 = vsyncpa [#allocation3], 0
    %s15 = scalar_lea.sflag [#allocation3], 1
    %16 = vsyncpa %s15, 0
    loop: start=0, step=1, limit=4
    $region2: #{tpu_custom_call.1} parent=1 // loop_pre_header
      _
    $region3: #{tpu_custom_call.1} parent=1 // loop_header
      %s18 = sphi 0, %s22
      %p19 = scmp.ge.s32.totalorder %s18, 4
      %s28 = sphi 0, %s30
      %s31 = sphi 0, %s28
      %s32 = sphi 0, %s31
      %s48 = sphi 0, %s32
      %s52 = sphi 0, %s52
      %s54 = sphi 0, %s52
      %s55 = sphi 0, %s54
      %s69 = sphi 0, %s55
      %s73 = sphi 0, %s73
      %s75 = sphi 0, %s73
      %s76 = sphi 0, %s75
      %s90 = sphi 0, %s76
      %s94 = sphi 0, %s94
      %s96 = sphi 0, %s94
      %s97 = sphi 0, %s96
      %s111 = sphi 0, %s97
      %s115 = sphi 0, %s115
      %s117 = sphi 0, %s115
      %s118 = sphi 0, %s117
      %s132 = sphi 0, %s118
      %s136 = sphi 0, %s136
      %s138 = sphi 0, %s136
      %s139 = sphi 0, %s138
      %s153 = sphi 0, %s139
      %s157 = sphi 0, %s157
      %s159 = sphi 0, %s157
      %s160 = sphi 0, %s159
      %s174 = sphi 0, %s160
      %s178 = sphi 0, %s178
      %s180 = sphi 0, %s178
      %s181 = sphi 0, %s180
      %s195 = sphi 0, %s181
      %s199 = sphi 0, %s199
      %s201 = sphi 0, %s199
      %s202 = sphi 0, %s201
      %s216 = sphi 0, %s202
      %s222 = sphi 0, %s224
      %s225 = sphi 0, %s222
      %s226 = sphi 0, %s225
      %s242 = sphi 0, %s226
    $region4: #{tpu_custom_call.1} parent=1 // loop_header_branch
      %21 = sbr.rel (%p19) target = $region8
    $region5: #{tpu_custom_call.1} parent=1 // loop_body
      %s23 = ssub.s32 %s18, 1
      %s24 = ssub.s32 %s18, 2
      %s25 = sadd.s32 %s18, 1
      %s26 = ssub.s32 %s18, %s25
      %p27 = scmp.eq.s32.totalorder %s26, 0
      %s29 = sadd.s32 %s28, 1
      %s30 = scalar_select %p27, %s28, %s29
      %p33 = pneg %p27
      %p34 = scmp.eq.s32.totalorder %s18, 1
      %p35 = por %p33, %p34
      %p36 = scmp.ne.s32.totalorder %s28, %s31
      %p37 = scmp.eq.s32.totalorder %s18, 0
      %p38 = por %p36, %p37
      %p39 = scmp.ne.s32.totalorder %s28, %s31
      %p40 = scmp.eq.s32.totalorder %s23, 1
      %p41 = por %p39, %p40
      %p42 = scmp.ne.s32.totalorder %s31, %s32
      %p43 = scmp.eq.s32.totalorder %s23, 0
      %p44 = por %p42, %p43
      %p45 = scmp.ne.s32.totalorder %s31, %s32
      %p46 = scmp.eq.s32.totalorder %s24, 1
      %p47 = por %p45, %p46
      %p49 = scmp.ne.s32.totalorder %s32, %s48
      %p50 = scmp.eq.s32.totalorder %s24, 0
      %p51 = por %p49, %p50
      %s53 = sadd.s32 %s52, 1
      %p56 = scmp.eq.s32.totalorder %s18, 1
      %p57 = scmp.ne.s32.totalorder %s52, %s54
      %p58 = scmp.eq.s32.totalorder %s18, 0
      %p59 = por %p57, %p58
      %p60 = scmp.ne.s32.totalorder %s52, %s54
      %p61 = scmp.eq.s32.totalorder %s23, 1
      %p62 = por %p60, %p61
      %p63 = scmp.ne.s32.totalorder %s54, %s55
      %p64 = scmp.eq.s32.totalorder %s23, 0
      %p65 = por %p63, %p64
      %p66 = scmp.ne.s32.totalorder %s54, %s55
      %p67 = scmp.eq.s32.totalorder %s24, 1
      %p68 = por %p66, %p67
      %p70 = scmp.ne.s32.totalorder %s55, %s69
      %p71 = scmp.eq.s32.totalorder %s24, 0
      %p72 = por %p70, %p71
      %s74 = sadd.s32 %s73, 1
      %p77 = scmp.eq.s32.totalorder %s18, 1
      %p78 = scmp.ne.s32.totalorder %s73, %s75
      %p79 = scmp.eq.s32.totalorder %s18, 0
      %p80 = por %p78, %p79
      %p81 = scmp.ne.s32.totalorder %s73, %s75
      %p82 = scmp.eq.s32.totalorder %s23, 1
      %p83 = por %p81, %p82
      %p84 = scmp.ne.s32.totalorder %s75, %s76
      %p85 = scmp.eq.s32.totalorder %s23, 0
      %p86 = por %p84, %p85
      %p87 = scmp.ne.s32.totalorder %s75, %s76
      %p88 = scmp.eq.s32.totalorder %s24, 1
      %p89 = por %p87, %p88
      %p91 = scmp.ne.s32.totalorder %s76, %s90
      %p92 = scmp.eq.s32.totalorder %s24, 0
      %p93 = por %p91, %p92
      %s95 = sadd.s32 %s94, 1
      %p98 = scmp.eq.s32.totalorder %s18, 1
      %p99 = scmp.ne.s32.totalorder %s94, %s96
      %p100 = scmp.eq.s32.totalorder %s18, 0
      %p101 = por %p99, %p100
      %p102 = scmp.ne.s32.totalorder %s94, %s96
      %p103 = scmp.eq.s32.totalorder %s23, 1
      %p104 = por %p102, %p103
      %p105 = scmp.ne.s32.totalorder %s96, %s97
      %p106 = scmp.eq.s32.totalorder %s23, 0
      %p107 = por %p105, %p106
      %p108 = scmp.ne.s32.totalorder %s96, %s97
      %p109 = scmp.eq.s32.totalorder %s24, 1
      %p110 = por %p108, %p109
      %p112 = scmp.ne.s32.totalorder %s97, %s111
      %p113 = scmp.eq.s32.totalorder %s24, 0
      %p114 = por %p112, %p113
      %s116 = sadd.s32 %s115, 1
      %p119 = scmp.eq.s32.totalorder %s18, 1
      %p120 = scmp.ne.s32.totalorder %s115, %s117
      %p121 = scmp.eq.s32.totalorder %s18, 0
      %p122 = por %p120, %p121
      %p123 = scmp.ne.s32.totalorder %s115, %s117
      %p124 = scmp.eq.s32.totalorder %s23, 1
      %p125 = por %p123, %p124
      %p126 = scmp.ne.s32.totalorder %s117, %s118
      %p127 = scmp.eq.s32.totalorder %s23, 0
      %p128 = por %p126, %p127
      %p129 = scmp.ne.s32.totalorder %s117, %s118
      %p130 = scmp.eq.s32.totalorder %s24, 1
      %p131 = por %p129, %p130
      %p133 = scmp.ne.s32.totalorder %s118, %s132
      %p134 = scmp.eq.s32.totalorder %s24, 0
      %p135 = por %p133, %p134
      %s137 = sadd.s32 %s136, 1
      %p140 = scmp.eq.s32.totalorder %s18, 1
      %p141 = scmp.ne.s32.totalorder %s136, %s138
      %p142 = scmp.eq.s32.totalorder %s18, 0
      %p143 = por %p141, %p142
      %p144 = scmp.ne.s32.totalorder %s136, %s138
      %p145 = scmp.eq.s32.totalorder %s23, 1
      %p146 = por %p144, %p145
      %p147 = scmp.ne.s32.totalorder %s138, %s139
      %p148 = scmp.eq.s32.totalorder %s23, 0
      %p149 = por %p147, %p148
      %p150 = scmp.ne.s32.totalorder %s138, %s139
      %p151 = scmp.eq.s32.totalorder %s24, 1
      %p152 = por %p150, %p151
      %p154 = scmp.ne.s32.totalorder %s139, %s153
      %p155 = scmp.eq.s32.totalorder %s24, 0
      %p156 = por %p154, %p155
      %s158 = sadd.s32 %s157, 1
      %p161 = scmp.eq.s32.totalorder %s18, 1
      %p162 = scmp.ne.s32.totalorder %s157, %s159
      %p163 = scmp.eq.s32.totalorder %s18, 0
      %p164 = por %p162, %p163
      %p165 = scmp.ne.s32.totalorder %s157, %s159
      %p166 = scmp.eq.s32.totalorder %s23, 1
      %p167 = por %p165, %p166
      %p168 = scmp.ne.s32.totalorder %s159, %s160
      %p169 = scmp.eq.s32.totalorder %s23, 0
      %p170 = por %p168, %p169
      %p171 = scmp.ne.s32.totalorder %s159, %s160
      %p172 = scmp.eq.s32.totalorder %s24, 1
      %p173 = por %p171, %p172
      %p175 = scmp.ne.s32.totalorder %s160, %s174
      %p176 = scmp.eq.s32.totalorder %s24, 0
      %p177 = por %p175, %p176
      %s179 = sadd.s32 %s178, 1
      %p182 = scmp.eq.s32.totalorder %s18, 1
      %p183 = scmp.ne.s32.totalorder %s178, %s180
      %p184 = scmp.eq.s32.totalorder %s18, 0
      %p185 = por %p183, %p184
      %p186 = scmp.ne.s32.totalorder %s178, %s180
      %p187 = scmp.eq.s32.totalorder %s23, 1
      %p188 = por %p186, %p187
      %p189 = scmp.ne.s32.totalorder %s180, %s181
      %p190 = scmp.eq.s32.totalorder %s23, 0
      %p191 = por %p189, %p190
      %p192 = scmp.ne.s32.totalorder %s180, %s181
      %p193 = scmp.eq.s32.totalorder %s24, 1
      %p194 = por %p192, %p193
      %p196 = scmp.ne.s32.totalorder %s181, %s195
      %p197 = scmp.eq.s32.totalorder %s24, 0
      %p198 = por %p196, %p197
      %s200 = sadd.s32 %s199, 1
      %p203 = scmp.eq.s32.totalorder %s18, 1
      %p204 = scmp.ne.s32.totalorder %s199, %s201
      %p205 = scmp.eq.s32.totalorder %s18, 0
      %p206 = por %p204, %p205
      %p207 = scmp.ne.s32.totalorder %s199, %s201
      %p208 = scmp.eq.s32.totalorder %s23, 1
      %p209 = por %p207, %p208
      %p210 = scmp.ne.s32.totalorder %s201, %s202
      %p211 = scmp.eq.s32.totalorder %s23, 0
      %p212 = por %p210, %p211
      %p213 = scmp.ne.s32.totalorder %s201, %s202
      %p214 = scmp.eq.s32.totalorder %s24, 1
      %p215 = por %p213, %p214
      %p217 = scmp.ne.s32.totalorder %s202, %s216
      %p218 = scmp.eq.s32.totalorder %s24, 0
      %p219 = por %p217, %p218
      %s220 = ssub.s32 %s18, %s25
      %p221 = scmp.eq.s32.totalorder %s220, 0
      %s223 = sadd.s32 %s222, 1
      %s224 = scalar_select %p221, %s222, %s223
      %p227 = pneg %p221
      %p228 = scmp.eq.s32.totalorder %s18, 1
      %p229 = por %p227, %p228
      %p230 = scmp.ne.s32.totalorder %s222, %s225
      %p231 = scmp.eq.s32.totalorder %s18, 0
      %p232 = por %p230, %p231
      %p233 = scmp.ne.s32.totalorder %s222, %s225
      %p234 = scmp.eq.s32.totalorder %s23, 1
      %p235 = por %p233, %p234
      %p236 = scmp.ne.s32.totalorder %s225, %s226
      %p237 = scmp.eq.s32.totalorder %s23, 0
      %p238 = por %p236, %p237
      %p239 = scmp.ne.s32.totalorder %s225, %s226
      %p240 = scmp.eq.s32.totalorder %s24, 1
      %p241 = por %p239, %p240
      %p243 = scmp.ne.s32.totalorder %s226, %s242
      %p244 = scmp.eq.s32.totalorder %s24, 0
      %p245 = por %p243, %p244
      %p246 = scmp.le.s32.totalorder 1, %s18
      %p247 = scmp.lt.s32.totalorder %s18, 3
      %p248 = pnand %p246, %p247
      %p249 = pneg %p248
      // Predicated region
      $region9: #{tpu_custom_call.1} parent=5 // pred_check
        _
      $region10: #{tpu_custom_call.1} parent=5 // pred_check_branch
        %251 = sbr.rel (%p248) target = $region12
      $region11: #{tpu_custom_call.1} parent=5 // pred_region
        %s252 = ssub.s32 %s18, 1
        // Predicated region
        $region13: #{tpu_custom_call.1} parent=11 // pred_check
          %p253 = pneg %p65
        $region14: #{tpu_custom_call.1} parent=11 // pred_check_branch
          %255 = sbr.rel (%p253) target = $region16
        $region15: #{tpu_custom_call.1} parent=11 // pred_region
          _
        $region16: #{tpu_custom_call.1} parent=11 // pred_fallthru
          _
        // Predicated region
        $region17: #{tpu_custom_call.1} parent=11 // pred_check
          %p256 = pneg %p86
        $region18: #{tpu_custom_call.1} parent=11 // pred_check_branch
          %258 = sbr.rel (%p256) target = $region20
        $region19: #{tpu_custom_call.1} parent=11 // pred_region
          _
        $region20: #{tpu_custom_call.1} parent=11 // pred_fallthru
          _
        // Predicated region
        $region21: #{tpu_custom_call.1} parent=11 // pred_check
          %p259 = pneg %p107
        $region22: #{tpu_custom_call.1} parent=11 // pred_check_branch
          %261 = sbr.rel (%p259) target = $region24
        $region23: #{tpu_custom_call.1} parent=11 // pred_region
          _
        $region24: #{tpu_custom_call.1} parent=11 // pred_fallthru
          _
        // Predicated region
        $region25: #{tpu_custom_call.1} parent=11 // pred_check
          %p262 = pneg %p128
        $region26: #{tpu_custom_call.1} parent=11 // pred_check_branch
          %264 = sbr.rel (%p262) target = $region28
        $region27: #{tpu_custom_call.1} parent=11 // pred_region
          _
        $region28: #{tpu_custom_call.1} parent=11 // pred_fallthru
          _
        // Predicated region
        $region29: #{tpu_custom_call.1} parent=11 // pred_check
          %p265 = pneg %p149
        $region30: #{tpu_custom_call.1} parent=11 // pred_check_branch
          %267 = sbr.rel (%p265) target = $region32
        $region31: #{tpu_custom_call.1} parent=11 // pred_region
          _
        $region32: #{tpu_custom_call.1} parent=11 // pred_fallthru
          _
        // Predicated region
        $region33: #{tpu_custom_call.1} parent=11 // pred_check
          %p268 = pneg %p170
        $region34: #{tpu_custom_call.1} parent=11 // pred_check_branch
          %270 = sbr.rel (%p268) target = $region36
        $region35: #{tpu_custom_call.1} parent=11 // pred_region
          _
        $region36: #{tpu_custom_call.1} parent=11 // pred_fallthru
          _
        // Predicated region
        $region37: #{tpu_custom_call.1} parent=11 // pred_check
          %p271 = pneg %p191
        $region38: #{tpu_custom_call.1} parent=11 // pred_check_branch
          %273 = sbr.rel (%p271) target = $region40
        $region39: #{tpu_custom_call.1} parent=11 // pred_region
          _
        $region40: #{tpu_custom_call.1} parent=11 // pred_fallthru
          _
        // Predicated region
        $region41: #{tpu_custom_call.1} parent=11 // pred_check
          %p274 = pneg %p212
        $region42: #{tpu_custom_call.1} parent=11 // pred_check_branch
          %276 = sbr.rel (%p274) target = $region44
        $region43: #{tpu_custom_call.1} parent=11 // pred_region
          _
        $region44: #{tpu_custom_call.1} parent=11 // pred_fallthru
          _
      $region12: #{tpu_custom_call.1} parent=5 // pred_fallthru
        _
      %p277 = scmp.lt.s32.totalorder %s18, 2
      // Predicated region
      $region45: #{tpu_custom_call.1} parent=5 // pred_check
        %p278 = pneg %p277
      $region46: #{tpu_custom_call.1} parent=5 // pred_check_branch
        %280 = sbr.rel (%p278) target = $region48
      $region47: #{tpu_custom_call.1} parent=5 // pred_region
        // Predicated region
        $region49: #{tpu_custom_call.1} parent=47 // pred_check
          %p281 = pneg %p38
        $region50: #{tpu_custom_call.1} parent=47 // pred_check_branch
          %283 = sbr.rel (%p281) target = $region52
        $region51: #{tpu_custom_call.1} parent=47 // pred_region
          %p284 = scmp.lt.s32.totalorder %s18, 1
          %s285 = scalar_select %p284, %s18, 1
          %s286 = smul.addr %s285, 8
          %s287 = scalar_lea.vmem %s0, %s286
        $region52: #{tpu_custom_call.1} parent=47 // pred_fallthru
          _
      $region48: #{tpu_custom_call.1} parent=5 // pred_fallthru
        _
      %p288 = scmp.le.s32.totalorder 1, %s18
      %p289 = scmp.lt.s32.totalorder %s18, 3
      %p290 = pnand %p288, %p289
      %p291 = pneg %p290
      // Predicated region
      $region53: #{tpu_custom_call.1} parent=5 // pred_check
        _
      $region54: #{tpu_custom_call.1} parent=5 // pred_check_branch
        %293 = sbr.rel (%p290) target = $region56
      $region55: #{tpu_custom_call.1} parent=5 // pred_region
        %s294 = ssub.s32 %s18, 1
        %p295 = scmp.lt.s32.totalorder %s23, 1
        %s296 = scalar_select %p295, %s23, 1
        %s297 = smul.addr %s296, 8
        %s298 = scalar_lea.vmem %s0, %s297
        %p299 = pneg %p44
        %p300 = pneg %p41
        %p301 = pneg %p65
        %p302 = pneg %p62
        %p303 = pneg %p86
        %p304 = pneg %p83
        %p305 = pneg %p107
        %p306 = pneg %p104
        %p307 = pneg %p128
        %p308 = pneg %p125
        %p309 = pneg %p149
        %p310 = pneg %p146
        %p311 = pneg %p170
        %p312 = pneg %p167
        %p313 = pneg %p191
        %p314 = pneg %p188
        %p315 = pneg %p212
        %p316 = pneg %p209
        %p317 = pneg %p238
        %p318 = pneg %p235
        %s319 = sand.u32 %s225, 1
        %s320 = scalar_lea.sflag [#allocation3], %s319
        %s321 = sand.u32 %s225, 1
        %s322 = scalar_lea.vmem [#allocation2], %s321
        %p323 = scmp.lt.s32.totalorder %s23, 1
        %s324 = scalar_select %p323, %s23, 1
        %s325 = smul.addr %s324, 8
        %s326 = scalar_lea.vmem %s0, %s325
        %v327 = vld [vmem:[%s326] sm:$0xff]
        %v328 = vld [vmem:[%s1] sm:$0xff]
        %v329 = vld [vmem:[%s2] sm:$0x1]
        %v331 = vlaneseq
        %v332 = vshrl.u32 %v331, 7
        %v333 = vsub.s32 0, %v332
        %v334 = vrot.slane %v329, %v333
        %vm336 = vcmask 64512
        %v338 = vsel %vm336, %v327, 0
        %340 = vmatprep.subr.mxu0 0.0
        %341 = vmatpush1.msra.mxu0 %v328
        %342 = vmatprep.subr.mxu0 0.0
        %343 = vmatpush1.msra.mxu0 0.0
        %344 = vmatprep.subr.mxu0 0.0
        %345 = vmatpush1.msra.mxu0 0.0
        %346 = vmatprep.subr.mxu0 0.0
        %347 = vmatpush1.msra.mxu0 0.0
        %348 = vmatprep.subr.mxu0 0.0
        %349 = vmatpush1.msra.mxu0 0.0
        %350 = vmatprep.subr.mxu0 0.0
        %351 = vmatpush1.msra.mxu0 0.0
        %352 = vmatprep.subr.mxu0 0.0
        %353 = vmatpush1.msra.mxu0 0.0
        %354 = vmatprep.subr.mxu0 0.0
        %355 = vmatpush1.msra.mxu0 0.0
        %356 = vmatprep.subr.mxu0 0.0
        %357 = vmatpush1.msra.mxu0 0.0
        %358 = vmatprep.subr.mxu0 0.0
        %359 = vmatpush1.msra.mxu0 0.0
        %360 = vmatprep.subr.mxu0 0.0
        %361 = vmatpush1.msra.mxu0 0.0
        %362 = vmatprep.subr.mxu0 0.0
        %363 = vmatpush1.msra.mxu0 0.0
        %364 = vmatprep.subr.mxu0 0.0
        %365 = vmatpush1.msra.mxu0 0.0
        %366 = vmatprep.subr.mxu0 0.0
        %367 = vmatpush1.msra.mxu0 0.0
        %368 = vmatprep.subr.mxu0 0.0
        %369 = vmatpush1.msra.mxu0 0.0
        %370 = vmatprep.subr.mxu0 0.0
        %371 = vmatpush1.msra.mxu0 0.0
        %372 = vmatprep.subr.mxu0 0.0
        %373 = vmatpush1.msra.mxu0 0.0
        %374 = vmatprep.subr.mxu0 0.0
        %375 = vmatpush1.msra.mxu0 0.0
        %376 = vmatprep.subr.mxu0 0.0
        %377 = vmatpush1.msra.mxu0 0.0
        %378 = vmatprep.subr.mxu0 0.0
        %379 = vmatpush1.msra.mxu0 0.0
        %380 = vmatprep.subr.mxu0 0.0
        %381 = vmatpush1.msra.mxu0 0.0
        %382 = vmatprep.subr.mxu0 0.0
        %383 = vmatpush1.msra.mxu0 0.0
        %384 = vmatprep.subr.mxu0 0.0
        %385 = vmatpush1.msra.mxu0 0.0
        %386 = vmatprep.subr.mxu0 0.0
        %387 = vmatpush1.msra.mxu0 0.0
        %388 = vmatprep.subr.mxu0 0.0
        %389 = vmatpush1.msra.mxu0 0.0
        %390 = vmatprep.subr.mxu0 0.0
        %391 = vmatpush1.msra.mxu0 0.0
        %392 = vmatprep.subr.mxu0 0.0
        %393 = vmatpush1.msra.mxu0 0.0
        %394 = vmatprep.subr.mxu0 0.0
        %395 = vmatpush1.msra.mxu0 0.0
        %396 = vmatprep.subr.mxu0 0.0
        %397 = vmatpush1.msra.mxu0 0.0
        %398 = vmatprep.subr.mxu0 0.0
        %399 = vmatpush1.msra.mxu0 0.0
        %400 = vmatprep.subr.mxu0 0.0
        %401 = vmatpush1.msra.mxu0 0.0
        %402 = vmatprep.subr.mxu0 0.0
        %403 = vmatpush1.msra.mxu0 0.0
        %404 = vmatprep.mubr.f32.mxu0 0.0
        %405 = vmatmul.mubr.f32.gmra.mrb[0].mxu0 %v338
        %v406 = vpop.f32.mrb[0].mxu0
        %v407 = vadd.f32 %v334, %v406
        %v408 = vpop.f32.mrb[0].mxu0
        %409 = vdwg.mxu0
        %v410 = vmax.f32 %v407, 0.0
        %v411 = vld [vmem:[%s3] sm:$0xff]
        %v412 = vld [vmem:[%s3 + $0x8] sm:$0xff]
        %v413 = vld [vmem:[%s3 + $0x10] sm:$0xff]
        %v414 = vld [vmem:[%s3 + $0x18] sm:$0xff]
        %v415 = vld [vmem:[%s4] sm:$0x1]
        %v417 = vlaneseq
        %v418 = vshrl.u32 %v417, 7
        %v419 = vsub.s32 0, %v418
        %v420 = vrot.slane %v415, %v419
        %vm422 = vcmask 261120
        %v424 = vsel %vm422, %v410, 0
        %426 = vmatprep.subr.mxu0 0.0
        %427 = vmatpush1.msra.mxu0 %v411
        %428 = vmatprep.subr.mxu0 0.0
        %429 = vmatpush1.msra.mxu0 %v412
        %430 = vmatprep.subr.mxu0 0.0
        %431 = vmatpush1.msra.mxu0 %v413
        %432 = vmatprep.subr.mxu0 0.0
        %433 = vmatpush1.msra.mxu0 %v414
        %434 = vmatprep.subr.mxu0 0.0
        %435 = vmatpush1.msra.mxu0 0.0
        %436 = vmatprep.subr.mxu0 0.0
        %437 = vmatpush1.msra.mxu0 0.0
        %438 = vmatprep.subr.mxu0 0.0
        %439 = vmatpush1.msra.mxu0 0.0
        %440 = vmatprep.subr.mxu0 0.0
        %441 = vmatpush1.msra.mxu0 0.0
        %442 = vmatprep.subr.mxu0 0.0
        %443 = vmatpush1.msra.mxu0 0.0
        %444 = vmatprep.subr.mxu0 0.0
        %445 = vmatpush1.msra.mxu0 0.0
        %446 = vmatprep.subr.mxu0 0.0
        %447 = vmatpush1.msra.mxu0 0.0
        %448 = vmatprep.subr.mxu0 0.0
        %449 = vmatpush1.msra.mxu0 0.0
        %450 = vmatprep.subr.mxu0 0.0
        %451 = vmatpush1.msra.mxu0 0.0
        %452 = vmatprep.subr.mxu0 0.0
        %453 = vmatpush1.msra.mxu0 0.0
        %454 = vmatprep.subr.mxu0 0.0
        %455 = vmatpush1.msra.mxu0 0.0
        %456 = vmatprep.subr.mxu0 0.0
        %457 = vmatpush1.msra.mxu0 0.0
        %458 = vmatprep.subr.mxu0 0.0
        %459 = vmatpush1.msra.mxu0 0.0
        %460 = vmatprep.subr.mxu0 0.0
        %461 = vmatpush1.msra.mxu0 0.0
        %462 = vmatprep.subr.mxu0 0.0
        %463 = vmatpush1.msra.mxu0 0.0
        %464 = vmatprep.subr.mxu0 0.0
        %465 = vmatpush1.msra.mxu0 0.0
        %466 = vmatprep.subr.mxu0 0.0
        %467 = vmatpush1.msra.mxu0 0.0
        %468 = vmatprep.subr.mxu0 0.0
        %469 = vmatpush1.msra.mxu0 0.0
        %470 = vmatprep.subr.mxu0 0.0
        %471 = vmatpush1.msra.mxu0 0.0
        %472 = vmatprep.subr.mxu0 0.0
        %473 = vmatpush1.msra.mxu0 0.0
        %474 = vmatprep.subr.mxu0 0.0
        %475 = vmatpush1.msra.mxu0 0.0
        %476 = vmatprep.subr.mxu0 0.0
        %477 = vmatpush1.msra.mxu0 0.0
        %478 = vmatprep.subr.mxu0 0.0
        %479 = vmatpush1.msra.mxu0 0.0
        %480 = vmatprep.subr.mxu0 0.0
        %481 = vmatpush1.msra.mxu0 0.0
        %482 = vmatprep.subr.mxu0 0.0
        %483 = vmatpush1.msra.mxu0 0.0
        %484 = vmatprep.subr.mxu0 0.0
        %485 = vmatpush1.msra.mxu0 0.0
        %486 = vmatprep.subr.mxu0 0.0
        %487 = vmatpush1.msra.mxu0 0.0
        %488 = vmatprep.subr.mxu0 0.0
        %489 = vmatpush1.msra.mxu0 0.0
        %490 = vmatprep.mubr.f32.mxu0 0.0
        %491 = vmatmul.mubr.f32.gmra.mrb[0].mxu0 %v424
        %v492 = vpop.f32.mrb[0].mxu0
        %v493 = vadd.f32 %v420, %v492
        %v494 = vpop.f32.mrb[0].mxu0
        %495 = vdwg.mxu0
        %v496 = vmax.f32 %v493, 0.0
        %v498 = vcombine.high %v496, %v496
        %v500 = vunpack.c.l.s4 1966171168
        %v501 = vunpack.c.0.s8 %v500
        %v502 = vlaneseq
        %v503 = vshrl.u32 %v502, 7
        %v504 = vsub.s32 %v501, %v503
        %v505 = vrot.slane %v496, %v504
        %v507 = vunpack.c.l.s4 1966171168
        %v508 = vunpack.c.0.s8 %v507
        %v509 = vlaneseq
        %v510 = vshrl.u32 %v509, 7
        %v511 = vsub.s32 %v508, %v510
        %v512 = vrot.slane %v498, %v511
        %v513 = vcombine.high %v505, %v505
        %v514 = vcombine.high %v512, %v512
        %v516 = vunpack.c.l.s4 1966171168
        %v517 = vunpack.c.0.s8 %v516
        %v518 = vlaneseq
        %v519 = vshrl.u32 %v518, 7
        %v520 = vsub.s32 %v517, %v519
        %v521 = vrot.slane %v505, %v520
        %v523 = vunpack.c.l.s4 1966171168
        %v524 = vunpack.c.0.s8 %v523
        %v525 = vlaneseq
        %v526 = vshrl.u32 %v525, 7
        %v527 = vsub.s32 %v524, %v526
        %v528 = vrot.slane %v512, %v527
        %v530 = vunpack.c.l.s4 1966171168
        %v531 = vunpack.c.0.s8 %v530
        %v532 = vlaneseq
        %v533 = vshrl.u32 %v532, 7
        %v534 = vsub.s32 %v531, %v533
        %v535 = vrot.slane %v513, %v534
        %v537 = vunpack.c.l.s4 1966171168
        %v538 = vunpack.c.0.s8 %v537
        %v539 = vlaneseq
        %v540 = vshrl.u32 %v539, 7
        %v541 = vsub.s32 %v538, %v540
        %v542 = vrot.slane %v514, %v541
        %v543 = vcombine.high %v521, %v521
        %v544 = vcombine.high %v528, %v528
        %v545 = vcombine.high %v535, %v535
        %v546 = vcombine.high %v542, %v542
        %v555 = vmul.f32 %v521, %v521
        %v556 = vmul.f32 %v521, %v535
        %v557 = vmul.f32 %v521, %v543
        %v558 = vmul.f32 %v521, %v545
        %v559 = vmul.f32 %v521, %v528
        %v560 = vmul.f32 %v521, %v542
        %v561 = vmul.f32 %v521, %v544
        %v562 = vmul.f32 %v521, %v546
        %v563 = vmul.f32 %v535, %v521
        %v564 = vmul.f32 %v535, %v535
        %v565 = vmul.f32 %v535, %v543
        %v566 = vmul.f32 %v535, %v545
        %v567 = vmul.f32 %v535, %v528
        %v568 = vmul.f32 %v535, %v542
        %v569 = vmul.f32 %v535, %v544
        %v570 = vmul.f32 %v535, %v546
        %v571 = vmul.f32 %v543, %v521
        %v572 = vmul.f32 %v543, %v535
        %v573 = vmul.f32 %v543, %v543
        %v574 = vmul.f32 %v543, %v545
        %v575 = vmul.f32 %v543, %v528
        %v576 = vmul.f32 %v543, %v542
        %v577 = vmul.f32 %v543, %v544
        %v578 = vmul.f32 %v543, %v546
        %v579 = vmul.f32 %v545, %v521
        %v580 = vmul.f32 %v545, %v535
        %v581 = vmul.f32 %v545, %v543
        %v582 = vmul.f32 %v545, %v545
        %v583 = vmul.f32 %v545, %v528
        %v584 = vmul.f32 %v545, %v542
        %v585 = vmul.f32 %v545, %v544
        %v586 = vmul.f32 %v545, %v546
        %v587 = vmul.f32 %v528, %v521
        %v588 = vmul.f32 %v528, %v535
        %v589 = vmul.f32 %v528, %v543
        %v590 = vmul.f32 %v528, %v545
        %v591 = vmul.f32 %v528, %v528
        %v592 = vmul.f32 %v528, %v542
        %v593 = vmul.f32 %v528, %v544
        %v594 = vmul.f32 %v528, %v546
        %v595 = vmul.f32 %v542, %v521
        %v596 = vmul.f32 %v542, %v535
        %v597 = vmul.f32 %v542, %v543
        %v598 = vmul.f32 %v542, %v545
        %v599 = vmul.f32 %v542, %v528
        %v600 = vmul.f32 %v542, %v542
        %v601 = vmul.f32 %v542, %v544
        %v602 = vmul.f32 %v542, %v546
        %v603 = vmul.f32 %v544, %v521
        %v604 = vmul.f32 %v544, %v535
        %v605 = vmul.f32 %v544, %v543
        %v606 = vmul.f32 %v544, %v545
        %v607 = vmul.f32 %v544, %v528
        %v608 = vmul.f32 %v544, %v542
        %v609 = vmul.f32 %v544, %v544
        %v610 = vmul.f32 %v544, %v546
        %v611 = vmul.f32 %v546, %v521
        %v612 = vmul.f32 %v546, %v535
        %v613 = vmul.f32 %v546, %v543
        %v614 = vmul.f32 %v546, %v545
        %v615 = vmul.f32 %v546, %v528
        %v616 = vmul.f32 %v546, %v542
        %v617 = vmul.f32 %v546, %v544
        %v618 = vmul.f32 %v546, %v546
        %v683 = vlaneseq
        %v684 = vshrl.u32 %v683, 7
        %v685 = vsub.s32 0, %v684
        %v686 = vrot.slane %v555, %v685
        %v687 = vlaneseq
        %v688 = vshrl.u32 %v687, 7
        %v689 = vsub.s32 0, %v688
        %v690 = vrot.slane %v556, %v689
        %v691 = vlaneseq
        %v692 = vshrl.u32 %v691, 7
        %v693 = vsub.s32 0, %v692
        %v694 = vrot.slane %v557, %v693
        %v695 = vlaneseq
        %v696 = vshrl.u32 %v695, 7
        %v697 = vsub.s32 0, %v696
        %v698 = vrot.slane %v558, %v697
        %v699 = vlaneseq
        %v700 = vshrl.u32 %v699, 7
        %v701 = vsub.s32 0, %v700
        %v702 = vrot.slane %v559, %v701
        %v703 = vlaneseq
        %v704 = vshrl.u32 %v703, 7
        %v705 = vsub.s32 0, %v704
        %v706 = vrot.slane %v560, %v705
        %v707 = vlaneseq
        %v708 = vshrl.u32 %v707, 7
        %v709 = vsub.s32 0, %v708
        %v710 = vrot.slane %v561, %v709
        %v711 = vlaneseq
        %v712 = vshrl.u32 %v711, 7
        %v713 = vsub.s32 0, %v712
        %v714 = vrot.slane %v562, %v713
        %v715 = vlaneseq
        %v716 = vshrl.u32 %v715, 7
        %v717 = vsub.s32 0, %v716
        %v718 = vrot.slane %v563, %v717
        %v719 = vlaneseq
        %v720 = vshrl.u32 %v719, 7
        %v721 = vsub.s32 0, %v720
        %v722 = vrot.slane %v564, %v721
        %v723 = vlaneseq
        %v724 = vshrl.u32 %v723, 7
        %v725 = vsub.s32 0, %v724
        %v726 = vrot.slane %v565, %v725
        %v727 = vlaneseq
        %v728 = vshrl.u32 %v727, 7
        %v729 = vsub.s32 0, %v728
        %v730 = vrot.slane %v566, %v729
        %v731 = vlaneseq
        %v732 = vshrl.u32 %v731, 7
        %v733 = vsub.s32 0, %v732
        %v734 = vrot.slane %v567, %v733
        %v735 = vlaneseq
        %v736 = vshrl.u32 %v735, 7
        %v737 = vsub.s32 0, %v736
        %v738 = vrot.slane %v568, %v737
        %v739 = vlaneseq
        %v740 = vshrl.u32 %v739, 7
        %v741 = vsub.s32 0, %v740
        %v742 = vrot.slane %v569, %v741
        %v743 = vlaneseq
        %v744 = vshrl.u32 %v743, 7
        %v745 = vsub.s32 0, %v744
        %v746 = vrot.slane %v570, %v745
        %v747 = vlaneseq
        %v748 = vshrl.u32 %v747, 7
        %v749 = vsub.s32 0, %v748
        %v750 = vrot.slane %v571, %v749
        %v751 = vlaneseq
        %v752 = vshrl.u32 %v751, 7
        %v753 = vsub.s32 0, %v752
        %v754 = vrot.slane %v572, %v753
        %v755 = vlaneseq
        %v756 = vshrl.u32 %v755, 7
        %v757 = vsub.s32 0, %v756
        %v758 = vrot.slane %v573, %v757
        %v759 = vlaneseq
        %v760 = vshrl.u32 %v759, 7
        %v761 = vsub.s32 0, %v760
        %v762 = vrot.slane %v574, %v761
        %v763 = vlaneseq
        %v764 = vshrl.u32 %v763, 7
        %v765 = vsub.s32 0, %v764
        %v766 = vrot.slane %v575, %v765
        %v767 = vlaneseq
        %v768 = vshrl.u32 %v767, 7
        %v769 = vsub.s32 0, %v768
        %v770 = vrot.slane %v576, %v769
        %v771 = vlaneseq
        %v772 = vshrl.u32 %v771, 7
        %v773 = vsub.s32 0, %v772
        %v774 = vrot.slane %v577, %v773
        %v775 = vlaneseq
        %v776 = vshrl.u32 %v775, 7
        %v777 = vsub.s32 0, %v776
        %v778 = vrot.slane %v578, %v777
        %v779 = vlaneseq
        %v780 = vshrl.u32 %v779, 7
        %v781 = vsub.s32 0, %v780
        %v782 = vrot.slane %v579, %v781
        %v783 = vlaneseq
        %v784 = vshrl.u32 %v783, 7
        %v785 = vsub.s32 0, %v784
        %v786 = vrot.slane %v580, %v785
        %v787 = vlaneseq
        %v788 = vshrl.u32 %v787, 7
        %v789 = vsub.s32 0, %v788
        %v790 = vrot.slane %v581, %v789
        %v791 = vlaneseq
        %v792 = vshrl.u32 %v791, 7
        %v793 = vsub.s32 0, %v792
        %v794 = vrot.slane %v582, %v793
        %v795 = vlaneseq
        %v796 = vshrl.u32 %v795, 7
        %v797 = vsub.s32 0, %v796
        %v798 = vrot.slane %v583, %v797
        %v799 = vlaneseq
        %v800 = vshrl.u32 %v799, 7
        %v801 = vsub.s32 0, %v800
        %v802 = vrot.slane %v584, %v801
        %v803 = vlaneseq
        %v804 = vshrl.u32 %v803, 7
        %v805 = vsub.s32 0, %v804
        %v806 = vrot.slane %v585, %v805
        %v807 = vlaneseq
        %v808 = vshrl.u32 %v807, 7
        %v809 = vsub.s32 0, %v808
        %v810 = vrot.slane %v586, %v809
        %v811 = vlaneseq
        %v812 = vshrl.u32 %v811, 7
        %v813 = vsub.s32 0, %v812
        %v814 = vrot.slane %v587, %v813
        %v815 = vlaneseq
        %v816 = vshrl.u32 %v815, 7
        %v817 = vsub.s32 0, %v816
        %v818 = vrot.slane %v588, %v817
        %v819 = vlaneseq
        %v820 = vshrl.u32 %v819, 7
        %v821 = vsub.s32 0, %v820
        %v822 = vrot.slane %v589, %v821
        %v823 = vlaneseq
        %v824 = vshrl.u32 %v823, 7
        %v825 = vsub.s32 0, %v824
        %v826 = vrot.slane %v590, %v825
        %v827 = vlaneseq
        %v828 = vshrl.u32 %v827, 7
        %v829 = vsub.s32 0, %v828
        %v830 = vrot.slane %v591, %v829
        %v831 = vlaneseq
        %v832 = vshrl.u32 %v831, 7
        %v833 = vsub.s32 0, %v832
        %v834 = vrot.slane %v592, %v833
        %v835 = vlaneseq
        %v836 = vshrl.u32 %v835, 7
        %v837 = vsub.s32 0, %v836
        %v838 = vrot.slane %v593, %v837
        %v839 = vlaneseq
        %v840 = vshrl.u32 %v839, 7
        %v841 = vsub.s32 0, %v840
        %v842 = vrot.slane %v594, %v841
        %v843 = vlaneseq
        %v844 = vshrl.u32 %v843, 7
        %v845 = vsub.s32 0, %v844
        %v846 = vrot.slane %v595, %v845
        %v847 = vlaneseq
        %v848 = vshrl.u32 %v847, 7
        %v849 = vsub.s32 0, %v848
        %v850 = vrot.slane %v596, %v849
        %v851 = vlaneseq
        %v852 = vshrl.u32 %v851, 7
        %v853 = vsub.s32 0, %v852
        %v854 = vrot.slane %v597, %v853
        %v855 = vlaneseq
        %v856 = vshrl.u32 %v855, 7
        %v857 = vsub.s32 0, %v856
        %v858 = vrot.slane %v598, %v857
        %v859 = vlaneseq
        %v860 = vshrl.u32 %v859, 7
        %v861 = vsub.s32 0, %v860
        %v862 = vrot.slane %v599, %v861
        %v863 = vlaneseq
        %v864 = vshrl.u32 %v863, 7
        %v865 = vsub.s32 0, %v864
        %v866 = vrot.slane %v600, %v865
        %v867 = vlaneseq
        %v868 = vshrl.u32 %v867, 7
        %v869 = vsub.s32 0, %v868
        %v870 = vrot.slane %v601, %v869
        %v871 = vlaneseq
        %v872 = vshrl.u32 %v871, 7
        %v873 = vsub.s32 0, %v872
        %v874 = vrot.slane %v602, %v873
        %v875 = vlaneseq
        %v876 = vshrl.u32 %v875, 7
        %v877 = vsub.s32 0, %v876
        %v878 = vrot.slane %v603, %v877
        %v879 = vlaneseq
        %v880 = vshrl.u32 %v879, 7
        %v881 = vsub.s32 0, %v880
        %v882 = vrot.slane %v604, %v881
        %v883 = vlaneseq
        %v884 = vshrl.u32 %v883, 7
        %v885 = vsub.s32 0, %v884
        %v886 = vrot.slane %v605, %v885
        %v887 = vlaneseq
        %v888 = vshrl.u32 %v887, 7
        %v889 = vsub.s32 0, %v888
        %v890 = vrot.slane %v606, %v889
        %v891 = vlaneseq
        %v892 = vshrl.u32 %v891, 7
        %v893 = vsub.s32 0, %v892
        %v894 = vrot.slane %v607, %v893
        %v895 = vlaneseq
        %v896 = vshrl.u32 %v895, 7
        %v897 = vsub.s32 0, %v896
        %v898 = vrot.slane %v608, %v897
        %v899 = vlaneseq
        %v900 = vshrl.u32 %v899, 7
        %v901 = vsub.s32 0, %v900
        %v902 = vrot.slane %v609, %v901
        %v903 = vlaneseq
        %v904 = vshrl.u32 %v903, 7
        %v905 = vsub.s32 0, %v904
        %v906 = vrot.slane %v610, %v905
        %v907 = vlaneseq
        %v908 = vshrl.u32 %v907, 7
        %v909 = vsub.s32 0, %v908
        %v910 = vrot.slane %v611, %v909
        %v911 = vlaneseq
        %v912 = vshrl.u32 %v911, 7
        %v913 = vsub.s32 0, %v912
        %v914 = vrot.slane %v612, %v913
        %v915 = vlaneseq
        %v916 = vshrl.u32 %v915, 7
        %v917 = vsub.s32 0, %v916
        %v918 = vrot.slane %v613, %v917
        %v919 = vlaneseq
        %v920 = vshrl.u32 %v919, 7
        %v921 = vsub.s32 0, %v920
        %v922 = vrot.slane %v614, %v921
        %v923 = vlaneseq
        %v924 = vshrl.u32 %v923, 7
        %v925 = vsub.s32 0, %v924
        %v926 = vrot.slane %v615, %v925
        %v927 = vlaneseq
        %v928 = vshrl.u32 %v927, 7
        %v929 = vsub.s32 0, %v928
        %v930 = vrot.slane %v616, %v929
        %v931 = vlaneseq
        %v932 = vshrl.u32 %v931, 7
        %v933 = vsub.s32 0, %v932
        %v934 = vrot.slane %v617, %v933
        %v935 = vlaneseq
        %v936 = vshrl.u32 %v935, 7
        %v937 = vsub.s32 0, %v936
        %v938 = vrot.slane %v618, %v937
        %v1003 = vmul.f32 %v686, %v496
        %v1004 = vmul.f32 %v690, %v496
        %v1005 = vmul.f32 %v694, %v496
        %v1006 = vmul.f32 %v698, %v496
        %v1007 = vmul.f32 %v702, %v496
        %v1008 = vmul.f32 %v706, %v496
        %v1009 = vmul.f32 %v710, %v496
        %v1010 = vmul.f32 %v714, %v496
        %v1011 = vmul.f32 %v718, %v496
        %v1012 = vmul.f32 %v722, %v496
        %v1013 = vmul.f32 %v726, %v496
        %v1014 = vmul.f32 %v730, %v496
        %v1015 = vmul.f32 %v734, %v496
        %v1016 = vmul.f32 %v738, %v496
        %v1017 = vmul.f32 %v742, %v496
        %v1018 = vmul.f32 %v746, %v496
        %v1019 = vmul.f32 %v750, %v496
        %v1020 = vmul.f32 %v754, %v496
        %v1021 = vmul.f32 %v758, %v496
        %v1022 = vmul.f32 %v762, %v496
        %v1023 = vmul.f32 %v766, %v496
        %v1024 = vmul.f32 %v770, %v496
        %v1025 = vmul.f32 %v774, %v496
        %v1026 = vmul.f32 %v778, %v496
        %v1027 = vmul.f32 %v782, %v496
        %v1028 = vmul.f32 %v786, %v496
        %v1029 = vmul.f32 %v790, %v496
        %v1030 = vmul.f32 %v794, %v496
        %v1031 = vmul.f32 %v798, %v496
        %v1032 = vmul.f32 %v802, %v496
        %v1033 = vmul.f32 %v806, %v496
        %v1034 = vmul.f32 %v810, %v496
        %v1035 = vmul.f32 %v814, %v496
        %v1036 = vmul.f32 %v818, %v496
        %v1037 = vmul.f32 %v822, %v496
        %v1038 = vmul.f32 %v826, %v496
        %v1039 = vmul.f32 %v830, %v496
        %v1040 = vmul.f32 %v834, %v496
        %v1041 = vmul.f32 %v838, %v496
        %v1042 = vmul.f32 %v842, %v496
        %v1043 = vmul.f32 %v846, %v496
        %v1044 = vmul.f32 %v850, %v496
        %v1045 = vmul.f32 %v854, %v496
        %v1046 = vmul.f32 %v858, %v496
        %v1047 = vmul.f32 %v862, %v496
        %v1048 = vmul.f32 %v866, %v496
        %v1049 = vmul.f32 %v870, %v496
        %v1050 = vmul.f32 %v874, %v496
        %v1051 = vmul.f32 %v878, %v496
        %v1052 = vmul.f32 %v882, %v496
        %v1053 = vmul.f32 %v886, %v496
        %v1054 = vmul.f32 %v890, %v496
        %v1055 = vmul.f32 %v894, %v496
        %v1056 = vmul.f32 %v898, %v496
        %v1057 = vmul.f32 %v902, %v496
        %v1058 = vmul.f32 %v906, %v496
        %v1059 = vmul.f32 %v910, %v496
        %v1060 = vmul.f32 %v914, %v496
        %v1061 = vmul.f32 %v918, %v496
        %v1062 = vmul.f32 %v922, %v496
        %v1063 = vmul.f32 %v926, %v496
        %v1064 = vmul.f32 %v930, %v496
        %v1065 = vmul.f32 %v934, %v496
        %v1066 = vmul.f32 %v938, %v496
        %v1067 = vsel %vm422, %v1003, 0.0
        %v1068 = vsel %vm422, %v1011, 0.0
        %v1069 = vadd.f32 %v1067, %v1068
        %v1070 = vsel %vm422, %v1019, 0.0
        %v1071 = vadd.f32 %v1069, %v1070
        %v1072 = vsel %vm422, %v1027, 0.0
        %v1073 = vadd.f32 %v1071, %v1072
        %v1074 = vsel %vm422, %v1035, 0.0
        %v1075 = vadd.f32 %v1073, %v1074
        %v1076 = vsel %vm422, %v1043, 0.0
        %v1077 = vadd.f32 %v1075, %v1076
        %v1078 = vsel %vm422, %v1051, 0.0
        %v1079 = vadd.f32 %v1077, %v1078
        %v1080 = vsel %vm422, %v1059, 0.0
        %v1081 = vadd.f32 %v1079, %v1080
        %v1082 = vsel %vm422, %v1004, 0.0
        %v1083 = vsel %vm422, %v1012, 0.0
        %v1084 = vadd.f32 %v1082, %v1083
        %v1085 = vsel %vm422, %v1020, 0.0
        %v1086 = vadd.f32 %v1084, %v1085
        %v1087 = vsel %vm422, %v1028, 0.0
        %v1088 = vadd.f32 %v1086, %v1087
        %v1089 = vsel %vm422, %v1036, 0.0
        %v1090 = vadd.f32 %v1088, %v1089
        %v1091 = vsel %vm422, %v1044, 0.0
        %v1092 = vadd.f32 %v1090, %v1091
        %v1093 = vsel %vm422, %v1052, 0.0
        %v1094 = vadd.f32 %v1092, %v1093
        %v1095 = vsel %vm422, %v1060, 0.0
        %v1096 = vadd.f32 %v1094, %v1095
        %v1097 = vsel %vm422, %v1005, 0.0
        %v1098 = vsel %vm422, %v1013, 0.0
        %v1099 = vadd.f32 %v1097, %v1098
        %v1100 = vsel %vm422, %v1021, 0.0
        %v1101 = vadd.f32 %v1099, %v1100
        %v1102 = vsel %vm422, %v1029, 0.0
        %v1103 = vadd.f32 %v1101, %v1102
        %v1104 = vsel %vm422, %v1037, 0.0
        %v1105 = vadd.f32 %v1103, %v1104
        %v1106 = vsel %vm422, %v1045, 0.0
        %v1107 = vadd.f32 %v1105, %v1106
        %v1108 = vsel %vm422, %v1053, 0.0
        %v1109 = vadd.f32 %v1107, %v1108
        %v1110 = vsel %vm422, %v1061, 0.0
        %v1111 = vadd.f32 %v1109, %v1110
        %v1112 = vsel %vm422, %v1006, 0.0
        %v1113 = vsel %vm422, %v1014, 0.0
        %v1114 = vadd.f32 %v1112, %v1113
        %v1115 = vsel %vm422, %v1022, 0.0
        %v1116 = vadd.f32 %v1114, %v1115
        %v1117 = vsel %vm422, %v1030, 0.0
        %v1118 = vadd.f32 %v1116, %v1117
        %v1119 = vsel %vm422, %v1038, 0.0
        %v1120 = vadd.f32 %v1118, %v1119
        %v1121 = vsel %vm422, %v1046, 0.0
        %v1122 = vadd.f32 %v1120, %v1121
        %v1123 = vsel %vm422, %v1054, 0.0
        %v1124 = vadd.f32 %v1122, %v1123
        %v1125 = vsel %vm422, %v1062, 0.0
        %v1126 = vadd.f32 %v1124, %v1125
        %v1127 = vsel %vm422, %v1007, 0.0
        %v1128 = vsel %vm422, %v1015, 0.0
        %v1129 = vadd.f32 %v1127, %v1128
        %v1130 = vsel %vm422, %v1023, 0.0
        %v1131 = vadd.f32 %v1129, %v1130
        %v1132 = vsel %vm422, %v1031, 0.0
        %v1133 = vadd.f32 %v1131, %v1132
        %v1134 = vsel %vm422, %v1039, 0.0
        %v1135 = vadd.f32 %v1133, %v1134
        %v1136 = vsel %vm422, %v1047, 0.0
        %v1137 = vadd.f32 %v1135, %v1136
        %v1138 = vsel %vm422, %v1055, 0.0
        %v1139 = vadd.f32 %v1137, %v1138
        %v1140 = vsel %vm422, %v1063, 0.0
        %v1141 = vadd.f32 %v1139, %v1140
        %v1142 = vsel %vm422, %v1008, 0.0
        %v1143 = vsel %vm422, %v1016, 0.0
        %v1144 = vadd.f32 %v1142, %v1143
        %v1145 = vsel %vm422, %v1024, 0.0
        %v1146 = vadd.f32 %v1144, %v1145
        %v1147 = vsel %vm422, %v1032, 0.0
        %v1148 = vadd.f32 %v1146, %v1147
        %v1149 = vsel %vm422, %v1040, 0.0
        %v1150 = vadd.f32 %v1148, %v1149
        %v1151 = vsel %vm422, %v1048, 0.0
        %v1152 = vadd.f32 %v1150, %v1151
        %v1153 = vsel %vm422, %v1056, 0.0
        %v1154 = vadd.f32 %v1152, %v1153
        %v1155 = vsel %vm422, %v1064, 0.0
        %v1156 = vadd.f32 %v1154, %v1155
        %v1157 = vsel %vm422, %v1009, 0.0
        %v1158 = vsel %vm422, %v1017, 0.0
        %v1159 = vadd.f32 %v1157, %v1158
        %v1160 = vsel %vm422, %v1025, 0.0
        %v1161 = vadd.f32 %v1159, %v1160
        %v1162 = vsel %vm422, %v1033, 0.0
        %v1163 = vadd.f32 %v1161, %v1162
        %v1164 = vsel %vm422, %v1041, 0.0
        %v1165 = vadd.f32 %v1163, %v1164
        %v1166 = vsel %vm422, %v1049, 0.0
        %v1167 = vadd.f32 %v1165, %v1166
        %v1168 = vsel %vm422, %v1057, 0.0
        %v1169 = vadd.f32 %v1167, %v1168
        %v1170 = vsel %vm422, %v1065, 0.0
        %v1171 = vadd.f32 %v1169, %v1170
        %v1172 = vsel %vm422, %v1010, 0.0
        %v1173 = vsel %vm422, %v1018, 0.0
        %v1174 = vadd.f32 %v1172, %v1173
        %v1175 = vsel %vm422, %v1026, 0.0
        %v1176 = vadd.f32 %v1174, %v1175
        %v1177 = vsel %vm422, %v1034, 0.0
        %v1178 = vadd.f32 %v1176, %v1177
        %v1179 = vsel %vm422, %v1042, 0.0
        %v1180 = vadd.f32 %v1178, %v1179
        %v1181 = vsel %vm422, %v1050, 0.0
        %v1182 = vadd.f32 %v1180, %v1181
        %v1183 = vsel %vm422, %v1058, 0.0
        %v1184 = vadd.f32 %v1182, %v1183
        %v1185 = vsel %vm422, %v1066, 0.0
        %v1186 = vadd.f32 %v1184, %v1185
        %v1187 = vrcp.pop 8.0
        %v1188 = vmul.f32 %v1081, %v1187
        %v1189 = vmul.f32 %v1096, %v1187
        %v1190 = vmul.f32 %v1111, %v1187
        %v1191 = vmul.f32 %v1126, %v1187
        %v1192 = vmul.f32 %v1141, %v1187
        %v1193 = vmul.f32 %v1156, %v1187
        %v1194 = vmul.f32 %v1171, %v1187
        %v1195 = vmul.f32 %v1186, %v1187
        %v1196 = vadd.f32 %v1067, %v1082
        %v1197 = vadd.f32 %v1196, %v1097
        %v1198 = vadd.f32 %v1197, %v1112
        %v1199 = vadd.f32 %v1198, %v1127
        %v1200 = vadd.f32 %v1199, %v1142
        %v1201 = vadd.f32 %v1200, %v1157
        %v1202 = vadd.f32 %v1201, %v1172
        %v1203 = vadd.f32 %v1068, %v1083
        %v1204 = vadd.f32 %v1203, %v1098
        %v1205 = vadd.f32 %v1204, %v1113
        %v1206 = vadd.f32 %v1205, %v1128
        %v1207 = vadd.f32 %v1206, %v1143
        %v1208 = vadd.f32 %v1207, %v1158
        %v1209 = vadd.f32 %v1208, %v1173
        %v1210 = vadd.f32 %v1070, %v1085
        %v1211 = vadd.f32 %v1210, %v1100
        %v1212 = vadd.f32 %v1211, %v1115
        %v1213 = vadd.f32 %v1212, %v1130
        %v1214 = vadd.f32 %v1213, %v1145
        %v1215 = vadd.f32 %v1214, %v1160
        %v1216 = vadd.f32 %v1215, %v1175
        %v1217 = vadd.f32 %v1072, %v1087
        %v1218 = vadd.f32 %v1217, %v1102
        %v1219 = vadd.f32 %v1218, %v1117
        %v1220 = vadd.f32 %v1219, %v1132
        %v1221 = vadd.f32 %v1220, %v1147
        %v1222 = vadd.f32 %v1221, %v1162
        %v1223 = vadd.f32 %v1222, %v1177
        %v1224 = vadd.f32 %v1074, %v1089
        %v1225 = vadd.f32 %v1224, %v1104
        %v1226 = vadd.f32 %v1225, %v1119
        %v1227 = vadd.f32 %v1226, %v1134
        %v1228 = vadd.f32 %v1227, %v1149
        %v1229 = vadd.f32 %v1228, %v1164
        %v1230 = vadd.f32 %v1229, %v1179
        %v1231 = vadd.f32 %v1076, %v1091
        %v1232 = vadd.f32 %v1231, %v1106
        %v1233 = vadd.f32 %v1232, %v1121
        %v1234 = vadd.f32 %v1233, %v1136
        %v1235 = vadd.f32 %v1234, %v1151
        %v1236 = vadd.f32 %v1235, %v1166
        %v1237 = vadd.f32 %v1236, %v1181
        %v1238 = vadd.f32 %v1078, %v1093
        %v1239 = vadd.f32 %v1238, %v1108
        %v1240 = vadd.f32 %v1239, %v1123
        %v1241 = vadd.f32 %v1240, %v1138
        %v1242 = vadd.f32 %v1241, %v1153
        %v1243 = vadd.f32 %v1242, %v1168
        %v1244 = vadd.f32 %v1243, %v1183
        %v1245 = vadd.f32 %v1080, %v1095
        %v1246 = vadd.f32 %v1245, %v1110
        %v1247 = vadd.f32 %v1246, %v1125
        %v1248 = vadd.f32 %v1247, %v1140
        %v1249 = vadd.f32 %v1248, %v1155
        %v1250 = vadd.f32 %v1249, %v1170
        %v1251 = vadd.f32 %v1250, %v1185
        %v1252 = vmul.f32 %v1202, %v1187
        %v1253 = vmul.f32 %v1209, %v1187
        %v1254 = vmul.f32 %v1216, %v1187
        %v1255 = vmul.f32 %v1223, %v1187
        %v1256 = vmul.f32 %v1230, %v1187
        %v1257 = vmul.f32 %v1237, %v1187
        %v1258 = vmul.f32 %v1244, %v1187
        %v1259 = vmul.f32 %v1251, %v1187
        %v1260 = vrot.slane %v1067, 4
        %v1261 = vadd.f32 %v1067, %v1260
        %v1262 = vrot.slane %v1261, 2
        %v1263 = vadd.f32 %v1261, %v1262
        %v1264 = vrot.slane %v1263, 1
        %v1265 = vadd.f32 %v1263, %v1264
        %v1266 = vrot.slane %v1082, 4
        %v1267 = vadd.f32 %v1082, %v1266
        %v1268 = vrot.slane %v1267, 2
        %v1269 = vadd.f32 %v1267, %v1268
        %v1270 = vrot.slane %v1269, 1
        %v1271 = vadd.f32 %v1269, %v1270
        %v1272 = vrot.slane %v1097, 4
        %v1273 = vadd.f32 %v1097, %v1272
        %v1274 = vrot.slane %v1273, 2
        %v1275 = vadd.f32 %v1273, %v1274
        %v1276 = vrot.slane %v1275, 1
        %v1277 = vadd.f32 %v1275, %v1276
        %v1278 = vrot.slane %v1112, 4
        %v1279 = vadd.f32 %v1112, %v1278
        %v1280 = vrot.slane %v1279, 2
        %v1281 = vadd.f32 %v1279, %v1280
        %v1282 = vrot.slane %v1281, 1
        %v1283 = vadd.f32 %v1281, %v1282
        %v1284 = vrot.slane %v1127, 4
        %v1285 = vadd.f32 %v1127, %v1284
        %v1286 = vrot.slane %v1285, 2
        %v1287 = vadd.f32 %v1285, %v1286
        %v1288 = vrot.slane %v1287, 1
        %v1289 = vadd.f32 %v1287, %v1288
        %v1290 = vrot.slane %v1142, 4
        %v1291 = vadd.f32 %v1142, %v1290
        %v1292 = vrot.slane %v1291, 2
        %v1293 = vadd.f32 %v1291, %v1292
        %v1294 = vrot.slane %v1293, 1
        %v1295 = vadd.f32 %v1293, %v1294
        %v1296 = vrot.slane %v1157, 4
        %v1297 = vadd.f32 %v1157, %v1296
        %v1298 = vrot.slane %v1297, 2
        %v1299 = vadd.f32 %v1297, %v1298
        %v1300 = vrot.slane %v1299, 1
        %v1301 = vadd.f32 %v1299, %v1300
        %v1302 = vrot.slane %v1172, 4
        %v1303 = vadd.f32 %v1172, %v1302
        %v1304 = vrot.slane %v1303, 2
        %v1305 = vadd.f32 %v1303, %v1304
        %v1306 = vrot.slane %v1305, 1
        %v1307 = vadd.f32 %v1305, %v1306
        %v1308 = vrot.slane %v1068, 4
        %v1309 = vadd.f32 %v1068, %v1308
        %v1310 = vrot.slane %v1309, 2
        %v1311 = vadd.f32 %v1309, %v1310
        %v1312 = vrot.slane %v1311, 1
        %v1313 = vadd.f32 %v1311, %v1312
        %v1314 = vrot.slane %v1083, 4
        %v1315 = vadd.f32 %v1083, %v1314
        %v1316 = vrot.slane %v1315, 2
        %v1317 = vadd.f32 %v1315, %v1316
        %v1318 = vrot.slane %v1317, 1
        %v1319 = vadd.f32 %v1317, %v1318
        %v1320 = vrot.slane %v1098, 4
        %v1321 = vadd.f32 %v1098, %v1320
        %v1322 = vrot.slane %v1321, 2
        %v1323 = vadd.f32 %v1321, %v1322
        %v1324 = vrot.slane %v1323, 1
        %v1325 = vadd.f32 %v1323, %v1324
        %v1326 = vrot.slane %v1113, 4
        %v1327 = vadd.f32 %v1113, %v1326
        %v1328 = vrot.slane %v1327, 2
        %v1329 = vadd.f32 %v1327, %v1328
        %v1330 = vrot.slane %v1329, 1
        %v1331 = vadd.f32 %v1329, %v1330
        %v1332 = vrot.slane %v1128, 4
        %v1333 = vadd.f32 %v1128, %v1332
        %v1334 = vrot.slane %v1333, 2
        %v1335 = vadd.f32 %v1333, %v1334
        %v1336 = vrot.slane %v1335, 1
        %v1337 = vadd.f32 %v1335, %v1336
        %v1338 = vrot.slane %v1143, 4
        %v1339 = vadd.f32 %v1143, %v1338
        %v1340 = vrot.slane %v1339, 2
        %v1341 = vadd.f32 %v1339, %v1340
        %v1342 = vrot.slane %v1341, 1
        %v1343 = vadd.f32 %v1341, %v1342
        %v1344 = vrot.slane %v1158, 4
        %v1345 = vadd.f32 %v1158, %v1344
        %v1346 = vrot.slane %v1345, 2
        %v1347 = vadd.f32 %v1345, %v1346
        %v1348 = vrot.slane %v1347, 1
        %v1349 = vadd.f32 %v1347, %v1348
        %v1350 = vrot.slane %v1173, 4
        %v1351 = vadd.f32 %v1173, %v1350
        %v1352 = vrot.slane %v1351, 2
        %v1353 = vadd.f32 %v1351, %v1352
        %v1354 = vrot.slane %v1353, 1
        %v1355 = vadd.f32 %v1353, %v1354
        %v1356 = vrot.slane %v1070, 4
        %v1357 = vadd.f32 %v1070, %v1356
        %v1358 = vrot.slane %v1357, 2
        %v1359 = vadd.f32 %v1357, %v1358
        %v1360 = vrot.slane %v1359, 1
        %v1361 = vadd.f32 %v1359, %v1360
        %v1362 = vrot.slane %v1085, 4
        %v1363 = vadd.f32 %v1085, %v1362
        %v1364 = vrot.slane %v1363, 2
        %v1365 = vadd.f32 %v1363, %v1364
        %v1366 = vrot.slane %v1365, 1
        %v1367 = vadd.f32 %v1365, %v1366
        %v1368 = vrot.slane %v1100, 4
        %v1369 = vadd.f32 %v1100, %v1368
        %v1370 = vrot.slane %v1369, 2
        %v1371 = vadd.f32 %v1369, %v1370
        %v1372 = vrot.slane %v1371, 1
        %v1373 = vadd.f32 %v1371, %v1372
        %v1374 = vrot.slane %v1115, 4
        %v1375 = vadd.f32 %v1115, %v1374
        %v1376 = vrot.slane %v1375, 2
        %v1377 = vadd.f32 %v1375, %v1376
        %v1378 = vrot.slane %v1377, 1
        %v1379 = vadd.f32 %v1377, %v1378
        %v1380 = vrot.slane %v1130, 4
        %v1381 = vadd.f32 %v1130, %v1380
        %v1382 = vrot.slane %v1381, 2
        %v1383 = vadd.f32 %v1381, %v1382
        %v1384 = vrot.slane %v1383, 1
        %v1385 = vadd.f32 %v1383, %v1384
        %v1386 = vrot.slane %v1145, 4
        %v1387 = vadd.f32 %v1145, %v1386
        %v1388 = vrot.slane %v1387, 2
        %v1389 = vadd.f32 %v1387, %v1388
        %v1390 = vrot.slane %v1389, 1
        %v1391 = vadd.f32 %v1389, %v1390
        %v1392 = vrot.slane %v1160, 4
        %v1393 = vadd.f32 %v1160, %v1392
        %v1394 = vrot.slane %v1393, 2
        %v1395 = vadd.f32 %v1393, %v1394
        %v1396 = vrot.slane %v1395, 1
        %v1397 = vadd.f32 %v1395, %v1396
        %v1398 = vrot.slane %v1175, 4
        %v1399 = vadd.f32 %v1175, %v1398
        %v1400 = vrot.slane %v1399, 2
        %v1401 = vadd.f32 %v1399, %v1400
        %v1402 = vrot.slane %v1401, 1
        %v1403 = vadd.f32 %v1401, %v1402
        %v1404 = vrot.slane %v1072, 4
        %v1405 = vadd.f32 %v1072, %v1404
        %v1406 = vrot.slane %v1405, 2
        %v1407 = vadd.f32 %v1405, %v1406
        %v1408 = vrot.slane %v1407, 1
        %v1409 = vadd.f32 %v1407, %v1408
        %v1410 = vrot.slane %v1087, 4
        %v1411 = vadd.f32 %v1087, %v1410
        %v1412 = vrot.slane %v1411, 2
        %v1413 = vadd.f32 %v1411, %v1412
        %v1414 = vrot.slane %v1413, 1
        %v1415 = vadd.f32 %v1413, %v1414
        %v1416 = vrot.slane %v1102, 4
        %v1417 = vadd.f32 %v1102, %v1416
        %v1418 = vrot.slane %v1417, 2
        %v1419 = vadd.f32 %v1417, %v1418
        %v1420 = vrot.slane %v1419, 1
        %v1421 = vadd.f32 %v1419, %v1420
        %v1422 = vrot.slane %v1117, 4
        %v1423 = vadd.f32 %v1117, %v1422
        %v1424 = vrot.slane %v1423, 2
        %v1425 = vadd.f32 %v1423, %v1424
        %v1426 = vrot.slane %v1425, 1
        %v1427 = vadd.f32 %v1425, %v1426
        %v1428 = vrot.slane %v1132, 4
        %v1429 = vadd.f32 %v1132, %v1428
        %v1430 = vrot.slane %v1429, 2
        %v1431 = vadd.f32 %v1429, %v1430
        %v1432 = vrot.slane %v1431, 1
        %v1433 = vadd.f32 %v1431, %v1432
        %v1434 = vrot.slane %v1147, 4
        %v1435 = vadd.f32 %v1147, %v1434
        %v1436 = vrot.slane %v1435, 2
        %v1437 = vadd.f32 %v1435, %v1436
        %v1438 = vrot.slane %v1437, 1
        %v1439 = vadd.f32 %v1437, %v1438
        %v1440 = vrot.slane %v1162, 4
        %v1441 = vadd.f32 %v1162, %v1440
        %v1442 = vrot.slane %v1441, 2
        %v1443 = vadd.f32 %v1441, %v1442
        %v1444 = vrot.slane %v1443, 1
        %v1445 = vadd.f32 %v1443, %v1444
        %v1446 = vrot.slane %v1177, 4
        %v1447 = vadd.f32 %v1177, %v1446
        %v1448 = vrot.slane %v1447, 2
        %v1449 = vadd.f32 %v1447, %v1448
        %v1450 = vrot.slane %v1449, 1
        %v1451 = vadd.f32 %v1449, %v1450
        %v1452 = vrot.slane %v1074, 4
        %v1453 = vadd.f32 %v1074, %v1452
        %v1454 = vrot.slane %v1453, 2
        %v1455 = vadd.f32 %v1453, %v1454
        %v1456 = vrot.slane %v1455, 1
        %v1457 = vadd.f32 %v1455, %v1456
        %v1458 = vrot.slane %v1089, 4
        %v1459 = vadd.f32 %v1089, %v1458
        %v1460 = vrot.slane %v1459, 2
        %v1461 = vadd.f32 %v1459, %v1460
        %v1462 = vrot.slane %v1461, 1
        %v1463 = vadd.f32 %v1461, %v1462
        %v1464 = vrot.slane %v1104, 4
        %v1465 = vadd.f32 %v1104, %v1464
        %v1466 = vrot.slane %v1465, 2
        %v1467 = vadd.f32 %v1465, %v1466
        %v1468 = vrot.slane %v1467, 1
        %v1469 = vadd.f32 %v1467, %v1468
        %v1470 = vrot.slane %v1119, 4
        %v1471 = vadd.f32 %v1119, %v1470
        %v1472 = vrot.slane %v1471, 2
        %v1473 = vadd.f32 %v1471, %v1472
        %v1474 = vrot.slane %v1473, 1
        %v1475 = vadd.f32 %v1473, %v1474
        %v1476 = vrot.slane %v1134, 4
        %v1477 = vadd.f32 %v1134, %v1476
        %v1478 = vrot.slane %v1477, 2
        %v1479 = vadd.f32 %v1477, %v1478
        %v1480 = vrot.slane %v1479, 1
        %v1481 = vadd.f32 %v1479, %v1480
        %v1482 = vrot.slane %v1149, 4
        %v1483 = vadd.f32 %v1149, %v1482
        %v1484 = vrot.slane %v1483, 2
        %v1485 = vadd.f32 %v1483, %v1484
        %v1486 = vrot.slane %v1485, 1
        %v1487 = vadd.f32 %v1485, %v1486
        %v1488 = vrot.slane %v1164, 4
        %v1489 = vadd.f32 %v1164, %v1488
        %v1490 = vrot.slane %v1489, 2
        %v1491 = vadd.f32 %v1489, %v1490
        %v1492 = vrot.slane %v1491, 1
        %v1493 = vadd.f32 %v1491, %v1492
        %v1494 = vrot.slane %v1179, 4
        %v1495 = vadd.f32 %v1179, %v1494
        %v1496 = vrot.slane %v1495, 2
        %v1497 = vadd.f32 %v1495, %v1496
        %v1498 = vrot.slane %v1497, 1
        %v1499 = vadd.f32 %v1497, %v1498
        %v1500 = vrot.slane %v1076, 4
        %v1501 = vadd.f32 %v1076, %v1500
        %v1502 = vrot.slane %v1501, 2
        %v1503 = vadd.f32 %v1501, %v1502
        %v1504 = vrot.slane %v1503, 1
        %v1505 = vadd.f32 %v1503, %v1504
        %v1506 = vrot.slane %v1091, 4
        %v1507 = vadd.f32 %v1091, %v1506
        %v1508 = vrot.slane %v1507, 2
        %v1509 = vadd.f32 %v1507, %v1508
        %v1510 = vrot.slane %v1509, 1
        %v1511 = vadd.f32 %v1509, %v1510
        %v1512 = vrot.slane %v1106, 4
        %v1513 = vadd.f32 %v1106, %v1512
        %v1514 = vrot.slane %v1513, 2
        %v1515 = vadd.f32 %v1513, %v1514
        %v1516 = vrot.slane %v1515, 1
        %v1517 = vadd.f32 %v1515, %v1516
        %v1518 = vrot.slane %v1121, 4
        %v1519 = vadd.f32 %v1121, %v1518
        %v1520 = vrot.slane %v1519, 2
        %v1521 = vadd.f32 %v1519, %v1520
        %v1522 = vrot.slane %v1521, 1
        %v1523 = vadd.f32 %v1521, %v1522
        %v1524 = vrot.slane %v1136, 4
        %v1525 = vadd.f32 %v1136, %v1524
        %v1526 = vrot.slane %v1525, 2
        %v1527 = vadd.f32 %v1525, %v1526
        %v1528 = vrot.slane %v1527, 1
        %v1529 = vadd.f32 %v1527, %v1528
        %v1530 = vrot.slane %v1151, 4
        %v1531 = vadd.f32 %v1151, %v1530
        %v1532 = vrot.slane %v1531, 2
        %v1533 = vadd.f32 %v1531, %v1532
        %v1534 = vrot.slane %v1533, 1
        %v1535 = vadd.f32 %v1533, %v1534
        %v1536 = vrot.slane %v1166, 4
        %v1537 = vadd.f32 %v1166, %v1536
        %v1538 = vrot.slane %v1537, 2
        %v1539 = vadd.f32 %v1537, %v1538
        %v1540 = vrot.slane %v1539, 1
        %v1541 = vadd.f32 %v1539, %v1540
        %v1542 = vrot.slane %v1181, 4
        %v1543 = vadd.f32 %v1181, %v1542
        %v1544 = vrot.slane %v1543, 2
        %v1545 = vadd.f32 %v1543, %v1544
        %v1546 = vrot.slane %v1545, 1
        %v1547 = vadd.f32 %v1545, %v1546
        %v1548 = vrot.slane %v1078, 4
        %v1549 = vadd.f32 %v1078, %v1548
        %v1550 = vrot.slane %v1549, 2
        %v1551 = vadd.f32 %v1549, %v1550
        %v1552 = vrot.slane %v1551, 1
        %v1553 = vadd.f32 %v1551, %v1552
        %v1554 = vrot.slane %v1093, 4
        %v1555 = vadd.f32 %v1093, %v1554
        %v1556 = vrot.slane %v1555, 2
        %v1557 = vadd.f32 %v1555, %v1556
        %v1558 = vrot.slane %v1557, 1
        %v1559 = vadd.f32 %v1557, %v1558
        %v1560 = vrot.slane %v1108, 4
        %v1561 = vadd.f32 %v1108, %v1560
        %v1562 = vrot.slane %v1561, 2
        %v1563 = vadd.f32 %v1561, %v1562
        %v1564 = vrot.slane %v1563, 1
        %v1565 = vadd.f32 %v1563, %v1564
        %v1566 = vrot.slane %v1123, 4
        %v1567 = vadd.f32 %v1123, %v1566
        %v1568 = vrot.slane %v1567, 2
        %v1569 = vadd.f32 %v1567, %v1568
        %v1570 = vrot.slane %v1569, 1
        %v1571 = vadd.f32 %v1569, %v1570
        %v1572 = vrot.slane %v1138, 4
        %v1573 = vadd.f32 %v1138, %v1572
        %v1574 = vrot.slane %v1573, 2
        %v1575 = vadd.f32 %v1573, %v1574
        %v1576 = vrot.slane %v1575, 1
        %v1577 = vadd.f32 %v1575, %v1576
        %v1578 = vrot.slane %v1153, 4
        %v1579 = vadd.f32 %v1153, %v1578
        %v1580 = vrot.slane %v1579, 2
        %v1581 = vadd.f32 %v1579, %v1580
        %v1582 = vrot.slane %v1581, 1
        %v1583 = vadd.f32 %v1581, %v1582
        %v1584 = vrot.slane %v1168, 4
        %v1585 = vadd.f32 %v1168, %v1584
        %v1586 = vrot.slane %v1585, 2
        %v1587 = vadd.f32 %v1585, %v1586
        %v1588 = vrot.slane %v1587, 1
        %v1589 = vadd.f32 %v1587, %v1588
        %v1590 = vrot.slane %v1183, 4
        %v1591 = vadd.f32 %v1183, %v1590
        %v1592 = vrot.slane %v1591, 2
        %v1593 = vadd.f32 %v1591, %v1592
        %v1594 = vrot.slane %v1593, 1
        %v1595 = vadd.f32 %v1593, %v1594
        %v1596 = vrot.slane %v1080, 4
        %v1597 = vadd.f32 %v1080, %v1596
        %v1598 = vrot.slane %v1597, 2
        %v1599 = vadd.f32 %v1597, %v1598
        %v1600 = vrot.slane %v1599, 1
        %v1601 = vadd.f32 %v1599, %v1600
        %v1602 = vrot.slane %v1095, 4
        %v1603 = vadd.f32 %v1095, %v1602
        %v1604 = vrot.slane %v1603, 2
        %v1605 = vadd.f32 %v1603, %v1604
        %v1606 = vrot.slane %v1605, 1
        %v1607 = vadd.f32 %v1605, %v1606
        %v1608 = vrot.slane %v1110, 4
        %v1609 = vadd.f32 %v1110, %v1608
        %v1610 = vrot.slane %v1609, 2
        %v1611 = vadd.f32 %v1609, %v1610
        %v1612 = vrot.slane %v1611, 1
        %v1613 = vadd.f32 %v1611, %v1612
        %v1614 = vrot.slane %v1125, 4
        %v1615 = vadd.f32 %v1125, %v1614
        %v1616 = vrot.slane %v1615, 2
        %v1617 = vadd.f32 %v1615, %v1616
        %v1618 = vrot.slane %v1617, 1
        %v1619 = vadd.f32 %v1617, %v1618
        %v1620 = vrot.slane %v1140, 4
        %v1621 = vadd.f32 %v1140, %v1620
        %v1622 = vrot.slane %v1621, 2
        %v1623 = vadd.f32 %v1621, %v1622
        %v1624 = vrot.slane %v1623, 1
        %v1625 = vadd.f32 %v1623, %v1624
        %v1626 = vrot.slane %v1155, 4
        %v1627 = vadd.f32 %v1155, %v1626
        %v1628 = vrot.slane %v1627, 2
        %v1629 = vadd.f32 %v1627, %v1628
        %v1630 = vrot.slane %v1629, 1
        %v1631 = vadd.f32 %v1629, %v1630
        %v1632 = vrot.slane %v1170, 4
        %v1633 = vadd.f32 %v1170, %v1632
        %v1634 = vrot.slane %v1633, 2
        %v1635 = vadd.f32 %v1633, %v1634
        %v1636 = vrot.slane %v1635, 1
        %v1637 = vadd.f32 %v1635, %v1636
        %v1638 = vrot.slane %v1185, 4
        %v1639 = vadd.f32 %v1185, %v1638
        %v1640 = vrot.slane %v1639, 2
        %v1641 = vadd.f32 %v1639, %v1640
        %v1642 = vrot.slane %v1641, 1
        %v1643 = vadd.f32 %v1641, %v1642
        %v1644 = vmul.f32 %v1265, %v1187
        %v1645 = vmul.f32 %v1271, %v1187
        %v1646 = vmul.f32 %v1277, %v1187
        %v1647 = vmul.f32 %v1283, %v1187
        %v1648 = vmul.f32 %v1289, %v1187
        %v1649 = vmul.f32 %v1295, %v1187
        %v1650 = vmul.f32 %v1301, %v1187
        %v1651 = vmul.f32 %v1307, %v1187
        %v1652 = vmul.f32 %v1313, %v1187
        %v1653 = vmul.f32 %v1319, %v1187
        %v1654 = vmul.f32 %v1325, %v1187
        %v1655 = vmul.f32 %v1331, %v1187
        %v1656 = vmul.f32 %v1337, %v1187
        %v1657 = vmul.f32 %v1343, %v1187
        %v1658 = vmul.f32 %v1349, %v1187
        %v1659 = vmul.f32 %v1355, %v1187
        %v1660 = vmul.f32 %v1361, %v1187
        %v1661 = vmul.f32 %v1367, %v1187
        %v1662 = vmul.f32 %v1373, %v1187
        %v1663 = vmul.f32 %v1379, %v1187
        %v1664 = vmul.f32 %v1385, %v1187
        %v1665 = vmul.f32 %v1391, %v1187
        %v1666 = vmul.f32 %v1397, %v1187
        %v1667 = vmul.f32 %v1403, %v1187
        %v1668 = vmul.f32 %v1409, %v1187
        %v1669 = vmul.f32 %v1415, %v1187
        %v1670 = vmul.f32 %v1421, %v1187
        %v1671 = vmul.f32 %v1427, %v1187
        %v1672 = vmul.f32 %v1433, %v1187
        %v1673 = vmul.f32 %v1439, %v1187
        %v1674 = vmul.f32 %v1445, %v1187
        %v1675 = vmul.f32 %v1451, %v1187
        %v1676 = vmul.f32 %v1457, %v1187
        %v1677 = vmul.f32 %v1463, %v1187
        %v1678 = vmul.f32 %v1469, %v1187
        %v1679 = vmul.f32 %v1475, %v1187
        %v1680 = vmul.f32 %v1481, %v1187
        %v1681 = vmul.f32 %v1487, %v1187
        %v1682 = vmul.f32 %v1493, %v1187
        %v1683 = vmul.f32 %v1499, %v1187
        %v1684 = vmul.f32 %v1505, %v1187
        %v1685 = vmul.f32 %v1511, %v1187
        %v1686 = vmul.f32 %v1517, %v1187
        %v1687 = vmul.f32 %v1523, %v1187
        %v1688 = vmul.f32 %v1529, %v1187
        %v1689 = vmul.f32 %v1535, %v1187
        %v1690 = vmul.f32 %v1541, %v1187
        %v1691 = vmul.f32 %v1547, %v1187
        %v1692 = vmul.f32 %v1553, %v1187
        %v1693 = vmul.f32 %v1559, %v1187
        %v1694 = vmul.f32 %v1565, %v1187
        %v1695 = vmul.f32 %v1571, %v1187
        %v1696 = vmul.f32 %v1577, %v1187
        %v1697 = vmul.f32 %v1583, %v1187
        %v1698 = vmul.f32 %v1589, %v1187
        %v1699 = vmul.f32 %v1595, %v1187
        %v1700 = vmul.f32 %v1601, %v1187
        %v1701 = vmul.f32 %v1607, %v1187
        %v1702 = vmul.f32 %v1613, %v1187
        %v1703 = vmul.f32 %v1619, %v1187
        %v1704 = vmul.f32 %v1625, %v1187
        %v1705 = vmul.f32 %v1631, %v1187
        %v1706 = vmul.f32 %v1637, %v1187
        %v1707 = vmul.f32 %v1643, %v1187
        %v1708 = vsel %vm422, %v1188, 0.0
        %v1709 = vsel %vm422, %v1189, 0.0
        %v1710 = vadd.f32 %v1708, %v1709
        %v1711 = vsel %vm422, %v1190, 0.0
        %v1712 = vadd.f32 %v1710, %v1711
        %v1713 = vsel %vm422, %v1191, 0.0
        %v1714 = vadd.f32 %v1712, %v1713
        %v1715 = vsel %vm422, %v1192, 0.0
        %v1716 = vadd.f32 %v1714, %v1715
        %v1717 = vsel %vm422, %v1193, 0.0
        %v1718 = vadd.f32 %v1716, %v1717
        %v1719 = vsel %vm422, %v1194, 0.0
        %v1720 = vadd.f32 %v1718, %v1719
        %v1721 = vsel %vm422, %v1195, 0.0
        %v1722 = vadd.f32 %v1720, %v1721
        %v1723 = vmul.f32 %v1722, %v1187
        %v1724 = vrot.slane %v1708, 4
        %v1725 = vadd.f32 %v1708, %v1724
        %v1726 = vrot.slane %v1725, 2
        %v1727 = vadd.f32 %v1725, %v1726
        %v1728 = vrot.slane %v1727, 1
        %v1729 = vadd.f32 %v1727, %v1728
        %v1730 = vrot.slane %v1709, 4
        %v1731 = vadd.f32 %v1709, %v1730
        %v1732 = vrot.slane %v1731, 2
        %v1733 = vadd.f32 %v1731, %v1732
        %v1734 = vrot.slane %v1733, 1
        %v1735 = vadd.f32 %v1733, %v1734
        %v1736 = vrot.slane %v1711, 4
        %v1737 = vadd.f32 %v1711, %v1736
        %v1738 = vrot.slane %v1737, 2
        %v1739 = vadd.f32 %v1737, %v1738
        %v1740 = vrot.slane %v1739, 1
        %v1741 = vadd.f32 %v1739, %v1740
        %v1742 = vrot.slane %v1713, 4
        %v1743 = vadd.f32 %v1713, %v1742
        %v1744 = vrot.slane %v1743, 2
        %v1745 = vadd.f32 %v1743, %v1744
        %v1746 = vrot.slane %v1745, 1
        %v1747 = vadd.f32 %v1745, %v1746
        %v1748 = vrot.slane %v1715, 4
        %v1749 = vadd.f32 %v1715, %v1748
        %v1750 = vrot.slane %v1749, 2
        %v1751 = vadd.f32 %v1749, %v1750
        %v1752 = vrot.slane %v1751, 1
        %v1753 = vadd.f32 %v1751, %v1752
        %v1754 = vrot.slane %v1717, 4
        %v1755 = vadd.f32 %v1717, %v1754
        %v1756 = vrot.slane %v1755, 2
        %v1757 = vadd.f32 %v1755, %v1756
        %v1758 = vrot.slane %v1757, 1
        %v1759 = vadd.f32 %v1757, %v1758
        %v1760 = vrot.slane %v1719, 4
        %v1761 = vadd.f32 %v1719, %v1760
        %v1762 = vrot.slane %v1761, 2
        %v1763 = vadd.f32 %v1761, %v1762
        %v1764 = vrot.slane %v1763, 1
        %v1765 = vadd.f32 %v1763, %v1764
        %v1766 = vrot.slane %v1721, 4
        %v1767 = vadd.f32 %v1721, %v1766
        %v1768 = vrot.slane %v1767, 2
        %v1769 = vadd.f32 %v1767, %v1768
        %v1770 = vrot.slane %v1769, 1
        %v1771 = vadd.f32 %v1769, %v1770
        %v1772 = vmul.f32 %v1729, %v1187
        %v1773 = vmul.f32 %v1735, %v1187
        %v1774 = vmul.f32 %v1741, %v1187
        %v1775 = vmul.f32 %v1747, %v1187
        %v1776 = vmul.f32 %v1753, %v1187
        %v1777 = vmul.f32 %v1759, %v1187
        %v1778 = vmul.f32 %v1765, %v1187
        %v1779 = vmul.f32 %v1771, %v1187
        %v1780 = vsel %vm422, %v1252, 0.0
        %v1781 = vrot.slane %v1780, 4
        %v1782 = vadd.f32 %v1780, %v1781
        %v1783 = vrot.slane %v1782, 2
        %v1784 = vadd.f32 %v1782, %v1783
        %v1785 = vrot.slane %v1784, 1
        %v1786 = vadd.f32 %v1784, %v1785
        %v1787 = vsel %vm422, %v1253, 0.0
        %v1788 = vrot.slane %v1787, 4
        %v1789 = vadd.f32 %v1787, %v1788
        %v1790 = vrot.slane %v1789, 2
        %v1791 = vadd.f32 %v1789, %v1790
        %v1792 = vrot.slane %v1791, 1
        %v1793 = vadd.f32 %v1791, %v1792
        %v1794 = vsel %vm422, %v1254, 0.0
        %v1795 = vrot.slane %v1794, 4
        %v1796 = vadd.f32 %v1794, %v1795
        %v1797 = vrot.slane %v1796, 2
        %v1798 = vadd.f32 %v1796, %v1797
        %v1799 = vrot.slane %v1798, 1
        %v1800 = vadd.f32 %v1798, %v1799
        %v1801 = vsel %vm422, %v1255, 0.0
        %v1802 = vrot.slane %v1801, 4
        %v1803 = vadd.f32 %v1801, %v1802
        %v1804 = vrot.slane %v1803, 2
        %v1805 = vadd.f32 %v1803, %v1804
        %v1806 = vrot.slane %v1805, 1
        %v1807 = vadd.f32 %v1805, %v1806
        %v1808 = vsel %vm422, %v1256, 0.0
        %v1809 = vrot.slane %v1808, 4
        %v1810 = vadd.f32 %v1808, %v1809
        %v1811 = vrot.slane %v1810, 2
        %v1812 = vadd.f32 %v1810, %v1811
        %v1813 = vrot.slane %v1812, 1
        %v1814 = vadd.f32 %v1812, %v1813
        %v1815 = vsel %vm422, %v1257, 0.0
        %v1816 = vrot.slane %v1815, 4
        %v1817 = vadd.f32 %v1815, %v1816
        %v1818 = vrot.slane %v1817, 2
        %v1819 = vadd.f32 %v1817, %v1818
        %v1820 = vrot.slane %v1819, 1
        %v1821 = vadd.f32 %v1819, %v1820
        %v1822 = vsel %vm422, %v1258, 0.0
        %v1823 = vrot.slane %v1822, 4
        %v1824 = vadd.f32 %v1822, %v1823
        %v1825 = vrot.slane %v1824, 2
        %v1826 = vadd.f32 %v1824, %v1825
        %v1827 = vrot.slane %v1826, 1
        %v1828 = vadd.f32 %v1826, %v1827
        %v1829 = vsel %vm422, %v1259, 0.0
        %v1830 = vrot.slane %v1829, 4
        %v1831 = vadd.f32 %v1829, %v1830
        %v1832 = vrot.slane %v1831, 2
        %v1833 = vadd.f32 %v1831, %v1832
        %v1834 = vrot.slane %v1833, 1
        %v1835 = vadd.f32 %v1833, %v1834
        %v1836 = vmul.f32 %v1786, %v1187
        %v1837 = vmul.f32 %v1793, %v1187
        %v1838 = vmul.f32 %v1800, %v1187
        %v1839 = vmul.f32 %v1807, %v1187
        %v1840 = vmul.f32 %v1814, %v1187
        %v1841 = vmul.f32 %v1821, %v1187
        %v1842 = vmul.f32 %v1828, %v1187
        %v1843 = vmul.f32 %v1835, %v1187
        %v1844 = vsel %vm422, %v1723, 0.0
        %v1845 = vrot.slane %v1844, 4
        %v1846 = vadd.f32 %v1844, %v1845
        %v1847 = vrot.slane %v1846, 2
        %v1848 = vadd.f32 %v1846, %v1847
        %v1849 = vrot.slane %v1848, 1
        %v1850 = vadd.f32 %v1848, %v1849
        %v1851 = vmul.f32 %v1850, %v1187
        %1860 = vrot.lane.b32.xlu0 %v1188, 32
        %v1861 = vpop.permute.xlu0 %1860
        %1862 = vrot.lane.b32.xlu0 %v1189, 32
        %v1863 = vpop.permute.xlu0 %1862
        %1864 = vrot.lane.b32.xlu0 %v1190, 32
        %v1865 = vpop.permute.xlu0 %1864
        %1866 = vrot.lane.b32.xlu0 %v1191, 32
        %v1867 = vpop.permute.xlu0 %1866
        %1868 = vrot.lane.b32.xlu0 %v1192, 32
        %v1869 = vpop.permute.xlu0 %1868
        %1870 = vrot.lane.b32.xlu0 %v1193, 32
        %v1871 = vpop.permute.xlu0 %1870
        %1872 = vrot.lane.b32.xlu0 %v1194, 32
        %v1873 = vpop.permute.xlu0 %1872
        %1874 = vrot.lane.b32.xlu0 %v1195, 32
        %v1875 = vpop.permute.xlu0 %1874
        %1892 = vrot.lane.b32.xlu0 %v1252, 64
        %v1893 = vpop.permute.xlu0 %1892
        %1894 = vrot.lane.b32.xlu0 %v1253, 64
        %v1895 = vpop.permute.xlu0 %1894
        %1896 = vrot.lane.b32.xlu0 %v1254, 64
        %v1897 = vpop.permute.xlu0 %1896
        %1898 = vrot.lane.b32.xlu0 %v1255, 64
        %v1899 = vpop.permute.xlu0 %1898
        %1900 = vrot.lane.b32.xlu0 %v1256, 64
        %v1901 = vpop.permute.xlu0 %1900
        %1902 = vrot.lane.b32.xlu0 %v1257, 64
        %v1903 = vpop.permute.xlu0 %1902
        %1904 = vrot.lane.b32.xlu0 %v1258, 64
        %v1905 = vpop.permute.xlu0 %1904
        %1906 = vrot.lane.b32.xlu0 %v1259, 64
        %v1907 = vpop.permute.xlu0 %1906
        %1980 = vrot.lane.b32.xlu0 %v1644, 96
        %v1981 = vpop.permute.xlu0 %1980
        %1982 = vrot.lane.b32.xlu0 %v1645, 96
        %v1983 = vpop.permute.xlu0 %1982
        %1984 = vrot.lane.b32.xlu0 %v1646, 96
        %v1985 = vpop.permute.xlu0 %1984
        %1986 = vrot.lane.b32.xlu0 %v1647, 96
        %v1987 = vpop.permute.xlu0 %1986
        %1988 = vrot.lane.b32.xlu0 %v1648, 96
        %v1989 = vpop.permute.xlu0 %1988
        %1990 = vrot.lane.b32.xlu0 %v1649, 96
        %v1991 = vpop.permute.xlu0 %1990
        %1992 = vrot.lane.b32.xlu0 %v1650, 96
        %v1993 = vpop.permute.xlu0 %1992
        %1994 = vrot.lane.b32.xlu0 %v1651, 96
        %v1995 = vpop.permute.xlu0 %1994
        %1996 = vrot.lane.b32.xlu0 %v1652, 96
        %v1997 = vpop.permute.xlu0 %1996
        %1998 = vrot.lane.b32.xlu0 %v1653, 96
        %v1999 = vpop.permute.xlu0 %1998
        %2000 = vrot.lane.b32.xlu0 %v1654, 96
        %v2001 = vpop.permute.xlu0 %2000
        %2002 = vrot.lane.b32.xlu0 %v1655, 96
        %v2003 = vpop.permute.xlu0 %2002
        %2004 = vrot.lane.b32.xlu0 %v1656, 96
        %v2005 = vpop.permute.xlu0 %2004
        %2006 = vrot.lane.b32.xlu0 %v1657, 96
        %v2007 = vpop.permute.xlu0 %2006
        %2008 = vrot.lane.b32.xlu0 %v1658, 96
        %v2009 = vpop.permute.xlu0 %2008
        %2010 = vrot.lane.b32.xlu0 %v1659, 96
        %v2011 = vpop.permute.xlu0 %2010
        %2012 = vrot.lane.b32.xlu0 %v1660, 96
        %v2013 = vpop.permute.xlu0 %2012
        %2014 = vrot.lane.b32.xlu0 %v1661, 96
        %v2015 = vpop.permute.xlu0 %2014
        %2016 = vrot.lane.b32.xlu0 %v1662, 96
        %v2017 = vpop.permute.xlu0 %2016
        %2018 = vrot.lane.b32.xlu0 %v1663, 96
        %v2019 = vpop.permute.xlu0 %2018
        %2020 = vrot.lane.b32.xlu0 %v1664, 96
        %v2021 = vpop.permute.xlu0 %2020
        %2022 = vrot.lane.b32.xlu0 %v1665, 96
        %v2023 = vpop.permute.xlu0 %2022
        %2024 = vrot.lane.b32.xlu0 %v1666, 96
        %v2025 = vpop.permute.xlu0 %2024
        %2026 = vrot.lane.b32.xlu0 %v1667, 96
        %v2027 = vpop.permute.xlu0 %2026
        %2028 = vrot.lane.b32.xlu0 %v1668, 96
        %v2029 = vpop.permute.xlu0 %2028
        %2030 = vrot.lane.b32.xlu0 %v1669, 96
        %v2031 = vpop.permute.xlu0 %2030
        %2032 = vrot.lane.b32.xlu0 %v1670, 96
        %v2033 = vpop.permute.xlu0 %2032
        %2034 = vrot.lane.b32.xlu0 %v1671, 96
        %v2035 = vpop.permute.xlu0 %2034
        %2036 = vrot.lane.b32.xlu0 %v1672, 96
        %v2037 = vpop.permute.xlu0 %2036
        %2038 = vrot.lane.b32.xlu0 %v1673, 96
        %v2039 = vpop.permute.xlu0 %2038
        %2040 = vrot.lane.b32.xlu0 %v1674, 96
        %v2041 = vpop.permute.xlu0 %2040
        %2042 = vrot.lane.b32.xlu0 %v1675, 96
        %v2043 = vpop.permute.xlu0 %2042
        %2044 = vrot.lane.b32.xlu0 %v1676, 96
        %v2045 = vpop.permute.xlu0 %2044
        %2046 = vrot.lane.b32.xlu0 %v1677, 96
        %v2047 = vpop.permute.xlu0 %2046
        %2048 = vrot.lane.b32.xlu0 %v1678, 96
        %v2049 = vpop.permute.xlu0 %2048
        %2050 = vrot.lane.b32.xlu0 %v1679, 96
        %v2051 = vpop.permute.xlu0 %2050
        %2052 = vrot.lane.b32.xlu0 %v1680, 96
        %v2053 = vpop.permute.xlu0 %2052
        %2054 = vrot.lane.b32.xlu0 %v1681, 96
        %v2055 = vpop.permute.xlu0 %2054
        %2056 = vrot.lane.b32.xlu0 %v1682, 96
        %v2057 = vpop.permute.xlu0 %2056
        %2058 = vrot.lane.b32.xlu0 %v1683, 96
        %v2059 = vpop.permute.xlu0 %2058
        %2060 = vrot.lane.b32.xlu0 %v1684, 96
        %v2061 = vpop.permute.xlu0 %2060
        %2062 = vrot.lane.b32.xlu0 %v1685, 96
        %v2063 = vpop.permute.xlu0 %2062
        %2064 = vrot.lane.b32.xlu0 %v1686, 96
        %v2065 = vpop.permute.xlu0 %2064
        %2066 = vrot.lane.b32.xlu0 %v1687, 96
        %v2067 = vpop.permute.xlu0 %2066
        %2068 = vrot.lane.b32.xlu0 %v1688, 96
        %v2069 = vpop.permute.xlu0 %2068
        %2070 = vrot.lane.b32.xlu0 %v1689, 96
        %v2071 = vpop.permute.xlu0 %2070
        %2072 = vrot.lane.b32.xlu0 %v1690, 96
        %v2073 = vpop.permute.xlu0 %2072
        %2074 = vrot.lane.b32.xlu0 %v1691, 96
        %v2075 = vpop.permute.xlu0 %2074
        %2076 = vrot.lane.b32.xlu0 %v1692, 96
        %v2077 = vpop.permute.xlu0 %2076
        %2078 = vrot.lane.b32.xlu0 %v1693, 96
        %v2079 = vpop.permute.xlu0 %2078
        %2080 = vrot.lane.b32.xlu0 %v1694, 96
        %v2081 = vpop.permute.xlu0 %2080
        %2082 = vrot.lane.b32.xlu0 %v1695, 96
        %v2083 = vpop.permute.xlu0 %2082
        %2084 = vrot.lane.b32.xlu0 %v1696, 96
        %v2085 = vpop.permute.xlu0 %2084
        %2086 = vrot.lane.b32.xlu0 %v1697, 96
        %v2087 = vpop.permute.xlu0 %2086
        %2088 = vrot.lane.b32.xlu0 %v1698, 96
        %v2089 = vpop.permute.xlu0 %2088
        %2090 = vrot.lane.b32.xlu0 %v1699, 96
        %v2091 = vpop.permute.xlu0 %2090
        %2092 = vrot.lane.b32.xlu0 %v1700, 96
        %v2093 = vpop.permute.xlu0 %2092
        %2094 = vrot.lane.b32.xlu0 %v1701, 96
        %v2095 = vpop.permute.xlu0 %2094
        %2096 = vrot.lane.b32.xlu0 %v1702, 96
        %v2097 = vpop.permute.xlu0 %2096
        %2098 = vrot.lane.b32.xlu0 %v1703, 96
        %v2099 = vpop.permute.xlu0 %2098
        %2100 = vrot.lane.b32.xlu0 %v1704, 96
        %v2101 = vpop.permute.xlu0 %2100
        %2102 = vrot.lane.b32.xlu0 %v1705, 96
        %v2103 = vpop.permute.xlu0 %2102
        %2104 = vrot.lane.b32.xlu0 %v1706, 96
        %v2105 = vpop.permute.xlu0 %2104
        %2106 = vrot.lane.b32.xlu0 %v1707, 96
        %v2107 = vpop.permute.xlu0 %2106
        %2180 = vrot.lane.b32.xlu0 %v1772, 32
        %v2181 = vpop.permute.xlu0 %2180
        %2182 = vrot.lane.b32.xlu0 %v1773, 32
        %v2183 = vpop.permute.xlu0 %2182
        %2184 = vrot.lane.b32.xlu0 %v1774, 32
        %v2185 = vpop.permute.xlu0 %2184
        %2186 = vrot.lane.b32.xlu0 %v1775, 32
        %v2187 = vpop.permute.xlu0 %2186
        %2188 = vrot.lane.b32.xlu0 %v1776, 32
        %v2189 = vpop.permute.xlu0 %2188
        %2190 = vrot.lane.b32.xlu0 %v1777, 32
        %v2191 = vpop.permute.xlu0 %2190
        %2192 = vrot.lane.b32.xlu0 %v1778, 32
        %v2193 = vpop.permute.xlu0 %2192
        %2194 = vrot.lane.b32.xlu0 %v1779, 32
        %v2195 = vpop.permute.xlu0 %2194
        %2212 = vrot.lane.b32.xlu0 %v1836, 64
        %v2213 = vpop.permute.xlu0 %2212
        %2214 = vrot.lane.b32.xlu0 %v1837, 64
        %v2215 = vpop.permute.xlu0 %2214
        %2216 = vrot.lane.b32.xlu0 %v1838, 64
        %v2217 = vpop.permute.xlu0 %2216
        %2218 = vrot.lane.b32.xlu0 %v1839, 64
        %v2219 = vpop.permute.xlu0 %2218
        %2220 = vrot.lane.b32.xlu0 %v1840, 64
        %v2221 = vpop.permute.xlu0 %2220
        %2222 = vrot.lane.b32.xlu0 %v1841, 64
        %v2223 = vpop.permute.xlu0 %2222
        %2224 = vrot.lane.b32.xlu0 %v1842, 64
        %v2225 = vpop.permute.xlu0 %2224
        %2226 = vrot.lane.b32.xlu0 %v1843, 64
        %v2227 = vpop.permute.xlu0 %2226
        %2237 = vrot.lane.b32.xlu0 %v1851, 96
        %v2238 = vpop.permute.xlu0 %2237
        %v2240 = vsel %vm422, %v1003, %v1861
        %v2241 = vsel %vm422, %v1004, %v1863
        %v2242 = vsel %vm422, %v1005, %v1865
        %v2243 = vsel %vm422, %v1006, %v1867
        %v2244 = vsel %vm422, %v1007, %v1869
        %v2245 = vsel %vm422, %v1008, %v1871
        %v2246 = vsel %vm422, %v1009, %v1873
        %v2247 = vsel %vm422, %v1010, %v1875
        %v2248 = vsel %vm422, %v1011, %v1861
        %v2249 = vsel %vm422, %v1012, %v1863
        %v2250 = vsel %vm422, %v1013, %v1865
        %v2251 = vsel %vm422, %v1014, %v1867
        %v2252 = vsel %vm422, %v1015, %v1869
        %v2253 = vsel %vm422, %v1016, %v1871
        %v2254 = vsel %vm422, %v1017, %v1873
        %v2255 = vsel %vm422, %v1018, %v1875
        %v2256 = vsel %vm422, %v1019, %v1861
        %v2257 = vsel %vm422, %v1020, %v1863
        %v2258 = vsel %vm422, %v1021, %v1865
        %v2259 = vsel %vm422, %v1022, %v1867
        %v2260 = vsel %vm422, %v1023, %v1869
        %v2261 = vsel %vm422, %v1024, %v1871
        %v2262 = vsel %vm422, %v1025, %v1873
        %v2263 = vsel %vm422, %v1026, %v1875
        %v2264 = vsel %vm422, %v1027, %v1861
        %v2265 = vsel %vm422, %v1028, %v1863
        %v2266 = vsel %vm422, %v1029, %v1865
        %v2267 = vsel %vm422, %v1030, %v1867
        %v2268 = vsel %vm422, %v1031, %v1869
        %v2269 = vsel %vm422, %v1032, %v1871
        %v2270 = vsel %vm422, %v1033, %v1873
        %v2271 = vsel %vm422, %v1034, %v1875
        %v2272 = vsel %vm422, %v1035, %v1861
        %v2273 = vsel %vm422, %v1036, %v1863
        %v2274 = vsel %vm422, %v1037, %v1865
        %v2275 = vsel %vm422, %v1038, %v1867
        %v2276 = vsel %vm422, %v1039, %v1869
        %v2277 = vsel %vm422, %v1040, %v1871
        %v2278 = vsel %vm422, %v1041, %v1873
        %v2279 = vsel %vm422, %v1042, %v1875
        %v2280 = vsel %vm422, %v1043, %v1861
        %v2281 = vsel %vm422, %v1044, %v1863
        %v2282 = vsel %vm422, %v1045, %v1865
        %v2283 = vsel %vm422, %v1046, %v1867
        %v2284 = vsel %vm422, %v1047, %v1869
        %v2285 = vsel %vm422, %v1048, %v1871
        %v2286 = vsel %vm422, %v1049, %v1873
        %v2287 = vsel %vm422, %v1050, %v1875
        %v2288 = vsel %vm422, %v1051, %v1861
        %v2289 = vsel %vm422, %v1052, %v1863
        %v2290 = vsel %vm422, %v1053, %v1865
        %v2291 = vsel %vm422, %v1054, %v1867
        %v2292 = vsel %vm422, %v1055, %v1869
        %v2293 = vsel %vm422, %v1056, %v1871
        %v2294 = vsel %vm422, %v1057, %v1873
        %v2295 = vsel %vm422, %v1058, %v1875
        %v2296 = vsel %vm422, %v1059, %v1861
        %v2297 = vsel %vm422, %v1060, %v1863
        %v2298 = vsel %vm422, %v1061, %v1865
        %v2299 = vsel %vm422, %v1062, %v1867
        %v2300 = vsel %vm422, %v1063, %v1869
        %v2301 = vsel %vm422, %v1064, %v1871
        %v2302 = vsel %vm422, %v1065, %v1873
        %v2303 = vsel %vm422, %v1066, %v1875
        %vm2304 = vcmask 523264
        %v2305 = vsel %vm2304, %v2240, %v1893
        %v2306 = vsel %vm2304, %v2241, %v1893
        %v2307 = vsel %vm2304, %v2242, %v1893
        %v2308 = vsel %vm2304, %v2243, %v1893
        %v2309 = vsel %vm2304, %v2244, %v1893
        %v2310 = vsel %vm2304, %v2245, %v1893
        %v2311 = vsel %vm2304, %v2246, %v1893
        %v2312 = vsel %vm2304, %v2247, %v1893
        %v2313 = vsel %vm2304, %v2248, %v1895
        %v2314 = vsel %vm2304, %v2249, %v1895
        %v2315 = vsel %vm2304, %v2250, %v1895
        %v2316 = vsel %vm2304, %v2251, %v1895
        %v2317 = vsel %vm2304, %v2252, %v1895
        %v2318 = vsel %vm2304, %v2253, %v1895
        %v2319 = vsel %vm2304, %v2254, %v1895
        %v2320 = vsel %vm2304, %v2255, %v1895
        %v2321 = vsel %vm2304, %v2256, %v1897
        %v2322 = vsel %vm2304, %v2257, %v1897
        %v2323 = vsel %vm2304, %v2258, %v1897
        %v2324 = vsel %vm2304, %v2259, %v1897
        %v2325 = vsel %vm2304, %v2260, %v1897
        %v2326 = vsel %vm2304, %v2261, %v1897
        %v2327 = vsel %vm2304, %v2262, %v1897
        %v2328 = vsel %vm2304, %v2263, %v1897
        %v2329 = vsel %vm2304, %v2264, %v1899
        %v2330 = vsel %vm2304, %v2265, %v1899
        %v2331 = vsel %vm2304, %v2266, %v1899
        %v2332 = vsel %vm2304, %v2267, %v1899
        %v2333 = vsel %vm2304, %v2268, %v1899
        %v2334 = vsel %vm2304, %v2269, %v1899
        %v2335 = vsel %vm2304, %v2270, %v1899
        %v2336 = vsel %vm2304, %v2271, %v1899
        %v2337 = vsel %vm2304, %v2272, %v1901
        %v2338 = vsel %vm2304, %v2273, %v1901
        %v2339 = vsel %vm2304, %v2274, %v1901
        %v2340 = vsel %vm2304, %v2275, %v1901
        %v2341 = vsel %vm2304, %v2276, %v1901
        %v2342 = vsel %vm2304, %v2277, %v1901
        %v2343 = vsel %vm2304, %v2278, %v1901
        %v2344 = vsel %vm2304, %v2279, %v1901
        %v2345 = vsel %vm2304, %v2280, %v1903
        %v2346 = vsel %vm2304, %v2281, %v1903
        %v2347 = vsel %vm2304, %v2282, %v1903
        %v2348 = vsel %vm2304, %v2283, %v1903
        %v2349 = vsel %vm2304, %v2284, %v1903
        %v2350 = vsel %vm2304, %v2285, %v1903
        %v2351 = vsel %vm2304, %v2286, %v1903
        %v2352 = vsel %vm2304, %v2287, %v1903
        %v2353 = vsel %vm2304, %v2288, %v1905
        %v2354 = vsel %vm2304, %v2289, %v1905
        %v2355 = vsel %vm2304, %v2290, %v1905
        %v2356 = vsel %vm2304, %v2291, %v1905
        %v2357 = vsel %vm2304, %v2292, %v1905
        %v2358 = vsel %vm2304, %v2293, %v1905
        %v2359 = vsel %vm2304, %v2294, %v1905
        %v2360 = vsel %vm2304, %v2295, %v1905
        %v2361 = vsel %vm2304, %v2296, %v1907
        %v2362 = vsel %vm2304, %v2297, %v1907
        %v2363 = vsel %vm2304, %v2298, %v1907
        %v2364 = vsel %vm2304, %v2299, %v1907
        %v2365 = vsel %vm2304, %v2300, %v1907
        %v2366 = vsel %vm2304, %v2301, %v1907
        %v2367 = vsel %vm2304, %v2302, %v1907
        %v2368 = vsel %vm2304, %v2303, %v1907
        %vm2369 = vcmask 785408
        %v2370 = vsel %vm2369, %v2305, %v1981
        %v2371 = vsel %vm2369, %v2306, %v1983
        %v2372 = vsel %vm2369, %v2307, %v1985
        %v2373 = vsel %vm2369, %v2308, %v1987
        %v2374 = vsel %vm2369, %v2309, %v1989
        %v2375 = vsel %vm2369, %v2310, %v1991
        %v2376 = vsel %vm2369, %v2311, %v1993
        %v2377 = vsel %vm2369, %v2312, %v1995
        %v2378 = vsel %vm2369, %v2313, %v1997
        %v2379 = vsel %vm2369, %v2314, %v1999
        %v2380 = vsel %vm2369, %v2315, %v2001
        %v2381 = vsel %vm2369, %v2316, %v2003
        %v2382 = vsel %vm2369, %v2317, %v2005
        %v2383 = vsel %vm2369, %v2318, %v2007
        %v2384 = vsel %vm2369, %v2319, %v2009
        %v2385 = vsel %vm2369, %v2320, %v2011
        %v2386 = vsel %vm2369, %v2321, %v2013
        %v2387 = vsel %vm2369, %v2322, %v2015
        %v2388 = vsel %vm2369, %v2323, %v2017
        %v2389 = vsel %vm2369, %v2324, %v2019
        %v2390 = vsel %vm2369, %v2325, %v2021
        %v2391 = vsel %vm2369, %v2326, %v2023
        %v2392 = vsel %vm2369, %v2327, %v2025
        %v2393 = vsel %vm2369, %v2328, %v2027
        %v2394 = vsel %vm2369, %v2329, %v2029
        %v2395 = vsel %vm2369, %v2330, %v2031
        %v2396 = vsel %vm2369, %v2331, %v2033
        %v2397 = vsel %vm2369, %v2332, %v2035
        %v2398 = vsel %vm2369, %v2333, %v2037
        %v2399 = vsel %vm2369, %v2334, %v2039
        %v2400 = vsel %vm2369, %v2335, %v2041
        %v2401 = vsel %vm2369, %v2336, %v2043
        %v2402 = vsel %vm2369, %v2337, %v2045
        %v2403 = vsel %vm2369, %v2338, %v2047
        %v2404 = vsel %vm2369, %v2339, %v2049
        %v2405 = vsel %vm2369, %v2340, %v2051
        %v2406 = vsel %vm2369, %v2341, %v2053
        %v2407 = vsel %vm2369, %v2342, %v2055
        %v2408 = vsel %vm2369, %v2343, %v2057
        %v2409 = vsel %vm2369, %v2344, %v2059
        %v2410 = vsel %vm2369, %v2345, %v2061
        %v2411 = vsel %vm2369, %v2346, %v2063
        %v2412 = vsel %vm2369, %v2347, %v2065
        %v2413 = vsel %vm2369, %v2348, %v2067
        %v2414 = vsel %vm2369, %v2349, %v2069
        %v2415 = vsel %vm2369, %v2350, %v2071
        %v2416 = vsel %vm2369, %v2351, %v2073
        %v2417 = vsel %vm2369, %v2352, %v2075
        %v2418 = vsel %vm2369, %v2353, %v2077
        %v2419 = vsel %vm2369, %v2354, %v2079
        %v2420 = vsel %vm2369, %v2355, %v2081
        %v2421 = vsel %vm2369, %v2356, %v2083
        %v2422 = vsel %vm2369, %v2357, %v2085
        %v2423 = vsel %vm2369, %v2358, %v2087
        %v2424 = vsel %vm2369, %v2359, %v2089
        %v2425 = vsel %vm2369, %v2360, %v2091
        %v2426 = vsel %vm2369, %v2361, %v2093
        %v2427 = vsel %vm2369, %v2362, %v2095
        %v2428 = vsel %vm2369, %v2363, %v2097
        %v2429 = vsel %vm2369, %v2364, %v2099
        %v2430 = vsel %vm2369, %v2365, %v2101
        %v2431 = vsel %vm2369, %v2366, %v2103
        %v2432 = vsel %vm2369, %v2367, %v2105
        %v2433 = vsel %vm2369, %v2368, %v2107
        %v2434 = vsel %vm422, %v1723, %v2181
        %v2435 = vsel %vm422, %v1723, %v2183
        %v2436 = vsel %vm422, %v1723, %v2185
        %v2437 = vsel %vm422, %v1723, %v2187
        %v2438 = vsel %vm422, %v1723, %v2189
        %v2439 = vsel %vm422, %v1723, %v2191
        %v2440 = vsel %vm422, %v1723, %v2193
        %v2441 = vsel %vm422, %v1723, %v2195
        %v2442 = vsel %vm2304, %v2434, %v2213
        %v2443 = vsel %vm2304, %v2435, %v2213
        %v2444 = vsel %vm2304, %v2436, %v2213
        %v2445 = vsel %vm2304, %v2437, %v2213
        %v2446 = vsel %vm2304, %v2438, %v2213
        %v2447 = vsel %vm2304, %v2439, %v2213
        %v2448 = vsel %vm2304, %v2440, %v2213
        %v2449 = vsel %vm2304, %v2441, %v2213
        %v2450 = vsel %vm2304, %v2434, %v2215
        %v2451 = vsel %vm2304, %v2435, %v2215
        %v2452 = vsel %vm2304, %v2436, %v2215
        %v2453 = vsel %vm2304, %v2437, %v2215
        %v2454 = vsel %vm2304, %v2438, %v2215
        %v2455 = vsel %vm2304, %v2439, %v2215
        %v2456 = vsel %vm2304, %v2440, %v2215
        %v2457 = vsel %vm2304, %v2441, %v2215
        %v2458 = vsel %vm2304, %v2434, %v2217
        %v2459 = vsel %vm2304, %v2435, %v2217
        %v2460 = vsel %vm2304, %v2436, %v2217
        %v2461 = vsel %vm2304, %v2437, %v2217
        %v2462 = vsel %vm2304, %v2438, %v2217
        %v2463 = vsel %vm2304, %v2439, %v2217
        %v2464 = vsel %vm2304, %v2440, %v2217
        %v2465 = vsel %vm2304, %v2441, %v2217
        %v2466 = vsel %vm2304, %v2434, %v2219
        %v2467 = vsel %vm2304, %v2435, %v2219
        %v2468 = vsel %vm2304, %v2436, %v2219
        %v2469 = vsel %vm2304, %v2437, %v2219
        %v2470 = vsel %vm2304, %v2438, %v2219
        %v2471 = vsel %vm2304, %v2439, %v2219
        %v2472 = vsel %vm2304, %v2440, %v2219
        %v2473 = vsel %vm2304, %v2441, %v2219
        %v2474 = vsel %vm2304, %v2434, %v2221
        %v2475 = vsel %vm2304, %v2435, %v2221
        %v2476 = vsel %vm2304, %v2436, %v2221
        %v2477 = vsel %vm2304, %v2437, %v2221
        %v2478 = vsel %vm2304, %v2438, %v2221
        %v2479 = vsel %vm2304, %v2439, %v2221
        %v2480 = vsel %vm2304, %v2440, %v2221
        %v2481 = vsel %vm2304, %v2441, %v2221
        %v2482 = vsel %vm2304, %v2434, %v2223
        %v2483 = vsel %vm2304, %v2435, %v2223
        %v2484 = vsel %vm2304, %v2436, %v2223
        %v2485 = vsel %vm2304, %v2437, %v2223
        %v2486 = vsel %vm2304, %v2438, %v2223
        %v2487 = vsel %vm2304, %v2439, %v2223
        %v2488 = vsel %vm2304, %v2440, %v2223
        %v2489 = vsel %vm2304, %v2441, %v2223
        %v2490 = vsel %vm2304, %v2434, %v2225
        %v2491 = vsel %vm2304, %v2435, %v2225
        %v2492 = vsel %vm2304, %v2436, %v2225
        %v2493 = vsel %vm2304, %v2437, %v2225
        %v2494 = vsel %vm2304, %v2438, %v2225
        %v2495 = vsel %vm2304, %v2439, %v2225
        %v2496 = vsel %vm2304, %v2440, %v2225
        %v2497 = vsel %vm2304, %v2441, %v2225
        %v2498 = vsel %vm2304, %v2434, %v2227
        %v2499 = vsel %vm2304, %v2435, %v2227
        %v2500 = vsel %vm2304, %v2436, %v2227
        %v2501 = vsel %vm2304, %v2437, %v2227
        %v2502 = vsel %vm2304, %v2438, %v2227
        %v2503 = vsel %vm2304, %v2439, %v2227
        %v2504 = vsel %vm2304, %v2440, %v2227
        %v2505 = vsel %vm2304, %v2441, %v2227
        %v2506 = vsel %vm2369, %v2442, %v2238
        %v2507 = vsel %vm2369, %v2443, %v2238
        %v2508 = vsel %vm2369, %v2444, %v2238
        %v2509 = vsel %vm2369, %v2445, %v2238
        %v2510 = vsel %vm2369, %v2446, %v2238
        %v2511 = vsel %vm2369, %v2447, %v2238
        %v2512 = vsel %vm2369, %v2448, %v2238
        %v2513 = vsel %vm2369, %v2449, %v2238
        %v2514 = vsel %vm2369, %v2450, %v2238
        %v2515 = vsel %vm2369, %v2451, %v2238
        %v2516 = vsel %vm2369, %v2452, %v2238
        %v2517 = vsel %vm2369, %v2453, %v2238
        %v2518 = vsel %vm2369, %v2454, %v2238
        %v2519 = vsel %vm2369, %v2455, %v2238
        %v2520 = vsel %vm2369, %v2456, %v2238
        %v2521 = vsel %vm2369, %v2457, %v2238
        %v2522 = vsel %vm2369, %v2458, %v2238
        %v2523 = vsel %vm2369, %v2459, %v2238
        %v2524 = vsel %vm2369, %v2460, %v2238
        %v2525 = vsel %vm2369, %v2461, %v2238
        %v2526 = vsel %vm2369, %v2462, %v2238
        %v2527 = vsel %vm2369, %v2463, %v2238
        %v2528 = vsel %vm2369, %v2464, %v2238
        %v2529 = vsel %vm2369, %v2465, %v2238
        %v2530 = vsel %vm2369, %v2466, %v2238
        %v2531 = vsel %vm2369, %v2467, %v2238
        %v2532 = vsel %vm2369, %v2468, %v2238
        %v2533 = vsel %vm2369, %v2469, %v2238
        %v2534 = vsel %vm2369, %v2470, %v2238
        %v2535 = vsel %vm2369, %v2471, %v2238
        %v2536 = vsel %vm2369, %v2472, %v2238
        %v2537 = vsel %vm2369, %v2473, %v2238
        %v2538 = vsel %vm2369, %v2474, %v2238
        %v2539 = vsel %vm2369, %v2475, %v2238
        %v2540 = vsel %vm2369, %v2476, %v2238
        %v2541 = vsel %vm2369, %v2477, %v2238
        %v2542 = vsel %vm2369, %v2478, %v2238
        %v2543 = vsel %vm2369, %v2479, %v2238
        %v2544 = vsel %vm2369, %v2480, %v2238
        %v2545 = vsel %vm2369, %v2481, %v2238
        %v2546 = vsel %vm2369, %v2482, %v2238
        %v2547 = vsel %vm2369, %v2483, %v2238
        %v2548 = vsel %vm2369, %v2484, %v2238
        %v2549 = vsel %vm2369, %v2485, %v2238
        %v2550 = vsel %vm2369, %v2486, %v2238
        %v2551 = vsel %vm2369, %v2487, %v2238
        %v2552 = vsel %vm2369, %v2488, %v2238
        %v2553 = vsel %vm2369, %v2489, %v2238
        %v2554 = vsel %vm2369, %v2490, %v2238
        %v2555 = vsel %vm2369, %v2491, %v2238
        %v2556 = vsel %vm2369, %v2492, %v2238
        %v2557 = vsel %vm2369, %v2493, %v2238
        %v2558 = vsel %vm2369, %v2494, %v2238
        %v2559 = vsel %vm2369, %v2495, %v2238
        %v2560 = vsel %vm2369, %v2496, %v2238
        %v2561 = vsel %vm2369, %v2497, %v2238
        %v2562 = vsel %vm2369, %v2498, %v2238
        %v2563 = vsel %vm2369, %v2499, %v2238
        %v2564 = vsel %vm2369, %v2500, %v2238
        %v2565 = vsel %vm2369, %v2501, %v2238
        %v2566 = vsel %vm2369, %v2502, %v2238
        %v2567 = vsel %vm2369, %v2503, %v2238
        %v2568 = vsel %vm2369, %v2504, %v2238
        %v2569 = vsel %vm2369, %v2505, %v2238
        %v2570 = vld [vmem:[%s5] sm:$0xff]
        %v2571 = vld [vmem:[%s5 + $0x8] sm:$0xff]
        %v2572 = vld [vmem:[%s5 + $0x10] sm:$0xff]
        %v2573 = vld [vmem:[%s5 + $0x18] sm:$0xff]
        %v2574 = vld [vmem:[%s5 + $0x20] sm:$0xff]
        %v2575 = vld [vmem:[%s5 + $0x28] sm:$0xff]
        %v2576 = vld [vmem:[%s5 + $0x30] sm:$0xff]
        %v2577 = vld [vmem:[%s5 + $0x38] sm:$0xff]
        %v2578 = vld [vmem:[%s5 + $0x40] sm:$0xff]
        %v2579 = vld [vmem:[%s5 + $0x48] sm:$0xff]
        %v2580 = vld [vmem:[%s5 + $0x50] sm:$0xff]
        %v2581 = vld [vmem:[%s5 + $0x58] sm:$0xff]
        %v2582 = vld [vmem:[%s5 + $0x60] sm:$0xff]
        %v2583 = vld [vmem:[%s5 + $0x68] sm:$0xff]
        %v2584 = vld [vmem:[%s5 + $0x70] sm:$0xff]
        %v2585 = vld [vmem:[%s5 + $0x78] sm:$0xff]
        %v2586 = vld [vmem:[%s5 + $0x80] sm:$0xff]
        %v2587 = vld [vmem:[%s5 + $0x88] sm:$0xff]
        %v2588 = vld [vmem:[%s5 + $0x90] sm:$0xff]
        %v2589 = vld [vmem:[%s5 + $0x98] sm:$0xff]
        %v2590 = vld [vmem:[%s5 + $0xa0] sm:$0xff]
        %v2591 = vld [vmem:[%s5 + $0xa8] sm:$0xff]
        %v2592 = vld [vmem:[%s5 + $0xb0] sm:$0xff]
        %v2593 = vld [vmem:[%s5 + $0xb8] sm:$0xff]
        %v2594 = vld [vmem:[%s5 + $0xc0] sm:$0xff]
        %v2595 = vld [vmem:[%s5 + $0xc8] sm:$0xff]
        %v2596 = vld [vmem:[%s5 + $0xd0] sm:$0xff]
        %v2597 = vld [vmem:[%s5 + $0xd8] sm:$0xff]
        %v2598 = vld [vmem:[%s5 + $0xe0] sm:$0xff]
        %v2599 = vld [vmem:[%s5 + $0xe8] sm:$0xff]
        %v2600 = vld [vmem:[%s5 + $0xf0] sm:$0xff]
        %v2601 = vld [vmem:[%s5 + $0xf8] sm:$0xff]
        %v2602 = vld [vmem:[%s6] sm:$0x1]
        %v2604 = vlaneseq
        %v2605 = vshrl.u32 %v2604, 7
        %v2606 = vsub.s32 0, %v2605
        %v2607 = vrot.slane %v2602, %v2606
        %2609 = vmatprep.subr.mxu0 0.0
        %2610 = vmatpush1.msra.mxu0 %v2570
        %2611 = vmatprep.subr.mxu0 0.0
        %2612 = vmatpush1.msra.mxu0 %v2571
        %2613 = vmatprep.subr.mxu0 0.0
        %2614 = vmatpush1.msra.mxu0 %v2572
        %2615 = vmatprep.subr.mxu0 0.0
        %2616 = vmatpush1.msra.mxu0 %v2573
        %2617 = vmatprep.subr.mxu0 0.0
        %2618 = vmatpush1.msra.mxu0 %v2574
        %2619 = vmatprep.subr.mxu0 0.0
        %2620 = vmatpush1.msra.mxu0 %v2575
        %2621 = vmatprep.subr.mxu0 0.0
        %2622 = vmatpush1.msra.mxu0 %v2576
        %2623 = vmatprep.subr.mxu0 0.0
        %2624 = vmatpush1.msra.mxu0 %v2577
        %2625 = vmatprep.subr.mxu0 0.0
        %2626 = vmatpush1.msra.mxu0 %v2578
        %2627 = vmatprep.subr.mxu0 0.0
        %2628 = vmatpush1.msra.mxu0 %v2579
        %2629 = vmatprep.subr.mxu0 0.0
        %2630 = vmatpush1.msra.mxu0 %v2580
        %2631 = vmatprep.subr.mxu0 0.0
        %2632 = vmatpush1.msra.mxu0 %v2581
        %2633 = vmatprep.subr.mxu0 0.0
        %2634 = vmatpush1.msra.mxu0 %v2582
        %2635 = vmatprep.subr.mxu0 0.0
        %2636 = vmatpush1.msra.mxu0 %v2583
        %2637 = vmatprep.subr.mxu0 0.0
        %2638 = vmatpush1.msra.mxu0 %v2584
        %2639 = vmatprep.subr.mxu0 0.0
        %2640 = vmatpush1.msra.mxu0 %v2585
        %2641 = vmatprep.subr.mxu0 0.0
        %2642 = vmatpush1.msra.mxu0 %v2586
        %2643 = vmatprep.subr.mxu0 0.0
        %2644 = vmatpush1.msra.mxu0 %v2587
        %2645 = vmatprep.subr.mxu0 0.0
        %2646 = vmatpush1.msra.mxu0 %v2588
        %2647 = vmatprep.subr.mxu0 0.0
        %2648 = vmatpush1.msra.mxu0 %v2589
        %2649 = vmatprep.subr.mxu0 0.0
        %2650 = vmatpush1.msra.mxu0 %v2590
        %2651 = vmatprep.subr.mxu0 0.0
        %2652 = vmatpush1.msra.mxu0 %v2591
        %2653 = vmatprep.subr.mxu0 0.0
        %2654 = vmatpush1.msra.mxu0 %v2592
        %2655 = vmatprep.subr.mxu0 0.0
        %2656 = vmatpush1.msra.mxu0 %v2593
        %2657 = vmatprep.subr.mxu0 0.0
        %2658 = vmatpush1.msra.mxu0 %v2594
        %2659 = vmatprep.subr.mxu0 0.0
        %2660 = vmatpush1.msra.mxu0 %v2595
        %2661 = vmatprep.subr.mxu0 0.0
        %2662 = vmatpush1.msra.mxu0 %v2596
        %2663 = vmatprep.subr.mxu0 0.0
        %2664 = vmatpush1.msra.mxu0 %v2597
        %2665 = vmatprep.subr.mxu0 0.0
        %2666 = vmatpush1.msra.mxu0 %v2598
        %2667 = vmatprep.subr.mxu0 0.0
        %2668 = vmatpush1.msra.mxu0 %v2599
        %2669 = vmatprep.subr.mxu0 0.0
        %2670 = vmatpush1.msra.mxu0 %v2600
        %2671 = vmatprep.subr.mxu0 0.0
        %2672 = vmatpush1.msra.mxu0 %v2601
        %2673 = vmatprep.mubr.f32.mxu0 %v2506
        %2674 = vmatmul.mubr.f32.gmra.mrb[0].mxu0 %v2370
        %v2675 = vpop.f32.mrb[0].mxu0
        %v2676 = vadd.f32 %v2607, %v2675
        %v2677 = vpop.f32.mrb[0].mxu0
        %2678 = vmatprep.mubr.f32.mxu0 %v2507
        %2679 = vmatmul.mubr.f32.gmra.mrb[0].mxu0 %v2371
        %v2680 = vpop.f32.mrb[0].mxu0
        %v2681 = vadd.f32 %v2607, %v2680
        %v2682 = vpop.f32.mrb[0].mxu0
        %2683 = vmatprep.mubr.f32.mxu0 %v2508
        %2684 = vmatmul.mubr.f32.gmra.mrb[0].mxu0 %v2372
        %v2685 = vpop.f32.mrb[0].mxu0
        %v2686 = vadd.f32 %v2607, %v2685
        %v2687 = vpop.f32.mrb[0].mxu0
        %2688 = vmatprep.mubr.f32.mxu0 %v2509
        %2689 = vmatmul.mubr.f32.gmra.mrb[0].mxu0 %v2373
        %v2690 = vpop.f32.mrb[0].mxu0
        %v2691 = vadd.f32 %v2607, %v2690
        %v2692 = vpop.f32.mrb[0].mxu0
        %2693 = vmatprep.mubr.f32.mxu0 %v2510
        %2694 = vmatmul.mubr.f32.gmra.mrb[0].mxu0 %v2374
        %v2695 = vpop.f32.mrb[0].mxu0
        %v2696 = vadd.f32 %v2607, %v2695
        %v2697 = vpop.f32.mrb[0].mxu0
        %2698 = vmatprep.mubr.f32.mxu0 %v2511
        %2699 = vmatmul.mubr.f32.gmra.mrb[0].mxu0 %v2375
        %v2700 = vpop.f32.mrb[0].mxu0
        %v2701 = vadd.f32 %v2607, %v2700
        %v2702 = vpop.f32.mrb[0].mxu0
        %2703 = vmatprep.mubr.f32.mxu0 %v2512
        %2704 = vmatmul.mubr.f32.gmra.mrb[0].mxu0 %v2376
        %v2705 = vpop.f32.mrb[0].mxu0
        %v2706 = vadd.f32 %v2607, %v2705
        %v2707 = vpop.f32.mrb[0].mxu0
        %2708 = vmatprep.mubr.f32.mxu0 %v2513
        %2709 = vmatmul.mubr.f32.gmra.mrb[0].mxu0 %v2377
        %v2710 = vpop.f32.mrb[0].mxu0
        %v2711 = vadd.f32 %v2607, %v2710
        %v2712 = vpop.f32.mrb[0].mxu0
        %2713 = vmatprep.mubr.f32.mxu0 %v2514
        %2714 = vmatmul.mubr.f32.gmra.mrb[0].mxu0 %v2378
        %v2715 = vpop.f32.mrb[0].mxu0
        %v2716 = vadd.f32 %v2607, %v2715
        %v2717 = vpop.f32.mrb[0].mxu0
        %2718 = vmatprep.mubr.f32.mxu0 %v2515
        %2719 = vmatmul.mubr.f32.gmra.mrb[0].mxu0 %v2379
        %v2720 = vpop.f32.mrb[0].mxu0
        %v2721 = vadd.f32 %v2607, %v2720
        %v2722 = vpop.f32.mrb[0].mxu0
        %2723 = vmatprep.mubr.f32.mxu0 %v2516
        %2724 = vmatmul.mubr.f32.gmra.mrb[0].mxu0 %v2380
        %v2725 = vpop.f32.mrb[0].mxu0
        %v2726 = vadd.f32 %v2607, %v2725
        %v2727 = vpop.f32.mrb[0].mxu0
        %2728 = vmatprep.mubr.f32.mxu0 %v2517
        %2729 = vmatmul.mubr.f32.gmra.mrb[0].mxu0 %v2381
        %v2730 = vpop.f32.mrb[0].mxu0
        %v2731 = vadd.f32 %v2607, %v2730
        %v2732 = vpop.f32.mrb[0].mxu0
        %2733 = vmatprep.mubr.f32.mxu0 %v2518
        %2734 = vmatmul.mubr.f32.gmra.mrb[0].mxu0 %v2382
        %v2735 = vpop.f32.mrb[0].mxu0
        %v2736 = vadd.f32 %v2607, %v2735
        %v2737 = vpop.f32.mrb[0].mxu0
        %2738 = vmatprep.mubr.f32.mxu0 %v2519
        %2739 = vmatmul.mubr.f32.gmra.mrb[0].mxu0 %v2383
        %v2740 = vpop.f32.mrb[0].mxu0
        %v2741 = vadd.f32 %v2607, %v2740
        %v2742 = vpop.f32.mrb[0].mxu0
        %2743 = vmatprep.mubr.f32.mxu0 %v2520
        %2744 = vmatmul.mubr.f32.gmra.mrb[0].mxu0 %v2384
        %v2745 = vpop.f32.mrb[0].mxu0
        %v2746 = vadd.f32 %v2607, %v2745
        %v2747 = vpop.f32.mrb[0].mxu0
        %2748 = vmatprep.mubr.f32.mxu0 %v2521
        %2749 = vmatmul.mubr.f32.gmra.mrb[0].mxu0 %v2385
        %v2750 = vpop.f32.mrb[0].mxu0
        %v2751 = vadd.f32 %v2607, %v2750
        %v2752 = vpop.f32.mrb[0].mxu0
        %2753 = vmatprep.mubr.f32.mxu0 %v2522
        %2754 = vmatmul.mubr.f32.gmra.mrb[0].mxu0 %v2386
        %v2755 = vpop.f32.mrb[0].mxu0
        %v2756 = vadd.f32 %v2607, %v2755
        %v2757 = vpop.f32.mrb[0].mxu0
        %2758 = vmatprep.mubr.f32.mxu0 %v2523
        %2759 = vmatmul.mubr.f32.gmra.mrb[0].mxu0 %v2387
        %v2760 = vpop.f32.mrb[0].mxu0
        %v2761 = vadd.f32 %v2607, %v2760
        %v2762 = vpop.f32.mrb[0].mxu0
        %2763 = vmatprep.mubr.f32.mxu0 %v2524
        %2764 = vmatmul.mubr.f32.gmra.mrb[0].mxu0 %v2388
        %v2765 = vpop.f32.mrb[0].mxu0
        %v2766 = vadd.f32 %v2607, %v2765
        %v2767 = vpop.f32.mrb[0].mxu0
        %2768 = vmatprep.mubr.f32.mxu0 %v2525
        %2769 = vmatmul.mubr.f32.gmra.mrb[0].mxu0 %v2389
        %v2770 = vpop.f32.mrb[0].mxu0
        %v2771 = vadd.f32 %v2607, %v2770
        %v2772 = vpop.f32.mrb[0].mxu0
        %2773 = vmatprep.mubr.f32.mxu0 %v2526
        %2774 = vmatmul.mubr.f32.gmra.mrb[0].mxu0 %v2390
        %v2775 = vpop.f32.mrb[0].mxu0
        %v2776 = vadd.f32 %v2607, %v2775
        %v2777 = vpop.f32.mrb[0].mxu0
        %2778 = vmatprep.mubr.f32.mxu0 %v2527
        %2779 = vmatmul.mubr.f32.gmra.mrb[0].mxu0 %v2391
        %v2780 = vpop.f32.mrb[0].mxu0
        %v2781 = vadd.f32 %v2607, %v2780
        %v2782 = vpop.f32.mrb[0].mxu0
        %2783 = vmatprep.mubr.f32.mxu0 %v2528
        %2784 = vmatmul.mubr.f32.gmra.mrb[0].mxu0 %v2392
        %v2785 = vpop.f32.mrb[0].mxu0
        %v2786 = vadd.f32 %v2607, %v2785
        %v2787 = vpop.f32.mrb[0].mxu0
        %2788 = vmatprep.mubr.f32.mxu0 %v2529
        %2789 = vmatmul.mubr.f32.gmra.mrb[0].mxu0 %v2393
        %v2790 = vpop.f32.mrb[0].mxu0
        %v2791 = vadd.f32 %v2607, %v2790
        %v2792 = vpop.f32.mrb[0].mxu0
        %2793 = vmatprep.mubr.f32.mxu0 %v2530
        %2794 = vmatmul.mubr.f32.gmra.mrb[0].mxu0 %v2394
        %v2795 = vpop.f32.mrb[0].mxu0
        %v2796 = vadd.f32 %v2607, %v2795
        %v2797 = vpop.f32.mrb[0].mxu0
        %2798 = vmatprep.mubr.f32.mxu0 %v2531
        %2799 = vmatmul.mubr.f32.gmra.mrb[0].mxu0 %v2395
        %v2800 = vpop.f32.mrb[0].mxu0
        %v2801 = vadd.f32 %v2607, %v2800
        %v2802 = vpop.f32.mrb[0].mxu0
        %2803 = vmatprep.mubr.f32.mxu0 %v2532
        %2804 = vmatmul.mubr.f32.gmra.mrb[0].mxu0 %v2396
        %v2805 = vpop.f32.mrb[0].mxu0
        %v2806 = vadd.f32 %v2607, %v2805
        %v2807 = vpop.f32.mrb[0].mxu0
        %2808 = vmatprep.mubr.f32.mxu0 %v2533
        %2809 = vmatmul.mubr.f32.gmra.mrb[0].mxu0 %v2397
        %v2810 = vpop.f32.mrb[0].mxu0
        %v2811 = vadd.f32 %v2607, %v2810
        %v2812 = vpop.f32.mrb[0].mxu0
        %2813 = vmatprep.mubr.f32.mxu0 %v2534
        %2814 = vmatmul.mubr.f32.gmra.mrb[0].mxu0 %v2398
        %v2815 = vpop.f32.mrb[0].mxu0
        %v2816 = vadd.f32 %v2607, %v2815
        %v2817 = vpop.f32.mrb[0].mxu0
        %2818 = vmatprep.mubr.f32.mxu0 %v2535
        %2819 = vmatmul.mubr.f32.gmra.mrb[0].mxu0 %v2399
        %v2820 = vpop.f32.mrb[0].mxu0
        %v2821 = vadd.f32 %v2607, %v2820
        %v2822 = vpop.f32.mrb[0].mxu0
        %2823 = vmatprep.mubr.f32.mxu0 %v2536
        %2824 = vmatmul.mubr.f32.gmra.mrb[0].mxu0 %v2400
        %v2825 = vpop.f32.mrb[0].mxu0
        %v2826 = vadd.f32 %v2607, %v2825
        %v2827 = vpop.f32.mrb[0].mxu0
        %2828 = vmatprep.mubr.f32.mxu0 %v2537
        %2829 = vmatmul.mubr.f32.gmra.mrb[0].mxu0 %v2401
        %v2830 = vpop.f32.mrb[0].mxu0
        %v2831 = vadd.f32 %v2607, %v2830
        %v2832 = vpop.f32.mrb[0].mxu0
        %2833 = vmatprep.mubr.f32.mxu0 %v2538
        %2834 = vmatmul.mubr.f32.gmra.mrb[0].mxu0 %v2402
        %v2835 = vpop.f32.mrb[0].mxu0
        %v2836 = vadd.f32 %v2607, %v2835
        %v2837 = vpop.f32.mrb[0].mxu0
        %2838 = vmatprep.mubr.f32.mxu0 %v2539
        %2839 = vmatmul.mubr.f32.gmra.mrb[0].mxu0 %v2403
        %v2840 = vpop.f32.mrb[0].mxu0
        %v2841 = vadd.f32 %v2607, %v2840
        %v2842 = vpop.f32.mrb[0].mxu0
        %2843 = vmatprep.mubr.f32.mxu0 %v2540
        %2844 = vmatmul.mubr.f32.gmra.mrb[0].mxu0 %v2404
        %v2845 = vpop.f32.mrb[0].mxu0
        %v2846 = vadd.f32 %v2607, %v2845
        %v2847 = vpop.f32.mrb[0].mxu0
        %2848 = vmatprep.mubr.f32.mxu0 %v2541
        %2849 = vmatmul.mubr.f32.gmra.mrb[0].mxu0 %v2405
        %v2850 = vpop.f32.mrb[0].mxu0
        %v2851 = vadd.f32 %v2607, %v2850
        %v2852 = vpop.f32.mrb[0].mxu0
        %2853 = vmatprep.mubr.f32.mxu0 %v2542
        %2854 = vmatmul.mubr.f32.gmra.mrb[0].mxu0 %v2406
        %v2855 = vpop.f32.mrb[0].mxu0
        %v2856 = vadd.f32 %v2607, %v2855
        %v2857 = vpop.f32.mrb[0].mxu0
        %2858 = vmatprep.mubr.f32.mxu0 %v2543
        %2859 = vmatmul.mubr.f32.gmra.mrb[0].mxu0 %v2407
        %v2860 = vpop.f32.mrb[0].mxu0
        %v2861 = vadd.f32 %v2607, %v2860
        %v2862 = vpop.f32.mrb[0].mxu0
        %2863 = vmatprep.mubr.f32.mxu0 %v2544
        %2864 = vmatmul.mubr.f32.gmra.mrb[0].mxu0 %v2408
        %v2865 = vpop.f32.mrb[0].mxu0
        %v2866 = vadd.f32 %v2607, %v2865
        %v2867 = vpop.f32.mrb[0].mxu0
        %2868 = vmatprep.mubr.f32.mxu0 %v2545
        %2869 = vmatmul.mubr.f32.gmra.mrb[0].mxu0 %v2409
        %v2870 = vpop.f32.mrb[0].mxu0
        %v2871 = vadd.f32 %v2607, %v2870
        %v2872 = vpop.f32.mrb[0].mxu0
        %2873 = vmatprep.mubr.f32.mxu0 %v2546
        %2874 = vmatmul.mubr.f32.gmra.mrb[0].mxu0 %v2410
        %v2875 = vpop.f32.mrb[0].mxu0
        %v2876 = vadd.f32 %v2607, %v2875
        %v2877 = vpop.f32.mrb[0].mxu0
        %2878 = vmatprep.mubr.f32.mxu0 %v2547
        %2879 = vmatmul.mubr.f32.gmra.mrb[0].mxu0 %v2411
        %v2880 = vpop.f32.mrb[0].mxu0
        %v2881 = vadd.f32 %v2607, %v2880
        %v2882 = vpop.f32.mrb[0].mxu0
        %2883 = vmatprep.mubr.f32.mxu0 %v2548
        %2884 = vmatmul.mubr.f32.gmra.mrb[0].mxu0 %v2412
        %v2885 = vpop.f32.mrb[0].mxu0
        %v2886 = vadd.f32 %v2607, %v2885
        %v2887 = vpop.f32.mrb[0].mxu0
        %2888 = vmatprep.mubr.f32.mxu0 %v2549
        %2889 = vmatmul.mubr.f32.gmra.mrb[0].mxu0 %v2413
        %v2890 = vpop.f32.mrb[0].mxu0
        %v2891 = vadd.f32 %v2607, %v2890
        %v2892 = vpop.f32.mrb[0].mxu0
        %2893 = vmatprep.mubr.f32.mxu0 %v2550
        %2894 = vmatmul.mubr.f32.gmra.mrb[0].mxu0 %v2414
        %v2895 = vpop.f32.mrb[0].mxu0
        %v2896 = vadd.f32 %v2607, %v2895
        %v2897 = vpop.f32.mrb[0].mxu0
        %2898 = vmatprep.mubr.f32.mxu0 %v2551
        %2899 = vmatmul.mubr.f32.gmra.mrb[0].mxu0 %v2415
        %v2900 = vpop.f32.mrb[0].mxu0
        %v2901 = vadd.f32 %v2607, %v2900
        %v2902 = vpop.f32.mrb[0].mxu0
        %2903 = vmatprep.mubr.f32.mxu0 %v2552
        %2904 = vmatmul.mubr.f32.gmra.mrb[0].mxu0 %v2416
        %v2905 = vpop.f32.mrb[0].mxu0
        %v2906 = vadd.f32 %v2607, %v2905
        %v2907 = vpop.f32.mrb[0].mxu0
        %2908 = vmatprep.mubr.f32.mxu0 %v2553
        %2909 = vmatmul.mubr.f32.gmra.mrb[0].mxu0 %v2417
        %v2910 = vpop.f32.mrb[0].mxu0
        %v2911 = vadd.f32 %v2607, %v2910
        %v2912 = vpop.f32.mrb[0].mxu0
        %2913 = vmatprep.mubr.f32.mxu0 %v2554
        %2914 = vmatmul.mubr.f32.gmra.mrb[0].mxu0 %v2418
        %v2915 = vpop.f32.mrb[0].mxu0
        %v2916 = vadd.f32 %v2607, %v2915
        %v2917 = vpop.f32.mrb[0].mxu0
        %2918 = vmatprep.mubr.f32.mxu0 %v2555
        %2919 = vmatmul.mubr.f32.gmra.mrb[0].mxu0 %v2419
        %v2920 = vpop.f32.mrb[0].mxu0
        %v2921 = vadd.f32 %v2607, %v2920
        %v2922 = vpop.f32.mrb[0].mxu0
        %2923 = vmatprep.mubr.f32.mxu0 %v2556
        %2924 = vmatmul.mubr.f32.gmra.mrb[0].mxu0 %v2420
        %v2925 = vpop.f32.mrb[0].mxu0
        %v2926 = vadd.f32 %v2607, %v2925
        %v2927 = vpop.f32.mrb[0].mxu0
        %2928 = vmatprep.mubr.f32.mxu0 %v2557
        %2929 = vmatmul.mubr.f32.gmra.mrb[0].mxu0 %v2421
        %v2930 = vpop.f32.mrb[0].mxu0
        %v2931 = vadd.f32 %v2607, %v2930
        %v2932 = vpop.f32.mrb[0].mxu0
        %2933 = vmatprep.mubr.f32.mxu0 %v2558
        %2934 = vmatmul.mubr.f32.gmra.mrb[0].mxu0 %v2422
        %v2935 = vpop.f32.mrb[0].mxu0
        %v2936 = vadd.f32 %v2607, %v2935
        %v2937 = vpop.f32.mrb[0].mxu0
        %2938 = vmatprep.mubr.f32.mxu0 %v2559
        %2939 = vmatmul.mubr.f32.gmra.mrb[0].mxu0 %v2423
        %v2940 = vpop.f32.mrb[0].mxu0
        %v2941 = vadd.f32 %v2607, %v2940
        %v2942 = vpop.f32.mrb[0].mxu0
        %2943 = vmatprep.mubr.f32.mxu0 %v2560
        %2944 = vmatmul.mubr.f32.gmra.mrb[0].mxu0 %v2424
        %v2945 = vpop.f32.mrb[0].mxu0
        %v2946 = vadd.f32 %v2607, %v2945
        %v2947 = vpop.f32.mrb[0].mxu0
        %2948 = vmatprep.mubr.f32.mxu0 %v2561
        %2949 = vmatmul.mubr.f32.gmra.mrb[0].mxu0 %v2425
        %v2950 = vpop.f32.mrb[0].mxu0
        %v2951 = vadd.f32 %v2607, %v2950
        %v2952 = vpop.f32.mrb[0].mxu0
        %2953 = vmatprep.mubr.f32.mxu0 %v2562
        %2954 = vmatmul.mubr.f32.gmra.mrb[0].mxu0 %v2426
        %v2955 = vpop.f32.mrb[0].mxu0
        %v2956 = vadd.f32 %v2607, %v2955
        %v2957 = vpop.f32.mrb[0].mxu0
        %2958 = vmatprep.mubr.f32.mxu0 %v2563
        %2959 = vmatmul.mubr.f32.gmra.mrb[0].mxu0 %v2427
        %v2960 = vpop.f32.mrb[0].mxu0
        %v2961 = vadd.f32 %v2607, %v2960
        %v2962 = vpop.f32.mrb[0].mxu0
        %2963 = vmatprep.mubr.f32.mxu0 %v2564
        %2964 = vmatmul.mubr.f32.gmra.mrb[0].mxu0 %v2428
        %v2965 = vpop.f32.mrb[0].mxu0
        %v2966 = vadd.f32 %v2607, %v2965
        %v2967 = vpop.f32.mrb[0].mxu0
        %2968 = vmatprep.mubr.f32.mxu0 %v2565
        %2969 = vmatmul.mubr.f32.gmra.mrb[0].mxu0 %v2429
        %v2970 = vpop.f32.mrb[0].mxu0
        %v2971 = vadd.f32 %v2607, %v2970
        %v2972 = vpop.f32.mrb[0].mxu0
        %2973 = vmatprep.mubr.f32.mxu0 %v2566
        %2974 = vmatmul.mubr.f32.gmra.mrb[0].mxu0 %v2430
        %v2975 = vpop.f32.mrb[0].mxu0
        %v2976 = vadd.f32 %v2607, %v2975
        %v2977 = vpop.f32.mrb[0].mxu0
        %2978 = vmatprep.mubr.f32.mxu0 %v2567
        %2979 = vmatmul.mubr.f32.gmra.mrb[0].mxu0 %v2431
        %v2980 = vpop.f32.mrb[0].mxu0
        %v2981 = vadd.f32 %v2607, %v2980
        %v2982 = vpop.f32.mrb[0].mxu0
        %2983 = vmatprep.mubr.f32.mxu0 %v2568
        %2984 = vmatmul.mubr.f32.gmra.mrb[0].mxu0 %v2432
        %v2985 = vpop.f32.mrb[0].mxu0
        %v2986 = vadd.f32 %v2607, %v2985
        %v2987 = vpop.f32.mrb[0].mxu0
        %2988 = vmatprep.mubr.f32.mxu0 %v2569
        %2989 = vmatmul.mubr.f32.gmra.mrb[0].mxu0 %v2433
        %v2990 = vpop.f32.mrb[0].mxu0
        %v2991 = vadd.f32 %v2607, %v2990
        %v2992 = vpop.f32.mrb[0].mxu0
        %2993 = vdwg.mxu0
        %v2994 = vmax.f32 %v2676, 0.0
        %v2995 = vmax.f32 %v2681, 0.0
        %v2996 = vmax.f32 %v2686, 0.0
        %v2997 = vmax.f32 %v2691, 0.0
        %v2998 = vmax.f32 %v2696, 0.0
        %v2999 = vmax.f32 %v2701, 0.0
        %v3000 = vmax.f32 %v2706, 0.0
        %v3001 = vmax.f32 %v2711, 0.0
        %v3002 = vmax.f32 %v2716, 0.0
        %v3003 = vmax.f32 %v2721, 0.0
        %v3004 = vmax.f32 %v2726, 0.0
        %v3005 = vmax.f32 %v2731, 0.0
        %v3006 = vmax.f32 %v2736, 0.0
        %v3007 = vmax.f32 %v2741, 0.0
        %v3008 = vmax.f32 %v2746, 0.0
        %v3009 = vmax.f32 %v2751, 0.0
        %v3010 = vmax.f32 %v2756, 0.0
        %v3011 = vmax.f32 %v2761, 0.0
        %v3012 = vmax.f32 %v2766, 0.0
        %v3013 = vmax.f32 %v2771, 0.0
        %v3014 = vmax.f32 %v2776, 0.0
        %v3015 = vmax.f32 %v2781, 0.0
        %v3016 = vmax.f32 %v2786, 0.0
        %v3017 = vmax.f32 %v2791, 0.0
        %v3018 = vmax.f32 %v2796, 0.0
        %v3019 = vmax.f32 %v2801, 0.0
        %v3020 = vmax.f32 %v2806, 0.0
        %v3021 = vmax.f32 %v2811, 0.0
        %v3022 = vmax.f32 %v2816, 0.0
        %v3023 = vmax.f32 %v2821, 0.0
        %v3024 = vmax.f32 %v2826, 0.0
        %v3025 = vmax.f32 %v2831, 0.0
        %v3026 = vmax.f32 %v2836, 0.0
        %v3027 = vmax.f32 %v2841, 0.0
        %v3028 = vmax.f32 %v2846, 0.0
        %v3029 = vmax.f32 %v2851, 0.0
        %v3030 = vmax.f32 %v2856, 0.0
        %v3031 = vmax.f32 %v2861, 0.0
        %v3032 = vmax.f32 %v2866, 0.0
        %v3033 = vmax.f32 %v2871, 0.0
        %v3034 = vmax.f32 %v2876, 0.0
        %v3035 = vmax.f32 %v2881, 0.0
        %v3036 = vmax.f32 %v2886, 0.0
        %v3037 = vmax.f32 %v2891, 0.0
        %v3038 = vmax.f32 %v2896, 0.0
        %v3039 = vmax.f32 %v2901, 0.0
        %v3040 = vmax.f32 %v2906, 0.0
        %v3041 = vmax.f32 %v2911, 0.0
        %v3042 = vmax.f32 %v2916, 0.0
        %v3043 = vmax.f32 %v2921, 0.0
        %v3044 = vmax.f32 %v2926, 0.0
        %v3045 = vmax.f32 %v2931, 0.0
        %v3046 = vmax.f32 %v2936, 0.0
        %v3047 = vmax.f32 %v2941, 0.0
        %v3048 = vmax.f32 %v2946, 0.0
        %v3049 = vmax.f32 %v2951, 0.0
        %v3050 = vmax.f32 %v2956, 0.0
        %v3051 = vmax.f32 %v2961, 0.0
        %v3052 = vmax.f32 %v2966, 0.0
        %v3053 = vmax.f32 %v2971, 0.0
        %v3054 = vmax.f32 %v2976, 0.0
        %v3055 = vmax.f32 %v2981, 0.0
        %v3056 = vmax.f32 %v2986, 0.0
        %v3057 = vmax.f32 %v2991, 0.0
        %v3058 = vsel %vm422, %v2994, 0.0
        %v3059 = vsel %vm422, %v3002, 0.0
        %v3060 = vadd.f32 %v3058, %v3059
        %v3061 = vsel %vm422, %v3010, 0.0
        %v3062 = vadd.f32 %v3060, %v3061
        %v3063 = vsel %vm422, %v3018, 0.0
        %v3064 = vadd.f32 %v3062, %v3063
        %v3065 = vsel %vm422, %v3026, 0.0
        %v3066 = vadd.f32 %v3064, %v3065
        %v3067 = vsel %vm422, %v3034, 0.0
        %v3068 = vadd.f32 %v3066, %v3067
        %v3069 = vsel %vm422, %v3042, 0.0
        %v3070 = vadd.f32 %v3068, %v3069
        %v3071 = vsel %vm422, %v3050, 0.0
        %v3072 = vadd.f32 %v3070, %v3071
        %v3073 = vsel %vm422, %v2995, 0.0
        %v3074 = vsel %vm422, %v3003, 0.0
        %v3075 = vadd.f32 %v3073, %v3074
        %v3076 = vsel %vm422, %v3011, 0.0
        %v3077 = vadd.f32 %v3075, %v3076
        %v3078 = vsel %vm422, %v3019, 0.0
        %v3079 = vadd.f32 %v3077, %v3078
        %v3080 = vsel %vm422, %v3027, 0.0
        %v3081 = vadd.f32 %v3079, %v3080
        %v3082 = vsel %vm422, %v3035, 0.0
        %v3083 = vadd.f32 %v3081, %v3082
        %v3084 = vsel %vm422, %v3043, 0.0
        %v3085 = vadd.f32 %v3083, %v3084
        %v3086 = vsel %vm422, %v3051, 0.0
        %v3087 = vadd.f32 %v3085, %v3086
        %v3088 = vsel %vm422, %v2996, 0.0
        %v3089 = vsel %vm422, %v3004, 0.0
        %v3090 = vadd.f32 %v3088, %v3089
        %v3091 = vsel %vm422, %v3012, 0.0
        %v3092 = vadd.f32 %v3090, %v3091
        %v3093 = vsel %vm422, %v3020, 0.0
        %v3094 = vadd.f32 %v3092, %v3093
        %v3095 = vsel %vm422, %v3028, 0.0
        %v3096 = vadd.f32 %v3094, %v3095
        %v3097 = vsel %vm422, %v3036, 0.0
        %v3098 = vadd.f32 %v3096, %v3097
        %v3099 = vsel %vm422, %v3044, 0.0
        %v3100 = vadd.f32 %v3098, %v3099
        %v3101 = vsel %vm422, %v3052, 0.0
        %v3102 = vadd.f32 %v3100, %v3101
        %v3103 = vsel %vm422, %v2997, 0.0
        %v3104 = vsel %vm422, %v3005, 0.0
        %v3105 = vadd.f32 %v3103, %v3104
        %v3106 = vsel %vm422, %v3013, 0.0
        %v3107 = vadd.f32 %v3105, %v3106
        %v3108 = vsel %vm422, %v3021, 0.0
        %v3109 = vadd.f32 %v3107, %v3108
        %v3110 = vsel %vm422, %v3029, 0.0
        %v3111 = vadd.f32 %v3109, %v3110
        %v3112 = vsel %vm422, %v3037, 0.0
        %v3113 = vadd.f32 %v3111, %v3112
        %v3114 = vsel %vm422, %v3045, 0.0
        %v3115 = vadd.f32 %v3113, %v3114
        %v3116 = vsel %vm422, %v3053, 0.0
        %v3117 = vadd.f32 %v3115, %v3116
        %v3118 = vsel %vm422, %v2998, 0.0
        %v3119 = vsel %vm422, %v3006, 0.0
        %v3120 = vadd.f32 %v3118, %v3119
        %v3121 = vsel %vm422, %v3014, 0.0
        %v3122 = vadd.f32 %v3120, %v3121
        %v3123 = vsel %vm422, %v3022, 0.0
        %v3124 = vadd.f32 %v3122, %v3123
        %v3125 = vsel %vm422, %v3030, 0.0
        %v3126 = vadd.f32 %v3124, %v3125
        %v3127 = vsel %vm422, %v3038, 0.0
        %v3128 = vadd.f32 %v3126, %v3127
        %v3129 = vsel %vm422, %v3046, 0.0
        %v3130 = vadd.f32 %v3128, %v3129
        %v3131 = vsel %vm422, %v3054, 0.0
        %v3132 = vadd.f32 %v3130, %v3131
        %v3133 = vsel %vm422, %v2999, 0.0
        %v3134 = vsel %vm422, %v3007, 0.0
        %v3135 = vadd.f32 %v3133, %v3134
        %v3136 = vsel %vm422, %v3015, 0.0
        %v3137 = vadd.f32 %v3135, %v3136
        %v3138 = vsel %vm422, %v3023, 0.0
        %v3139 = vadd.f32 %v3137, %v3138
        %v3140 = vsel %vm422, %v3031, 0.0
        %v3141 = vadd.f32 %v3139, %v3140
        %v3142 = vsel %vm422, %v3039, 0.0
        %v3143 = vadd.f32 %v3141, %v3142
        %v3144 = vsel %vm422, %v3047, 0.0
        %v3145 = vadd.f32 %v3143, %v3144
        %v3146 = vsel %vm422, %v3055, 0.0
        %v3147 = vadd.f32 %v3145, %v3146
        %v3148 = vsel %vm422, %v3000, 0.0
        %v3149 = vsel %vm422, %v3008, 0.0
        %v3150 = vadd.f32 %v3148, %v3149
        %v3151 = vsel %vm422, %v3016, 0.0
        %v3152 = vadd.f32 %v3150, %v3151
        %v3153 = vsel %vm422, %v3024, 0.0
        %v3154 = vadd.f32 %v3152, %v3153
        %v3155 = vsel %vm422, %v3032, 0.0
        %v3156 = vadd.f32 %v3154, %v3155
        %v3157 = vsel %vm422, %v3040, 0.0
        %v3158 = vadd.f32 %v3156, %v3157
        %v3159 = vsel %vm422, %v3048, 0.0
        %v3160 = vadd.f32 %v3158, %v3159
        %v3161 = vsel %vm422, %v3056, 0.0
        %v3162 = vadd.f32 %v3160, %v3161
        %v3163 = vsel %vm422, %v3001, 0.0
        %v3164 = vsel %vm422, %v3009, 0.0
        %v3165 = vadd.f32 %v3163, %v3164
        %v3166 = vsel %vm422, %v3017, 0.0
        %v3167 = vadd.f32 %v3165, %v3166
        %v3168 = vsel %vm422, %v3025, 0.0
        %v3169 = vadd.f32 %v3167, %v3168
        %v3170 = vsel %vm422, %v3033, 0.0
        %v3171 = vadd.f32 %v3169, %v3170
        %v3172 = vsel %vm422, %v3041, 0.0
        %v3173 = vadd.f32 %v3171, %v3172
        %v3174 = vsel %vm422, %v3049, 0.0
        %v3175 = vadd.f32 %v3173, %v3174
        %v3176 = vsel %vm422, %v3057, 0.0
        %v3177 = vadd.f32 %v3175, %v3176
        %v3178 = vmul.f32 %v3072, %v1187
        %v3179 = vmul.f32 %v3087, %v1187
        %v3180 = vmul.f32 %v3102, %v1187
        %v3181 = vmul.f32 %v3117, %v1187
        %v3182 = vmul.f32 %v3132, %v1187
        %v3183 = vmul.f32 %v3147, %v1187
        %v3184 = vmul.f32 %v3162, %v1187
        %v3185 = vmul.f32 %v3177, %v1187
        %v3186 = vadd.f32 %v3058, %v3073
        %v3187 = vadd.f32 %v3186, %v3088
        %v3188 = vadd.f32 %v3187, %v3103
        %v3189 = vadd.f32 %v3188, %v3118
        %v3190 = vadd.f32 %v3189, %v3133
        %v3191 = vadd.f32 %v3190, %v3148
        %v3192 = vadd.f32 %v3191, %v3163
        %v3193 = vadd.f32 %v3059, %v3074
        %v3194 = vadd.f32 %v3193, %v3089
        %v3195 = vadd.f32 %v3194, %v3104
        %v3196 = vadd.f32 %v3195, %v3119
        %v3197 = vadd.f32 %v3196, %v3134
        %v3198 = vadd.f32 %v3197, %v3149
        %v3199 = vadd.f32 %v3198, %v3164
        %v3200 = vadd.f32 %v3061, %v3076
        %v3201 = vadd.f32 %v3200, %v3091
        %v3202 = vadd.f32 %v3201, %v3106
        %v3203 = vadd.f32 %v3202, %v3121
        %v3204 = vadd.f32 %v3203, %v3136
        %v3205 = vadd.f32 %v3204, %v3151
        %v3206 = vadd.f32 %v3205, %v3166
        %v3207 = vadd.f32 %v3063, %v3078
        %v3208 = vadd.f32 %v3207, %v3093
        %v3209 = vadd.f32 %v3208, %v3108
        %v3210 = vadd.f32 %v3209, %v3123
        %v3211 = vadd.f32 %v3210, %v3138
        %v3212 = vadd.f32 %v3211, %v3153
        %v3213 = vadd.f32 %v3212, %v3168
        %v3214 = vadd.f32 %v3065, %v3080
        %v3215 = vadd.f32 %v3214, %v3095
        %v3216 = vadd.f32 %v3215, %v3110
        %v3217 = vadd.f32 %v3216, %v3125
        %v3218 = vadd.f32 %v3217, %v3140
        %v3219 = vadd.f32 %v3218, %v3155
        %v3220 = vadd.f32 %v3219, %v3170
        %v3221 = vadd.f32 %v3067, %v3082
        %v3222 = vadd.f32 %v3221, %v3097
        %v3223 = vadd.f32 %v3222, %v3112
        %v3224 = vadd.f32 %v3223, %v3127
        %v3225 = vadd.f32 %v3224, %v3142
        %v3226 = vadd.f32 %v3225, %v3157
        %v3227 = vadd.f32 %v3226, %v3172
        %v3228 = vadd.f32 %v3069, %v3084
        %v3229 = vadd.f32 %v3228, %v3099
        %v3230 = vadd.f32 %v3229, %v3114
        %v3231 = vadd.f32 %v3230, %v3129
        %v3232 = vadd.f32 %v3231, %v3144
        %v3233 = vadd.f32 %v3232, %v3159
        %v3234 = vadd.f32 %v3233, %v3174
        %v3235 = vadd.f32 %v3071, %v3086
        %v3236 = vadd.f32 %v3235, %v3101
        %v3237 = vadd.f32 %v3236, %v3116
        %v3238 = vadd.f32 %v3237, %v3131
        %v3239 = vadd.f32 %v3238, %v3146
        %v3240 = vadd.f32 %v3239, %v3161
        %v3241 = vadd.f32 %v3240, %v3176
        %v3242 = vmul.f32 %v3192, %v1187
        %v3243 = vmul.f32 %v3199, %v1187
        %v3244 = vmul.f32 %v3206, %v1187
        %v3245 = vmul.f32 %v3213, %v1187
        %v3246 = vmul.f32 %v3220, %v1187
        %v3247 = vmul.f32 %v3227, %v1187
        %v3248 = vmul.f32 %v3234, %v1187
        %v3249 = vmul.f32 %v3241, %v1187
        %v3250 = vrot.slane %v3058, 4
        %v3251 = vadd.f32 %v3058, %v3250
        %v3252 = vrot.slane %v3251, 2
        %v3253 = vadd.f32 %v3251, %v3252
        %v3254 = vrot.slane %v3253, 1
        %v3255 = vadd.f32 %v3253, %v3254
        %v3256 = vrot.slane %v3073, 4
        %v3257 = vadd.f32 %v3073, %v3256
        %v3258 = vrot.slane %v3257, 2
        %v3259 = vadd.f32 %v3257, %v3258
        %v3260 = vrot.slane %v3259, 1
        %v3261 = vadd.f32 %v3259, %v3260
        %v3262 = vrot.slane %v3088, 4
        %v3263 = vadd.f32 %v3088, %v3262
        %v3264 = vrot.slane %v3263, 2
        %v3265 = vadd.f32 %v3263, %v3264
        %v3266 = vrot.slane %v3265, 1
        %v3267 = vadd.f32 %v3265, %v3266
        %v3268 = vrot.slane %v3103, 4
        %v3269 = vadd.f32 %v3103, %v3268
        %v3270 = vrot.slane %v3269, 2
        %v3271 = vadd.f32 %v3269, %v3270
        %v3272 = vrot.slane %v3271, 1
        %v3273 = vadd.f32 %v3271, %v3272
        %v3274 = vrot.slane %v3118, 4
        %v3275 = vadd.f32 %v3118, %v3274
        %v3276 = vrot.slane %v3275, 2
        %v3277 = vadd.f32 %v3275, %v3276
        %v3278 = vrot.slane %v3277, 1
        %v3279 = vadd.f32 %v3277, %v3278
        %v3280 = vrot.slane %v3133, 4
        %v3281 = vadd.f32 %v3133, %v3280
        %v3282 = vrot.slane %v3281, 2
        %v3283 = vadd.f32 %v3281, %v3282
        %v3284 = vrot.slane %v3283, 1
        %v3285 = vadd.f32 %v3283, %v3284
        %v3286 = vrot.slane %v3148, 4
        %v3287 = vadd.f32 %v3148, %v3286
        %v3288 = vrot.slane %v3287, 2
        %v3289 = vadd.f32 %v3287, %v3288
        %v3290 = vrot.slane %v3289, 1
        %v3291 = vadd.f32 %v3289, %v3290
        %v3292 = vrot.slane %v3163, 4
        %v3293 = vadd.f32 %v3163, %v3292
        %v3294 = vrot.slane %v3293, 2
        %v3295 = vadd.f32 %v3293, %v3294
        %v3296 = vrot.slane %v3295, 1
        %v3297 = vadd.f32 %v3295, %v3296
        %v3298 = vrot.slane %v3059, 4
        %v3299 = vadd.f32 %v3059, %v3298
        %v3300 = vrot.slane %v3299, 2
        %v3301 = vadd.f32 %v3299, %v3300
        %v3302 = vrot.slane %v3301, 1
        %v3303 = vadd.f32 %v3301, %v3302
        %v3304 = vrot.slane %v3074, 4
        %v3305 = vadd.f32 %v3074, %v3304
        %v3306 = vrot.slane %v3305, 2
        %v3307 = vadd.f32 %v3305, %v3306
        %v3308 = vrot.slane %v3307, 1
        %v3309 = vadd.f32 %v3307, %v3308
        %v3310 = vrot.slane %v3089, 4
        %v3311 = vadd.f32 %v3089, %v3310
        %v3312 = vrot.slane %v3311, 2
        %v3313 = vadd.f32 %v3311, %v3312
        %v3314 = vrot.slane %v3313, 1
        %v3315 = vadd.f32 %v3313, %v3314
        %v3316 = vrot.slane %v3104, 4
        %v3317 = vadd.f32 %v3104, %v3316
        %v3318 = vrot.slane %v3317, 2
        %v3319 = vadd.f32 %v3317, %v3318
        %v3320 = vrot.slane %v3319, 1
        %v3321 = vadd.f32 %v3319, %v3320
        %v3322 = vrot.slane %v3119, 4
        %v3323 = vadd.f32 %v3119, %v3322
        %v3324 = vrot.slane %v3323, 2
        %v3325 = vadd.f32 %v3323, %v3324
        %v3326 = vrot.slane %v3325, 1
        %v3327 = vadd.f32 %v3325, %v3326
        %v3328 = vrot.slane %v3134, 4
        %v3329 = vadd.f32 %v3134, %v3328
        %v3330 = vrot.slane %v3329, 2
        %v3331 = vadd.f32 %v3329, %v3330
        %v3332 = vrot.slane %v3331, 1
        %v3333 = vadd.f32 %v3331, %v3332
        %v3334 = vrot.slane %v3149, 4
        %v3335 = vadd.f32 %v3149, %v3334
        %v3336 = vrot.slane %v3335, 2
        %v3337 = vadd.f32 %v3335, %v3336
        %v3338 = vrot.slane %v3337, 1
        %v3339 = vadd.f32 %v3337, %v3338
        %v3340 = vrot.slane %v3164, 4
        %v3341 = vadd.f32 %v3164, %v3340
        %v3342 = vrot.slane %v3341, 2
        %v3343 = vadd.f32 %v3341, %v3342
        %v3344 = vrot.slane %v3343, 1
        %v3345 = vadd.f32 %v3343, %v3344
        %v3346 = vrot.slane %v3061, 4
        %v3347 = vadd.f32 %v3061, %v3346
        %v3348 = vrot.slane %v3347, 2
        %v3349 = vadd.f32 %v3347, %v3348
        %v3350 = vrot.slane %v3349, 1
        %v3351 = vadd.f32 %v3349, %v3350
        %v3352 = vrot.slane %v3076, 4
        %v3353 = vadd.f32 %v3076, %v3352
        %v3354 = vrot.slane %v3353, 2
        %v3355 = vadd.f32 %v3353, %v3354
        %v3356 = vrot.slane %v3355, 1
        %v3357 = vadd.f32 %v3355, %v3356
        %v3358 = vrot.slane %v3091, 4
        %v3359 = vadd.f32 %v3091, %v3358
        %v3360 = vrot.slane %v3359, 2
        %v3361 = vadd.f32 %v3359, %v3360
        %v3362 = vrot.slane %v3361, 1
        %v3363 = vadd.f32 %v3361, %v3362
        %v3364 = vrot.slane %v3106, 4
        %v3365 = vadd.f32 %v3106, %v3364
        %v3366 = vrot.slane %v3365, 2
        %v3367 = vadd.f32 %v3365, %v3366
        %v3368 = vrot.slane %v3367, 1
        %v3369 = vadd.f32 %v3367, %v3368
        %v3370 = vrot.slane %v3121, 4
        %v3371 = vadd.f32 %v3121, %v3370
        %v3372 = vrot.slane %v3371, 2
        %v3373 = vadd.f32 %v3371, %v3372
        %v3374 = vrot.slane %v3373, 1
        %v3375 = vadd.f32 %v3373, %v3374
        %v3376 = vrot.slane %v3136, 4
        %v3377 = vadd.f32 %v3136, %v3376
        %v3378 = vrot.slane %v3377, 2
        %v3379 = vadd.f32 %v3377, %v3378
        %v3380 = vrot.slane %v3379, 1
        %v3381 = vadd.f32 %v3379, %v3380
        %v3382 = vrot.slane %v3151, 4
        %v3383 = vadd.f32 %v3151, %v3382
        %v3384 = vrot.slane %v3383, 2
        %v3385 = vadd.f32 %v3383, %v3384
        %v3386 = vrot.slane %v3385, 1
        %v3387 = vadd.f32 %v3385, %v3386
        %v3388 = vrot.slane %v3166, 4
        %v3389 = vadd.f32 %v3166, %v3388
        %v3390 = vrot.slane %v3389, 2
        %v3391 = vadd.f32 %v3389, %v3390
        %v3392 = vrot.slane %v3391, 1
        %v3393 = vadd.f32 %v3391, %v3392
        %v3394 = vrot.slane %v3063, 4
        %v3395 = vadd.f32 %v3063, %v3394
        %v3396 = vrot.slane %v3395, 2
        %v3397 = vadd.f32 %v3395, %v3396
        %v3398 = vrot.slane %v3397, 1
        %v3399 = vadd.f32 %v3397, %v3398
        %v3400 = vrot.slane %v3078, 4
        %v3401 = vadd.f32 %v3078, %v3400
        %v3402 = vrot.slane %v3401, 2
        %v3403 = vadd.f32 %v3401, %v3402
        %v3404 = vrot.slane %v3403, 1
        %v3405 = vadd.f32 %v3403, %v3404
        %v3406 = vrot.slane %v3093, 4
        %v3407 = vadd.f32 %v3093, %v3406
        %v3408 = vrot.slane %v3407, 2
        %v3409 = vadd.f32 %v3407, %v3408
        %v3410 = vrot.slane %v3409, 1
        %v3411 = vadd.f32 %v3409, %v3410
        %v3412 = vrot.slane %v3108, 4
        %v3413 = vadd.f32 %v3108, %v3412
        %v3414 = vrot.slane %v3413, 2
        %v3415 = vadd.f32 %v3413, %v3414
        %v3416 = vrot.slane %v3415, 1
        %v3417 = vadd.f32 %v3415, %v3416
        %v3418 = vrot.slane %v3123, 4
        %v3419 = vadd.f32 %v3123, %v3418
        %v3420 = vrot.slane %v3419, 2
        %v3421 = vadd.f32 %v3419, %v3420
        %v3422 = vrot.slane %v3421, 1
        %v3423 = vadd.f32 %v3421, %v3422
        %v3424 = vrot.slane %v3138, 4
        %v3425 = vadd.f32 %v3138, %v3424
        %v3426 = vrot.slane %v3425, 2
        %v3427 = vadd.f32 %v3425, %v3426
        %v3428 = vrot.slane %v3427, 1
        %v3429 = vadd.f32 %v3427, %v3428
        %v3430 = vrot.slane %v3153, 4
        %v3431 = vadd.f32 %v3153, %v3430
        %v3432 = vrot.slane %v3431, 2
        %v3433 = vadd.f32 %v3431, %v3432
        %v3434 = vrot.slane %v3433, 1
        %v3435 = vadd.f32 %v3433, %v3434
        %v3436 = vrot.slane %v3168, 4
        %v3437 = vadd.f32 %v3168, %v3436
        %v3438 = vrot.slane %v3437, 2
        %v3439 = vadd.f32 %v3437, %v3438
        %v3440 = vrot.slane %v3439, 1
        %v3441 = vadd.f32 %v3439, %v3440
        %v3442 = vrot.slane %v3065, 4
        %v3443 = vadd.f32 %v3065, %v3442
        %v3444 = vrot.slane %v3443, 2
        %v3445 = vadd.f32 %v3443, %v3444
        %v3446 = vrot.slane %v3445, 1
        %v3447 = vadd.f32 %v3445, %v3446
        %v3448 = vrot.slane %v3080, 4
        %v3449 = vadd.f32 %v3080, %v3448
        %v3450 = vrot.slane %v3449, 2
        %v3451 = vadd.f32 %v3449, %v3450
        %v3452 = vrot.slane %v3451, 1
        %v3453 = vadd.f32 %v3451, %v3452
        %v3454 = vrot.slane %v3095, 4
        %v3455 = vadd.f32 %v3095, %v3454
        %v3456 = vrot.slane %v3455, 2
        %v3457 = vadd.f32 %v3455, %v3456
        %v3458 = vrot.slane %v3457, 1
        %v3459 = vadd.f32 %v3457, %v3458
        %v3460 = vrot.slane %v3110, 4
        %v3461 = vadd.f32 %v3110, %v3460
        %v3462 = vrot.slane %v3461, 2
        %v3463 = vadd.f32 %v3461, %v3462
        %v3464 = vrot.slane %v3463, 1
        %v3465 = vadd.f32 %v3463, %v3464
        %v3466 = vrot.slane %v3125, 4
        %v3467 = vadd.f32 %v3125, %v3466
        %v3468 = vrot.slane %v3467, 2
        %v3469 = vadd.f32 %v3467, %v3468
        %v3470 = vrot.slane %v3469, 1
        %v3471 = vadd.f32 %v3469, %v3470
        %v3472 = vrot.slane %v3140, 4
        %v3473 = vadd.f32 %v3140, %v3472
        %v3474 = vrot.slane %v3473, 2
        %v3475 = vadd.f32 %v3473, %v3474
        %v3476 = vrot.slane %v3475, 1
        %v3477 = vadd.f32 %v3475, %v3476
        %v3478 = vrot.slane %v3155, 4
        %v3479 = vadd.f32 %v3155, %v3478
        %v3480 = vrot.slane %v3479, 2
        %v3481 = vadd.f32 %v3479, %v3480
        %v3482 = vrot.slane %v3481, 1
        %v3483 = vadd.f32 %v3481, %v3482
        %v3484 = vrot.slane %v3170, 4
        %v3485 = vadd.f32 %v3170, %v3484
        %v3486 = vrot.slane %v3485, 2
        %v3487 = vadd.f32 %v3485, %v3486
        %v3488 = vrot.slane %v3487, 1
        %v3489 = vadd.f32 %v3487, %v3488
        %v3490 = vrot.slane %v3067, 4
        %v3491 = vadd.f32 %v3067, %v3490
        %v3492 = vrot.slane %v3491, 2
        %v3493 = vadd.f32 %v3491, %v3492
        %v3494 = vrot.slane %v3493, 1
        %v3495 = vadd.f32 %v3493, %v3494
        %v3496 = vrot.slane %v3082, 4
        %v3497 = vadd.f32 %v3082, %v3496
        %v3498 = vrot.slane %v3497, 2
        %v3499 = vadd.f32 %v3497, %v3498
        %v3500 = vrot.slane %v3499, 1
        %v3501 = vadd.f32 %v3499, %v3500
        %v3502 = vrot.slane %v3097, 4
        %v3503 = vadd.f32 %v3097, %v3502
        %v3504 = vrot.slane %v3503, 2
        %v3505 = vadd.f32 %v3503, %v3504
        %v3506 = vrot.slane %v3505, 1
        %v3507 = vadd.f32 %v3505, %v3506
        %v3508 = vrot.slane %v3112, 4
        %v3509 = vadd.f32 %v3112, %v3508
        %v3510 = vrot.slane %v3509, 2
        %v3511 = vadd.f32 %v3509, %v3510
        %v3512 = vrot.slane %v3511, 1
        %v3513 = vadd.f32 %v3511, %v3512
        %v3514 = vrot.slane %v3127, 4
        %v3515 = vadd.f32 %v3127, %v3514
        %v3516 = vrot.slane %v3515, 2
        %v3517 = vadd.f32 %v3515, %v3516
        %v3518 = vrot.slane %v3517, 1
        %v3519 = vadd.f32 %v3517, %v3518
        %v3520 = vrot.slane %v3142, 4
        %v3521 = vadd.f32 %v3142, %v3520
        %v3522 = vrot.slane %v3521, 2
        %v3523 = vadd.f32 %v3521, %v3522
        %v3524 = vrot.slane %v3523, 1
        %v3525 = vadd.f32 %v3523, %v3524
        %v3526 = vrot.slane %v3157, 4
        %v3527 = vadd.f32 %v3157, %v3526
        %v3528 = vrot.slane %v3527, 2
        %v3529 = vadd.f32 %v3527, %v3528
        %v3530 = vrot.slane %v3529, 1
        %v3531 = vadd.f32 %v3529, %v3530
        %v3532 = vrot.slane %v3172, 4
        %v3533 = vadd.f32 %v3172, %v3532
        %v3534 = vrot.slane %v3533, 2
        %v3535 = vadd.f32 %v3533, %v3534
        %v3536 = vrot.slane %v3535, 1
        %v3537 = vadd.f32 %v3535, %v3536
        %v3538 = vrot.slane %v3069, 4
        %v3539 = vadd.f32 %v3069, %v3538
        %v3540 = vrot.slane %v3539, 2
        %v3541 = vadd.f32 %v3539, %v3540
        %v3542 = vrot.slane %v3541, 1
        %v3543 = vadd.f32 %v3541, %v3542
        %v3544 = vrot.slane %v3084, 4
        %v3545 = vadd.f32 %v3084, %v3544
        %v3546 = vrot.slane %v3545, 2
        %v3547 = vadd.f32 %v3545, %v3546
        %v3548 = vrot.slane %v3547, 1
        %v3549 = vadd.f32 %v3547, %v3548
        %v3550 = vrot.slane %v3099, 4
        %v3551 = vadd.f32 %v3099, %v3550
        %v3552 = vrot.slane %v3551, 2
        %v3553 = vadd.f32 %v3551, %v3552
        %v3554 = vrot.slane %v3553, 1
        %v3555 = vadd.f32 %v3553, %v3554
        %v3556 = vrot.slane %v3114, 4
        %v3557 = vadd.f32 %v3114, %v3556
        %v3558 = vrot.slane %v3557, 2
        %v3559 = vadd.f32 %v3557, %v3558
        %v3560 = vrot.slane %v3559, 1
        %v3561 = vadd.f32 %v3559, %v3560
        %v3562 = vrot.slane %v3129, 4
        %v3563 = vadd.f32 %v3129, %v3562
        %v3564 = vrot.slane %v3563, 2
        %v3565 = vadd.f32 %v3563, %v3564
        %v3566 = vrot.slane %v3565, 1
        %v3567 = vadd.f32 %v3565, %v3566
        %v3568 = vrot.slane %v3144, 4
        %v3569 = vadd.f32 %v3144, %v3568
        %v3570 = vrot.slane %v3569, 2
        %v3571 = vadd.f32 %v3569, %v3570
        %v3572 = vrot.slane %v3571, 1
        %v3573 = vadd.f32 %v3571, %v3572
        %v3574 = vrot.slane %v3159, 4
        %v3575 = vadd.f32 %v3159, %v3574
        %v3576 = vrot.slane %v3575, 2
        %v3577 = vadd.f32 %v3575, %v3576
        %v3578 = vrot.slane %v3577, 1
        %v3579 = vadd.f32 %v3577, %v3578
        %v3580 = vrot.slane %v3174, 4
        %v3581 = vadd.f32 %v3174, %v3580
        %v3582 = vrot.slane %v3581, 2
        %v3583 = vadd.f32 %v3581, %v3582
        %v3584 = vrot.slane %v3583, 1
        %v3585 = vadd.f32 %v3583, %v3584
        %v3586 = vrot.slane %v3071, 4
        %v3587 = vadd.f32 %v3071, %v3586
        %v3588 = vrot.slane %v3587, 2
        %v3589 = vadd.f32 %v3587, %v3588
        %v3590 = vrot.slane %v3589, 1
        %v3591 = vadd.f32 %v3589, %v3590
        %v3592 = vrot.slane %v3086, 4
        %v3593 = vadd.f32 %v3086, %v3592
        %v3594 = vrot.slane %v3593, 2
        %v3595 = vadd.f32 %v3593, %v3594
        %v3596 = vrot.slane %v3595, 1
        %v3597 = vadd.f32 %v3595, %v3596
        %v3598 = vrot.slane %v3101, 4
        %v3599 = vadd.f32 %v3101, %v3598
        %v3600 = vrot.slane %v3599, 2
        %v3601 = vadd.f32 %v3599, %v3600
        %v3602 = vrot.slane %v3601, 1
        %v3603 = vadd.f32 %v3601, %v3602
        %v3604 = vrot.slane %v3116, 4
        %v3605 = vadd.f32 %v3116, %v3604
        %v3606 = vrot.slane %v3605, 2
        %v3607 = vadd.f32 %v3605, %v3606
        %v3608 = vrot.slane %v3607, 1
        %v3609 = vadd.f32 %v3607, %v3608
        %v3610 = vrot.slane %v3131, 4
        %v3611 = vadd.f32 %v3131, %v3610
        %v3612 = vrot.slane %v3611, 2
        %v3613 = vadd.f32 %v3611, %v3612
        %v3614 = vrot.slane %v3613, 1
        %v3615 = vadd.f32 %v3613, %v3614
        %v3616 = vrot.slane %v3146, 4
        %v3617 = vadd.f32 %v3146, %v3616
        %v3618 = vrot.slane %v3617, 2
        %v3619 = vadd.f32 %v3617, %v3618
        %v3620 = vrot.slane %v3619, 1
        %v3621 = vadd.f32 %v3619, %v3620
        %v3622 = vrot.slane %v3161, 4
        %v3623 = vadd.f32 %v3161, %v3622
        %v3624 = vrot.slane %v3623, 2
        %v3625 = vadd.f32 %v3623, %v3624
        %v3626 = vrot.slane %v3625, 1
        %v3627 = vadd.f32 %v3625, %v3626
        %v3628 = vrot.slane %v3176, 4
        %v3629 = vadd.f32 %v3176, %v3628
        %v3630 = vrot.slane %v3629, 2
        %v3631 = vadd.f32 %v3629, %v3630
        %v3632 = vrot.slane %v3631, 1
        %v3633 = vadd.f32 %v3631, %v3632
        %v3634 = vmul.f32 %v3255, %v1187
        %v3635 = vmul.f32 %v3261, %v1187
        %v3636 = vmul.f32 %v3267, %v1187
        %v3637 = vmul.f32 %v3273, %v1187
        %v3638 = vmul.f32 %v3279, %v1187
        %v3639 = vmul.f32 %v3285, %v1187
        %v3640 = vmul.f32 %v3291, %v1187
        %v3641 = vmul.f32 %v3297, %v1187
        %v3642 = vmul.f32 %v3303, %v1187
        %v3643 = vmul.f32 %v3309, %v1187
        %v3644 = vmul.f32 %v3315, %v1187
        %v3645 = vmul.f32 %v3321, %v1187
        %v3646 = vmul.f32 %v3327, %v1187
        %v3647 = vmul.f32 %v3333, %v1187
        %v3648 = vmul.f32 %v3339, %v1187
        %v3649 = vmul.f32 %v3345, %v1187
        %v3650 = vmul.f32 %v3351, %v1187
        %v3651 = vmul.f32 %v3357, %v1187
        %v3652 = vmul.f32 %v3363, %v1187
        %v3653 = vmul.f32 %v3369, %v1187
        %v3654 = vmul.f32 %v3375, %v1187
        %v3655 = vmul.f32 %v3381, %v1187
        %v3656 = vmul.f32 %v3387, %v1187
        %v3657 = vmul.f32 %v3393, %v1187
        %v3658 = vmul.f32 %v3399, %v1187
        %v3659 = vmul.f32 %v3405, %v1187
        %v3660 = vmul.f32 %v3411, %v1187
        %v3661 = vmul.f32 %v3417, %v1187
        %v3662 = vmul.f32 %v3423, %v1187
        %v3663 = vmul.f32 %v3429, %v1187
        %v3664 = vmul.f32 %v3435, %v1187
        %v3665 = vmul.f32 %v3441, %v1187
        %v3666 = vmul.f32 %v3447, %v1187
        %v3667 = vmul.f32 %v3453, %v1187
        %v3668 = vmul.f32 %v3459, %v1187
        %v3669 = vmul.f32 %v3465, %v1187
        %v3670 = vmul.f32 %v3471, %v1187
        %v3671 = vmul.f32 %v3477, %v1187
        %v3672 = vmul.f32 %v3483, %v1187
        %v3673 = vmul.f32 %v3489, %v1187
        %v3674 = vmul.f32 %v3495, %v1187
        %v3675 = vmul.f32 %v3501, %v1187
        %v3676 = vmul.f32 %v3507, %v1187
        %v3677 = vmul.f32 %v3513, %v1187
        %v3678 = vmul.f32 %v3519, %v1187
        %v3679 = vmul.f32 %v3525, %v1187
        %v3680 = vmul.f32 %v3531, %v1187
        %v3681 = vmul.f32 %v3537, %v1187
        %v3682 = vmul.f32 %v3543, %v1187
        %v3683 = vmul.f32 %v3549, %v1187
        %v3684 = vmul.f32 %v3555, %v1187
        %v3685 = vmul.f32 %v3561, %v1187
        %v3686 = vmul.f32 %v3567, %v1187
        %v3687 = vmul.f32 %v3573, %v1187
        %v3688 = vmul.f32 %v3579, %v1187
        %v3689 = vmul.f32 %v3585, %v1187
        %v3690 = vmul.f32 %v3591, %v1187
        %v3691 = vmul.f32 %v3597, %v1187
        %v3692 = vmul.f32 %v3603, %v1187
        %v3693 = vmul.f32 %v3609, %v1187
        %v3694 = vmul.f32 %v3615, %v1187
        %v3695 = vmul.f32 %v3621, %v1187
        %v3696 = vmul.f32 %v3627, %v1187
        %v3697 = vmul.f32 %v3633, %v1187
        %v3698 = vsel %vm422, %v3178, 0.0
        %v3699 = vsel %vm422, %v3179, 0.0
        %v3700 = vadd.f32 %v3698, %v3699
        %v3701 = vsel %vm422, %v3180, 0.0
        %v3702 = vadd.f32 %v3700, %v3701
        %v3703 = vsel %vm422, %v3181, 0.0
        %v3704 = vadd.f32 %v3702, %v3703
        %v3705 = vsel %vm422, %v3182, 0.0
        %v3706 = vadd.f32 %v3704, %v3705
        %v3707 = vsel %vm422, %v3183, 0.0
        %v3708 = vadd.f32 %v3706, %v3707
        %v3709 = vsel %vm422, %v3184, 0.0
        %v3710 = vadd.f32 %v3708, %v3709
        %v3711 = vsel %vm422, %v3185, 0.0
        %v3712 = vadd.f32 %v3710, %v3711
        %v3713 = vmul.f32 %v3712, %v1187
        %v3714 = vrot.slane %v3698, 4
        %v3715 = vadd.f32 %v3698, %v3714
        %v3716 = vrot.slane %v3715, 2
        %v3717 = vadd.f32 %v3715, %v3716
        %v3718 = vrot.slane %v3717, 1
        %v3719 = vadd.f32 %v3717, %v3718
        %v3720 = vrot.slane %v3699, 4
        %v3721 = vadd.f32 %v3699, %v3720
        %v3722 = vrot.slane %v3721, 2
        %v3723 = vadd.f32 %v3721, %v3722
        %v3724 = vrot.slane %v3723, 1
        %v3725 = vadd.f32 %v3723, %v3724
        %v3726 = vrot.slane %v3701, 4
        %v3727 = vadd.f32 %v3701, %v3726
        %v3728 = vrot.slane %v3727, 2
        %v3729 = vadd.f32 %v3727, %v3728
        %v3730 = vrot.slane %v3729, 1
        %v3731 = vadd.f32 %v3729, %v3730
        %v3732 = vrot.slane %v3703, 4
        %v3733 = vadd.f32 %v3703, %v3732
        %v3734 = vrot.slane %v3733, 2
        %v3735 = vadd.f32 %v3733, %v3734
        %v3736 = vrot.slane %v3735, 1
        %v3737 = vadd.f32 %v3735, %v3736
        %v3738 = vrot.slane %v3705, 4
        %v3739 = vadd.f32 %v3705, %v3738
        %v3740 = vrot.slane %v3739, 2
        %v3741 = vadd.f32 %v3739, %v3740
        %v3742 = vrot.slane %v3741, 1
        %v3743 = vadd.f32 %v3741, %v3742
        %v3744 = vrot.slane %v3707, 4
        %v3745 = vadd.f32 %v3707, %v3744
        %v3746 = vrot.slane %v3745, 2
        %v3747 = vadd.f32 %v3745, %v3746
        %v3748 = vrot.slane %v3747, 1
        %v3749 = vadd.f32 %v3747, %v3748
        %v3750 = vrot.slane %v3709, 4
        %v3751 = vadd.f32 %v3709, %v3750
        %v3752 = vrot.slane %v3751, 2
        %v3753 = vadd.f32 %v3751, %v3752
        %v3754 = vrot.slane %v3753, 1
        %v3755 = vadd.f32 %v3753, %v3754
        %v3756 = vrot.slane %v3711, 4
        %v3757 = vadd.f32 %v3711, %v3756
        %v3758 = vrot.slane %v3757, 2
        %v3759 = vadd.f32 %v3757, %v3758
        %v3760 = vrot.slane %v3759, 1
        %v3761 = vadd.f32 %v3759, %v3760
        %v3762 = vmul.f32 %v3719, %v1187
        %v3763 = vmul.f32 %v3725, %v1187
        %v3764 = vmul.f32 %v3731, %v1187
        %v3765 = vmul.f32 %v3737, %v1187
        %v3766 = vmul.f32 %v3743, %v1187
        %v3767 = vmul.f32 %v3749, %v1187
        %v3768 = vmul.f32 %v3755, %v1187
        %v3769 = vmul.f32 %v3761, %v1187
        %v3770 = vsel %vm422, %v3242, 0.0
        %v3771 = vrot.slane %v3770, 4
        %v3772 = vadd.f32 %v3770, %v3771
        %v3773 = vrot.slane %v3772, 2
        %v3774 = vadd.f32 %v3772, %v3773
        %v3775 = vrot.slane %v3774, 1
        %v3776 = vadd.f32 %v3774, %v3775
        %v3777 = vsel %vm422, %v3243, 0.0
        %v3778 = vrot.slane %v3777, 4
        %v3779 = vadd.f32 %v3777, %v3778
        %v3780 = vrot.slane %v3779, 2
        %v3781 = vadd.f32 %v3779, %v3780
        %v3782 = vrot.slane %v3781, 1
        %v3783 = vadd.f32 %v3781, %v3782
        %v3784 = vsel %vm422, %v3244, 0.0
        %v3785 = vrot.slane %v3784, 4
        %v3786 = vadd.f32 %v3784, %v3785
        %v3787 = vrot.slane %v3786, 2
        %v3788 = vadd.f32 %v3786, %v3787
        %v3789 = vrot.slane %v3788, 1
        %v3790 = vadd.f32 %v3788, %v3789
        %v3791 = vsel %vm422, %v3245, 0.0
        %v3792 = vrot.slane %v3791, 4
        %v3793 = vadd.f32 %v3791, %v3792
        %v3794 = vrot.slane %v3793, 2
        %v3795 = vadd.f32 %v3793, %v3794
        %v3796 = vrot.slane %v3795, 1
        %v3797 = vadd.f32 %v3795, %v3796
        %v3798 = vsel %vm422, %v3246, 0.0
        %v3799 = vrot.slane %v3798, 4
        %v3800 = vadd.f32 %v3798, %v3799
        %v3801 = vrot.slane %v3800, 2
        %v3802 = vadd.f32 %v3800, %v3801
        %v3803 = vrot.slane %v3802, 1
        %v3804 = vadd.f32 %v3802, %v3803
        %v3805 = vsel %vm422, %v3247, 0.0
        %v3806 = vrot.slane %v3805, 4
        %v3807 = vadd.f32 %v3805, %v3806
        %v3808 = vrot.slane %v3807, 2
        %v3809 = vadd.f32 %v3807, %v3808
        %v3810 = vrot.slane %v3809, 1
        %v3811 = vadd.f32 %v3809, %v3810
        %v3812 = vsel %vm422, %v3248, 0.0
        %v3813 = vrot.slane %v3812, 4
        %v3814 = vadd.f32 %v3812, %v3813
        %v3815 = vrot.slane %v3814, 2
        %v3816 = vadd.f32 %v3814, %v3815
        %v3817 = vrot.slane %v3816, 1
        %v3818 = vadd.f32 %v3816, %v3817
        %v3819 = vsel %vm422, %v3249, 0.0
        %v3820 = vrot.slane %v3819, 4
        %v3821 = vadd.f32 %v3819, %v3820
        %v3822 = vrot.slane %v3821, 2
        %v3823 = vadd.f32 %v3821, %v3822
        %v3824 = vrot.slane %v3823, 1
        %v3825 = vadd.f32 %v3823, %v3824
        %v3826 = vmul.f32 %v3776, %v1187
        %v3827 = vmul.f32 %v3783, %v1187
        %v3828 = vmul.f32 %v3790, %v1187
        %v3829 = vmul.f32 %v3797, %v1187
        %v3830 = vmul.f32 %v3804, %v1187
        %v3831 = vmul.f32 %v3811, %v1187
        %v3832 = vmul.f32 %v3818, %v1187
        %v3833 = vmul.f32 %v3825, %v1187
        %v3834 = vsel %vm422, %v3713, 0.0
        %v3835 = vrot.slane %v3834, 4
        %v3836 = vadd.f32 %v3834, %v3835
        %v3837 = vrot.slane %v3836, 2
        %v3838 = vadd.f32 %v3836, %v3837
        %v3839 = vrot.slane %v3838, 1
        %v3840 = vadd.f32 %v3838, %v3839
        %v3841 = vmul.f32 %v3840, %v1187
        %3850 = vrot.lane.b32.xlu0 %v3178, 32
        %v3851 = vpop.permute.xlu0 %3850
        %3852 = vrot.lane.b32.xlu0 %v3179, 32
        %v3853 = vpop.permute.xlu0 %3852
        %3854 = vrot.lane.b32.xlu0 %v3180, 32
        %v3855 = vpop.permute.xlu0 %3854
        %3856 = vrot.lane.b32.xlu0 %v3181, 32
        %v3857 = vpop.permute.xlu0 %3856
        %3858 = vrot.lane.b32.xlu0 %v3182, 32
        %v3859 = vpop.permute.xlu0 %3858
        %3860 = vrot.lane.b32.xlu0 %v3183, 32
        %v3861 = vpop.permute.xlu0 %3860
        %3862 = vrot.lane.b32.xlu0 %v3184, 32
        %v3863 = vpop.permute.xlu0 %3862
        %3864 = vrot.lane.b32.xlu0 %v3185, 32
        %v3865 = vpop.permute.xlu0 %3864
        %3882 = vrot.lane.b32.xlu0 %v3242, 64
        %v3883 = vpop.permute.xlu0 %3882
        %3884 = vrot.lane.b32.xlu0 %v3243, 64
        %v3885 = vpop.permute.xlu0 %3884
        %3886 = vrot.lane.b32.xlu0 %v3244, 64
        %v3887 = vpop.permute.xlu0 %3886
        %3888 = vrot.lane.b32.xlu0 %v3245, 64
        %v3889 = vpop.permute.xlu0 %3888
        %3890 = vrot.lane.b32.xlu0 %v3246, 64
        %v3891 = vpop.permute.xlu0 %3890
        %3892 = vrot.lane.b32.xlu0 %v3247, 64
        %v3893 = vpop.permute.xlu0 %3892
        %3894 = vrot.lane.b32.xlu0 %v3248, 64
        %v3895 = vpop.permute.xlu0 %3894
        %3896 = vrot.lane.b32.xlu0 %v3249, 64
        %v3897 = vpop.permute.xlu0 %3896
        %3970 = vrot.lane.b32.xlu0 %v3634, 96
        %v3971 = vpop.permute.xlu0 %3970
        %3972 = vrot.lane.b32.xlu0 %v3635, 96
        %v3973 = vpop.permute.xlu0 %3972
        %3974 = vrot.lane.b32.xlu0 %v3636, 96
        %v3975 = vpop.permute.xlu0 %3974
        %3976 = vrot.lane.b32.xlu0 %v3637, 96
        %v3977 = vpop.permute.xlu0 %3976
        %3978 = vrot.lane.b32.xlu0 %v3638, 96
        %v3979 = vpop.permute.xlu0 %3978
        %3980 = vrot.lane.b32.xlu0 %v3639, 96
        %v3981 = vpop.permute.xlu0 %3980
        %3982 = vrot.lane.b32.xlu0 %v3640, 96
        %v3983 = vpop.permute.xlu0 %3982
        %3984 = vrot.lane.b32.xlu0 %v3641, 96
        %v3985 = vpop.permute.xlu0 %3984
        %3986 = vrot.lane.b32.xlu0 %v3642, 96
        %v3987 = vpop.permute.xlu0 %3986
        %3988 = vrot.lane.b32.xlu0 %v3643, 96
        %v3989 = vpop.permute.xlu0 %3988
        %3990 = vrot.lane.b32.xlu0 %v3644, 96
        %v3991 = vpop.permute.xlu0 %3990
        %3992 = vrot.lane.b32.xlu0 %v3645, 96
        %v3993 = vpop.permute.xlu0 %3992
        %3994 = vrot.lane.b32.xlu0 %v3646, 96
        %v3995 = vpop.permute.xlu0 %3994
        %3996 = vrot.lane.b32.xlu0 %v3647, 96
        %v3997 = vpop.permute.xlu0 %3996
        %3998 = vrot.lane.b32.xlu0 %v3648, 96
        %v3999 = vpop.permute.xlu0 %3998
        %4000 = vrot.lane.b32.xlu0 %v3649, 96
        %v4001 = vpop.permute.xlu0 %4000
        %4002 = vrot.lane.b32.xlu0 %v3650, 96
        %v4003 = vpop.permute.xlu0 %4002
        %4004 = vrot.lane.b32.xlu0 %v3651, 96
        %v4005 = vpop.permute.xlu0 %4004
        %4006 = vrot.lane.b32.xlu0 %v3652, 96
        %v4007 = vpop.permute.xlu0 %4006
        %4008 = vrot.lane.b32.xlu0 %v3653, 96
        %v4009 = vpop.permute.xlu0 %4008
        %4010 = vrot.lane.b32.xlu0 %v3654, 96
        %v4011 = vpop.permute.xlu0 %4010
        %4012 = vrot.lane.b32.xlu0 %v3655, 96
        %v4013 = vpop.permute.xlu0 %4012
        %4014 = vrot.lane.b32.xlu0 %v3656, 96
        %v4015 = vpop.permute.xlu0 %4014
        %4016 = vrot.lane.b32.xlu0 %v3657, 96
        %v4017 = vpop.permute.xlu0 %4016
        %4018 = vrot.lane.b32.xlu0 %v3658, 96
        %v4019 = vpop.permute.xlu0 %4018
        %4020 = vrot.lane.b32.xlu0 %v3659, 96
        %v4021 = vpop.permute.xlu0 %4020
        %4022 = vrot.lane.b32.xlu0 %v3660, 96
        %v4023 = vpop.permute.xlu0 %4022
        %4024 = vrot.lane.b32.xlu0 %v3661, 96
        %v4025 = vpop.permute.xlu0 %4024
        %4026 = vrot.lane.b32.xlu0 %v3662, 96
        %v4027 = vpop.permute.xlu0 %4026
        %4028 = vrot.lane.b32.xlu0 %v3663, 96
        %v4029 = vpop.permute.xlu0 %4028
        %4030 = vrot.lane.b32.xlu0 %v3664, 96
        %v4031 = vpop.permute.xlu0 %4030
        %4032 = vrot.lane.b32.xlu0 %v3665, 96
        %v4033 = vpop.permute.xlu0 %4032
        %4034 = vrot.lane.b32.xlu0 %v3666, 96
        %v4035 = vpop.permute.xlu0 %4034
        %4036 = vrot.lane.b32.xlu0 %v3667, 96
        %v4037 = vpop.permute.xlu0 %4036
        %4038 = vrot.lane.b32.xlu0 %v3668, 96
        %v4039 = vpop.permute.xlu0 %4038
        %4040 = vrot.lane.b32.xlu0 %v3669, 96
        %v4041 = vpop.permute.xlu0 %4040
        %4042 = vrot.lane.b32.xlu0 %v3670, 96
        %v4043 = vpop.permute.xlu0 %4042
        %4044 = vrot.lane.b32.xlu0 %v3671, 96
        %v4045 = vpop.permute.xlu0 %4044
        %4046 = vrot.lane.b32.xlu0 %v3672, 96
        %v4047 = vpop.permute.xlu0 %4046
        %4048 = vrot.lane.b32.xlu0 %v3673, 96
        %v4049 = vpop.permute.xlu0 %4048
        %4050 = vrot.lane.b32.xlu0 %v3674, 96
        %v4051 = vpop.permute.xlu0 %4050
        %4052 = vrot.lane.b32.xlu0 %v3675, 96
        %v4053 = vpop.permute.xlu0 %4052
        %4054 = vrot.lane.b32.xlu0 %v3676, 96
        %v4055 = vpop.permute.xlu0 %4054
        %4056 = vrot.lane.b32.xlu0 %v3677, 96
        %v4057 = vpop.permute.xlu0 %4056
        %4058 = vrot.lane.b32.xlu0 %v3678, 96
        %v4059 = vpop.permute.xlu0 %4058
        %4060 = vrot.lane.b32.xlu0 %v3679, 96
        %v4061 = vpop.permute.xlu0 %4060
        %4062 = vrot.lane.b32.xlu0 %v3680, 96
        %v4063 = vpop.permute.xlu0 %4062
        %4064 = vrot.lane.b32.xlu0 %v3681, 96
        %v4065 = vpop.permute.xlu0 %4064
        %4066 = vrot.lane.b32.xlu0 %v3682, 96
        %v4067 = vpop.permute.xlu0 %4066
        %4068 = vrot.lane.b32.xlu0 %v3683, 96
        %v4069 = vpop.permute.xlu0 %4068
        %4070 = vrot.lane.b32.xlu0 %v3684, 96
        %v4071 = vpop.permute.xlu0 %4070
        %4072 = vrot.lane.b32.xlu0 %v3685, 96
        %v4073 = vpop.permute.xlu0 %4072
        %4074 = vrot.lane.b32.xlu0 %v3686, 96
        %v4075 = vpop.permute.xlu0 %4074
        %4076 = vrot.lane.b32.xlu0 %v3687, 96
        %v4077 = vpop.permute.xlu0 %4076
        %4078 = vrot.lane.b32.xlu0 %v3688, 96
        %v4079 = vpop.permute.xlu0 %4078
        %4080 = vrot.lane.b32.xlu0 %v3689, 96
        %v4081 = vpop.permute.xlu0 %4080
        %4082 = vrot.lane.b32.xlu0 %v3690, 96
        %v4083 = vpop.permute.xlu0 %4082
        %4084 = vrot.lane.b32.xlu0 %v3691, 96
        %v4085 = vpop.permute.xlu0 %4084
        %4086 = vrot.lane.b32.xlu0 %v3692, 96
        %v4087 = vpop.permute.xlu0 %4086
        %4088 = vrot.lane.b32.xlu0 %v3693, 96
        %v4089 = vpop.permute.xlu0 %4088
        %4090 = vrot.lane.b32.xlu0 %v3694, 96
        %v4091 = vpop.permute.xlu0 %4090
        %4092 = vrot.lane.b32.xlu0 %v3695, 96
        %v4093 = vpop.permute.xlu0 %4092
        %4094 = vrot.lane.b32.xlu0 %v3696, 96
        %v4095 = vpop.permute.xlu0 %4094
        %4096 = vrot.lane.b32.xlu0 %v3697, 96
        %v4097 = vpop.permute.xlu0 %4096
        %4170 = vrot.lane.b32.xlu0 %v3762, 32
        %v4171 = vpop.permute.xlu0 %4170
        %4172 = vrot.lane.b32.xlu0 %v3763, 32
        %v4173 = vpop.permute.xlu0 %4172
        %4174 = vrot.lane.b32.xlu0 %v3764, 32
        %v4175 = vpop.permute.xlu0 %4174
        %4176 = vrot.lane.b32.xlu0 %v3765, 32
        %v4177 = vpop.permute.xlu0 %4176
        %4178 = vrot.lane.b32.xlu0 %v3766, 32
        %v4179 = vpop.permute.xlu0 %4178
        %4180 = vrot.lane.b32.xlu0 %v3767, 32
        %v4181 = vpop.permute.xlu0 %4180
        %4182 = vrot.lane.b32.xlu0 %v3768, 32
        %v4183 = vpop.permute.xlu0 %4182
        %4184 = vrot.lane.b32.xlu0 %v3769, 32
        %v4185 = vpop.permute.xlu0 %4184
        %4202 = vrot.lane.b32.xlu0 %v3826, 64
        %v4203 = vpop.permute.xlu0 %4202
        %4204 = vrot.lane.b32.xlu0 %v3827, 64
        %v4205 = vpop.permute.xlu0 %4204
        %4206 = vrot.lane.b32.xlu0 %v3828, 64
        %v4207 = vpop.permute.xlu0 %4206
        %4208 = vrot.lane.b32.xlu0 %v3829, 64
        %v4209 = vpop.permute.xlu0 %4208
        %4210 = vrot.lane.b32.xlu0 %v3830, 64
        %v4211 = vpop.permute.xlu0 %4210
        %4212 = vrot.lane.b32.xlu0 %v3831, 64
        %v4213 = vpop.permute.xlu0 %4212
        %4214 = vrot.lane.b32.xlu0 %v3832, 64
        %v4215 = vpop.permute.xlu0 %4214
        %4216 = vrot.lane.b32.xlu0 %v3833, 64
        %v4217 = vpop.permute.xlu0 %4216
        %4227 = vrot.lane.b32.xlu0 %v3841, 96
        %v4228 = vpop.permute.xlu0 %4227
        %v4230 = vsel %vm422, %v2994, %v3851
        %v4231 = vsel %vm422, %v2995, %v3853
        %v4232 = vsel %vm422, %v2996, %v3855
        %v4233 = vsel %vm422, %v2997, %v3857
        %v4234 = vsel %vm422, %v2998, %v3859
        %v4235 = vsel %vm422, %v2999, %v3861
        %v4236 = vsel %vm422, %v3000, %v3863
        %v4237 = vsel %vm422, %v3001, %v3865
        %v4238 = vsel %vm422, %v3002, %v3851
        %v4239 = vsel %vm422, %v3003, %v3853
        %v4240 = vsel %vm422, %v3004, %v3855
        %v4241 = vsel %vm422, %v3005, %v3857
        %v4242 = vsel %vm422, %v3006, %v3859
        %v4243 = vsel %vm422, %v3007, %v3861
        %v4244 = vsel %vm422, %v3008, %v3863
        %v4245 = vsel %vm422, %v3009, %v3865
        %v4246 = vsel %vm422, %v3010, %v3851
        %v4247 = vsel %vm422, %v3011, %v3853
        %v4248 = vsel %vm422, %v3012, %v3855
        %v4249 = vsel %vm422, %v3013, %v3857
        %v4250 = vsel %vm422, %v3014, %v3859
        %v4251 = vsel %vm422, %v3015, %v3861
        %v4252 = vsel %vm422, %v3016, %v3863
        %v4253 = vsel %vm422, %v3017, %v3865
        %v4254 = vsel %vm422, %v3018, %v3851
        %v4255 = vsel %vm422, %v3019, %v3853
        %v4256 = vsel %vm422, %v3020, %v3855
        %v4257 = vsel %vm422, %v3021, %v3857
        %v4258 = vsel %vm422, %v3022, %v3859
        %v4259 = vsel %vm422, %v3023, %v3861
        %v4260 = vsel %vm422, %v3024, %v3863
        %v4261 = vsel %vm422, %v3025, %v3865
        %v4262 = vsel %vm422, %v3026, %v3851
        %v4263 = vsel %vm422, %v3027, %v3853
        %v4264 = vsel %vm422, %v3028, %v3855
        %v4265 = vsel %vm422, %v3029, %v3857
        %v4266 = vsel %vm422, %v3030, %v3859
        %v4267 = vsel %vm422, %v3031, %v3861
        %v4268 = vsel %vm422, %v3032, %v3863
        %v4269 = vsel %vm422, %v3033, %v3865
        %v4270 = vsel %vm422, %v3034, %v3851
        %v4271 = vsel %vm422, %v3035, %v3853
        %v4272 = vsel %vm422, %v3036, %v3855
        %v4273 = vsel %vm422, %v3037, %v3857
        %v4274 = vsel %vm422, %v3038, %v3859
        %v4275 = vsel %vm422, %v3039, %v3861
        %v4276 = vsel %vm422, %v3040, %v3863
        %v4277 = vsel %vm422, %v3041, %v3865
        %v4278 = vsel %vm422, %v3042, %v3851
        %v4279 = vsel %vm422, %v3043, %v3853
        %v4280 = vsel %vm422, %v3044, %v3855
        %v4281 = vsel %vm422, %v3045, %v3857
        %v4282 = vsel %vm422, %v3046, %v3859
        %v4283 = vsel %vm422, %v3047, %v3861
        %v4284 = vsel %vm422, %v3048, %v3863
        %v4285 = vsel %vm422, %v3049, %v3865
        %v4286 = vsel %vm422, %v3050, %v3851
        %v4287 = vsel %vm422, %v3051, %v3853
        %v4288 = vsel %vm422, %v3052, %v3855
        %v4289 = vsel %vm422, %v3053, %v3857
        %v4290 = vsel %vm422, %v3054, %v3859
        %v4291 = vsel %vm422, %v3055, %v3861
        %v4292 = vsel %vm422, %v3056, %v3863
        %v4293 = vsel %vm422, %v3057, %v3865
        %v4294 = vsel %vm2304, %v4230, %v3883
        %v4295 = vsel %vm2304, %v4231, %v3883
        %v4296 = vsel %vm2304, %v4232, %v3883
        %v4297 = vsel %vm2304, %v4233, %v3883
        %v4298 = vsel %vm2304, %v4234, %v3883
        %v4299 = vsel %vm2304, %v4235, %v3883
        %v4300 = vsel %vm2304, %v4236, %v3883
        %v4301 = vsel %vm2304, %v4237, %v3883
        %v4302 = vsel %vm2304, %v4238, %v3885
        %v4303 = vsel %vm2304, %v4239, %v3885
        %v4304 = vsel %vm2304, %v4240, %v3885
        %v4305 = vsel %vm2304, %v4241, %v3885
        %v4306 = vsel %vm2304, %v4242, %v3885
        %v4307 = vsel %vm2304, %v4243, %v3885
        %v4308 = vsel %vm2304, %v4244, %v3885
        %v4309 = vsel %vm2304, %v4245, %v3885
        %v4310 = vsel %vm2304, %v4246, %v3887
        %v4311 = vsel %vm2304, %v4247, %v3887
        %v4312 = vsel %vm2304, %v4248, %v3887
        %v4313 = vsel %vm2304, %v4249, %v3887
        %v4314 = vsel %vm2304, %v4250, %v3887
        %v4315 = vsel %vm2304, %v4251, %v3887
        %v4316 = vsel %vm2304, %v4252, %v3887
        %v4317 = vsel %vm2304, %v4253, %v3887
        %v4318 = vsel %vm2304, %v4254, %v3889
        %v4319 = vsel %vm2304, %v4255, %v3889
        %v4320 = vsel %vm2304, %v4256, %v3889
        %v4321 = vsel %vm2304, %v4257, %v3889
        %v4322 = vsel %vm2304, %v4258, %v3889
        %v4323 = vsel %vm2304, %v4259, %v3889
        %v4324 = vsel %vm2304, %v4260, %v3889
        %v4325 = vsel %vm2304, %v4261, %v3889
        %v4326 = vsel %vm2304, %v4262, %v3891
        %v4327 = vsel %vm2304, %v4263, %v3891
        %v4328 = vsel %vm2304, %v4264, %v3891
        %v4329 = vsel %vm2304, %v4265, %v3891
        %v4330 = vsel %vm2304, %v4266, %v3891
        %v4331 = vsel %vm2304, %v4267, %v3891
        %v4332 = vsel %vm2304, %v4268, %v3891
        %v4333 = vsel %vm2304, %v4269, %v3891
        %v4334 = vsel %vm2304, %v4270, %v3893
        %v4335 = vsel %vm2304, %v4271, %v3893
        %v4336 = vsel %vm2304, %v4272, %v3893
        %v4337 = vsel %vm2304, %v4273, %v3893
        %v4338 = vsel %vm2304, %v4274, %v3893
        %v4339 = vsel %vm2304, %v4275, %v3893
        %v4340 = vsel %vm2304, %v4276, %v3893
        %v4341 = vsel %vm2304, %v4277, %v3893
        %v4342 = vsel %vm2304, %v4278, %v3895
        %v4343 = vsel %vm2304, %v4279, %v3895
        %v4344 = vsel %vm2304, %v4280, %v3895
        %v4345 = vsel %vm2304, %v4281, %v3895
        %v4346 = vsel %vm2304, %v4282, %v3895
        %v4347 = vsel %vm2304, %v4283, %v3895
        %v4348 = vsel %vm2304, %v4284, %v3895
        %v4349 = vsel %vm2304, %v4285, %v3895
        %v4350 = vsel %vm2304, %v4286, %v3897
        %v4351 = vsel %vm2304, %v4287, %v3897
        %v4352 = vsel %vm2304, %v4288, %v3897
        %v4353 = vsel %vm2304, %v4289, %v3897
        %v4354 = vsel %vm2304, %v4290, %v3897
        %v4355 = vsel %vm2304, %v4291, %v3897
        %v4356 = vsel %vm2304, %v4292, %v3897
        %v4357 = vsel %vm2304, %v4293, %v3897
        %v4358 = vsel %vm2369, %v4294, %v3971
        %v4359 = vsel %vm2369, %v4295, %v3973
        %v4360 = vsel %vm2369, %v4296, %v3975
        %v4361 = vsel %vm2369, %v4297, %v3977
        %v4362 = vsel %vm2369, %v4298, %v3979
        %v4363 = vsel %vm2369, %v4299, %v3981
        %v4364 = vsel %vm2369, %v4300, %v3983
        %v4365 = vsel %vm2369, %v4301, %v3985
        %v4366 = vsel %vm2369, %v4302, %v3987
        %v4367 = vsel %vm2369, %v4303, %v3989
        %v4368 = vsel %vm2369, %v4304, %v3991
        %v4369 = vsel %vm2369, %v4305, %v3993
        %v4370 = vsel %vm2369, %v4306, %v3995
        %v4371 = vsel %vm2369, %v4307, %v3997
        %v4372 = vsel %vm2369, %v4308, %v3999
        %v4373 = vsel %vm2369, %v4309, %v4001
        %v4374 = vsel %vm2369, %v4310, %v4003
        %v4375 = vsel %vm2369, %v4311, %v4005
        %v4376 = vsel %vm2369, %v4312, %v4007
        %v4377 = vsel %vm2369, %v4313, %v4009
        %v4378 = vsel %vm2369, %v4314, %v4011
        %v4379 = vsel %vm2369, %v4315, %v4013
        %v4380 = vsel %vm2369, %v4316, %v4015
        %v4381 = vsel %vm2369, %v4317, %v4017
        %v4382 = vsel %vm2369, %v4318, %v4019
        %v4383 = vsel %vm2369, %v4319, %v4021
        %v4384 = vsel %vm2369, %v4320, %v4023
        %v4385 = vsel %vm2369, %v4321, %v4025
        %v4386 = vsel %vm2369, %v4322, %v4027
        %v4387 = vsel %vm2369, %v4323, %v4029
        %v4388 = vsel %vm2369, %v4324, %v4031
        %v4389 = vsel %vm2369, %v4325, %v4033
        %v4390 = vsel %vm2369, %v4326, %v4035
        %v4391 = vsel %vm2369, %v4327, %v4037
        %v4392 = vsel %vm2369, %v4328, %v4039
        %v4393 = vsel %vm2369, %v4329, %v4041
        %v4394 = vsel %vm2369, %v4330, %v4043
        %v4395 = vsel %vm2369, %v4331, %v4045
        %v4396 = vsel %vm2369, %v4332, %v4047
        %v4397 = vsel %vm2369, %v4333, %v4049
        %v4398 = vsel %vm2369, %v4334, %v4051
        %v4399 = vsel %vm2369, %v4335, %v4053
        %v4400 = vsel %vm2369, %v4336, %v4055
        %v4401 = vsel %vm2369, %v4337, %v4057
        %v4402 = vsel %vm2369, %v4338, %v4059
        %v4403 = vsel %vm2369, %v4339, %v4061
        %v4404 = vsel %vm2369, %v4340, %v4063
        %v4405 = vsel %vm2369, %v4341, %v4065
        %v4406 = vsel %vm2369, %v4342, %v4067
        %v4407 = vsel %vm2369, %v4343, %v4069
        %v4408 = vsel %vm2369, %v4344, %v4071
        %v4409 = vsel %vm2369, %v4345, %v4073
        %v4410 = vsel %vm2369, %v4346, %v4075
        %v4411 = vsel %vm2369, %v4347, %v4077
        %v4412 = vsel %vm2369, %v4348, %v4079
        %v4413 = vsel %vm2369, %v4349, %v4081
        %v4414 = vsel %vm2369, %v4350, %v4083
        %v4415 = vsel %vm2369, %v4351, %v4085
        %v4416 = vsel %vm2369, %v4352, %v4087
        %v4417 = vsel %vm2369, %v4353, %v4089
        %v4418 = vsel %vm2369, %v4354, %v4091
        %v4419 = vsel %vm2369, %v4355, %v4093
        %v4420 = vsel %vm2369, %v4356, %v4095
        %v4421 = vsel %vm2369, %v4357, %v4097
        %v4422 = vsel %vm422, %v3713, %v4171
        %v4423 = vsel %vm422, %v3713, %v4173
        %v4424 = vsel %vm422, %v3713, %v4175
        %v4425 = vsel %vm422, %v3713, %v4177
        %v4426 = vsel %vm422, %v3713, %v4179
        %v4427 = vsel %vm422, %v3713, %v4181
        %v4428 = vsel %vm422, %v3713, %v4183
        %v4429 = vsel %vm422, %v3713, %v4185
        %v4430 = vsel %vm2304, %v4422, %v4203
        %v4431 = vsel %vm2304, %v4423, %v4203
        %v4432 = vsel %vm2304, %v4424, %v4203
        %v4433 = vsel %vm2304, %v4425, %v4203
        %v4434 = vsel %vm2304, %v4426, %v4203
        %v4435 = vsel %vm2304, %v4427, %v4203
        %v4436 = vsel %vm2304, %v4428, %v4203
        %v4437 = vsel %vm2304, %v4429, %v4203
        %v4438 = vsel %vm2304, %v4422, %v4205
        %v4439 = vsel %vm2304, %v4423, %v4205
        %v4440 = vsel %vm2304, %v4424, %v4205
        %v4441 = vsel %vm2304, %v4425, %v4205
        %v4442 = vsel %vm2304, %v4426, %v4205
        %v4443 = vsel %vm2304, %v4427, %v4205
        %v4444 = vsel %vm2304, %v4428, %v4205
        %v4445 = vsel %vm2304, %v4429, %v4205
        %v4446 = vsel %vm2304, %v4422, %v4207
        %v4447 = vsel %vm2304, %v4423, %v4207
        %v4448 = vsel %vm2304, %v4424, %v4207
        %v4449 = vsel %vm2304, %v4425, %v4207
        %v4450 = vsel %vm2304, %v4426, %v4207
        %v4451 = vsel %vm2304, %v4427, %v4207
        %v4452 = vsel %vm2304, %v4428, %v4207
        %v4453 = vsel %vm2304, %v4429, %v4207
        %v4454 = vsel %vm2304, %v4422, %v4209
        %v4455 = vsel %vm2304, %v4423, %v4209
        %v4456 = vsel %vm2304, %v4424, %v4209
        %v4457 = vsel %vm2304, %v4425, %v4209
        %v4458 = vsel %vm2304, %v4426, %v4209
        %v4459 = vsel %vm2304, %v4427, %v4209
        %v4460 = vsel %vm2304, %v4428, %v4209
        %v4461 = vsel %vm2304, %v4429, %v4209
        %v4462 = vsel %vm2304, %v4422, %v4211
        %v4463 = vsel %vm2304, %v4423, %v4211
        %v4464 = vsel %vm2304, %v4424, %v4211
        %v4465 = vsel %vm2304, %v4425, %v4211
        %v4466 = vsel %vm2304, %v4426, %v4211
        %v4467 = vsel %vm2304, %v4427, %v4211
        %v4468 = vsel %vm2304, %v4428, %v4211
        %v4469 = vsel %vm2304, %v4429, %v4211
        %v4470 = vsel %vm2304, %v4422, %v4213
        %v4471 = vsel %vm2304, %v4423, %v4213
        %v4472 = vsel %vm2304, %v4424, %v4213
        %v4473 = vsel %vm2304, %v4425, %v4213
        %v4474 = vsel %vm2304, %v4426, %v4213
        %v4475 = vsel %vm2304, %v4427, %v4213
        %v4476 = vsel %vm2304, %v4428, %v4213
        %v4477 = vsel %vm2304, %v4429, %v4213
        %v4478 = vsel %vm2304, %v4422, %v4215
        %v4479 = vsel %vm2304, %v4423, %v4215
        %v4480 = vsel %vm2304, %v4424, %v4215
        %v4481 = vsel %vm2304, %v4425, %v4215
        %v4482 = vsel %vm2304, %v4426, %v4215
        %v4483 = vsel %vm2304, %v4427, %v4215
        %v4484 = vsel %vm2304, %v4428, %v4215
        %v4485 = vsel %vm2304, %v4429, %v4215
        %v4486 = vsel %vm2304, %v4422, %v4217
        %v4487 = vsel %vm2304, %v4423, %v4217
        %v4488 = vsel %vm2304, %v4424, %v4217
        %v4489 = vsel %vm2304, %v4425, %v4217
        %v4490 = vsel %vm2304, %v4426, %v4217
        %v4491 = vsel %vm2304, %v4427, %v4217
        %v4492 = vsel %vm2304, %v4428, %v4217
        %v4493 = vsel %vm2304, %v4429, %v4217
        %v4494 = vsel %vm2369, %v4430, %v4228
        %v4495 = vsel %vm2369, %v4431, %v4228
        %v4496 = vsel %vm2369, %v4432, %v4228
        %v4497 = vsel %vm2369, %v4433, %v4228
        %v4498 = vsel %vm2369, %v4434, %v4228
        %v4499 = vsel %vm2369, %v4435, %v4228
        %v4500 = vsel %vm2369, %v4436, %v4228
        %v4501 = vsel %vm2369, %v4437, %v4228
        %v4502 = vsel %vm2369, %v4438, %v4228
        %v4503 = vsel %vm2369, %v4439, %v4228
        %v4504 = vsel %vm2369, %v4440, %v4228
        %v4505 = vsel %vm2369, %v4441, %v4228
        %v4506 = vsel %vm2369, %v4442, %v4228
        %v4507 = vsel %vm2369, %v4443, %v4228
        %v4508 = vsel %vm2369, %v4444, %v4228
        %v4509 = vsel %vm2369, %v4445, %v4228
        %v4510 = vsel %vm2369, %v4446, %v4228
        %v4511 = vsel %vm2369, %v4447, %v4228
        %v4512 = vsel %vm2369, %v4448, %v4228
        %v4513 = vsel %vm2369, %v4449, %v4228
        %v4514 = vsel %vm2369, %v4450, %v4228
        %v4515 = vsel %vm2369, %v4451, %v4228
        %v4516 = vsel %vm2369, %v4452, %v4228
        %v4517 = vsel %vm2369, %v4453, %v4228
        %v4518 = vsel %vm2369, %v4454, %v4228
        %v4519 = vsel %vm2369, %v4455, %v4228
        %v4520 = vsel %vm2369, %v4456, %v4228
        %v4521 = vsel %vm2369, %v4457, %v4228
        %v4522 = vsel %vm2369, %v4458, %v4228
        %v4523 = vsel %vm2369, %v4459, %v4228
        %v4524 = vsel %vm2369, %v4460, %v4228
        %v4525 = vsel %vm2369, %v4461, %v4228
        %v4526 = vsel %vm2369, %v4462, %v4228
        %v4527 = vsel %vm2369, %v4463, %v4228
        %v4528 = vsel %vm2369, %v4464, %v4228
        %v4529 = vsel %vm2369, %v4465, %v4228
        %v4530 = vsel %vm2369, %v4466, %v4228
        %v4531 = vsel %vm2369, %v4467, %v4228
        %v4532 = vsel %vm2369, %v4468, %v4228
        %v4533 = vsel %vm2369, %v4469, %v4228
        %v4534 = vsel %vm2369, %v4470, %v4228
        %v4535 = vsel %vm2369, %v4471, %v4228
        %v4536 = vsel %vm2369, %v4472, %v4228
        %v4537 = vsel %vm2369, %v4473, %v4228
        %v4538 = vsel %vm2369, %v4474, %v4228
        %v4539 = vsel %vm2369, %v4475, %v4228
        %v4540 = vsel %vm2369, %v4476, %v4228
        %v4541 = vsel %vm2369, %v4477, %v4228
        %v4542 = vsel %vm2369, %v4478, %v4228
        %v4543 = vsel %vm2369, %v4479, %v4228
        %v4544 = vsel %vm2369, %v4480, %v4228
        %v4545 = vsel %vm2369, %v4481, %v4228
        %v4546 = vsel %vm2369, %v4482, %v4228
        %v4547 = vsel %vm2369, %v4483, %v4228
        %v4548 = vsel %vm2369, %v4484, %v4228
        %v4549 = vsel %vm2369, %v4485, %v4228
        %v4550 = vsel %vm2369, %v4486, %v4228
        %v4551 = vsel %vm2369, %v4487, %v4228
        %v4552 = vsel %vm2369, %v4488, %v4228
        %v4553 = vsel %vm2369, %v4489, %v4228
        %v4554 = vsel %vm2369, %v4490, %v4228
        %v4555 = vsel %vm2369, %v4491, %v4228
        %v4556 = vsel %vm2369, %v4492, %v4228
        %v4557 = vsel %vm2369, %v4493, %v4228
        %v4558 = vld [vmem:[%s7] sm:$0xff]
        %v4559 = vld [vmem:[%s7 + $0x8] sm:$0xff]
        %v4560 = vld [vmem:[%s7 + $0x10] sm:$0xff]
        %v4561 = vld [vmem:[%s7 + $0x18] sm:$0xff]
        %v4562 = vld [vmem:[%s7 + $0x20] sm:$0xff]
        %v4563 = vld [vmem:[%s7 + $0x28] sm:$0xff]
        %v4564 = vld [vmem:[%s7 + $0x30] sm:$0xff]
        %v4565 = vld [vmem:[%s7 + $0x38] sm:$0xff]
        %v4566 = vld [vmem:[%s7 + $0x40] sm:$0xff]
        %v4567 = vld [vmem:[%s7 + $0x48] sm:$0xff]
        %v4568 = vld [vmem:[%s7 + $0x50] sm:$0xff]
        %v4569 = vld [vmem:[%s7 + $0x58] sm:$0xff]
        %v4570 = vld [vmem:[%s7 + $0x60] sm:$0xff]
        %v4571 = vld [vmem:[%s7 + $0x68] sm:$0xff]
        %v4572 = vld [vmem:[%s7 + $0x70] sm:$0xff]
        %v4573 = vld [vmem:[%s7 + $0x78] sm:$0xff]
        %v4574 = vld [vmem:[%s7 + $0x80] sm:$0xff]
        %v4575 = vld [vmem:[%s7 + $0x88] sm:$0xff]
        %v4576 = vld [vmem:[%s7 + $0x90] sm:$0xff]
        %v4577 = vld [vmem:[%s7 + $0x98] sm:$0xff]
        %v4578 = vld [vmem:[%s7 + $0xa0] sm:$0xff]
        %v4579 = vld [vmem:[%s7 + $0xa8] sm:$0xff]
        %v4580 = vld [vmem:[%s7 + $0xb0] sm:$0xff]
        %v4581 = vld [vmem:[%s7 + $0xb8] sm:$0xff]
        %v4582 = vld [vmem:[%s7 + $0xc0] sm:$0xff]
        %v4583 = vld [vmem:[%s7 + $0xc8] sm:$0xff]
        %v4584 = vld [vmem:[%s7 + $0xd0] sm:$0xff]
        %v4585 = vld [vmem:[%s7 + $0xd8] sm:$0xff]
        %v4586 = vld [vmem:[%s7 + $0xe0] sm:$0xff]
        %v4587 = vld [vmem:[%s7 + $0xe8] sm:$0xff]
        %v4588 = vld [vmem:[%s7 + $0xf0] sm:$0xff]
        %v4589 = vld [vmem:[%s7 + $0xf8] sm:$0xff]
        %v4590 = vld [vmem:[%s8] sm:$0x1]
        %v4592 = vlaneseq
        %v4593 = vshrl.u32 %v4592, 7
        %v4594 = vsub.s32 0, %v4593
        %v4595 = vrot.slane %v4590, %v4594
        %4597 = vmatprep.subr.mxu0 0.0
        %4598 = vmatpush1.msra.mxu0 %v4558
        %4599 = vmatprep.subr.mxu0 0.0
        %4600 = vmatpush1.msra.mxu0 %v4559
        %4601 = vmatprep.subr.mxu0 0.0
        %4602 = vmatpush1.msra.mxu0 %v4560
        %4603 = vmatprep.subr.mxu0 0.0
        %4604 = vmatpush1.msra.mxu0 %v4561
        %4605 = vmatprep.subr.mxu0 0.0
        %4606 = vmatpush1.msra.mxu0 %v4562
        %4607 = vmatprep.subr.mxu0 0.0
        %4608 = vmatpush1.msra.mxu0 %v4563
        %4609 = vmatprep.subr.mxu0 0.0
        %4610 = vmatpush1.msra.mxu0 %v4564
        %4611 = vmatprep.subr.mxu0 0.0
        %4612 = vmatpush1.msra.mxu0 %v4565
        %4613 = vmatprep.subr.mxu0 0.0
        %4614 = vmatpush1.msra.mxu0 %v4566
        %4615 = vmatprep.subr.mxu0 0.0
        %4616 = vmatpush1.msra.mxu0 %v4567
        %4617 = vmatprep.subr.mxu0 0.0
        %4618 = vmatpush1.msra.mxu0 %v4568
        %4619 = vmatprep.subr.mxu0 0.0
        %4620 = vmatpush1.msra.mxu0 %v4569
        %4621 = vmatprep.subr.mxu0 0.0
        %4622 = vmatpush1.msra.mxu0 %v4570
        %4623 = vmatprep.subr.mxu0 0.0
        %4624 = vmatpush1.msra.mxu0 %v4571
        %4625 = vmatprep.subr.mxu0 0.0
        %4626 = vmatpush1.msra.mxu0 %v4572
        %4627 = vmatprep.subr.mxu0 0.0
        %4628 = vmatpush1.msra.mxu0 %v4573
        %4629 = vmatprep.subr.mxu0 0.0
        %4630 = vmatpush1.msra.mxu0 %v4574
        %4631 = vmatprep.subr.mxu0 0.0
        %4632 = vmatpush1.msra.mxu0 %v4575
        %4633 = vmatprep.subr.mxu0 0.0
        %4634 = vmatpush1.msra.mxu0 %v4576
        %4635 = vmatprep.subr.mxu0 0.0
        %4636 = vmatpush1.msra.mxu0 %v4577
        %4637 = vmatprep.subr.mxu0 0.0
        %4638 = vmatpush1.msra.mxu0 %v4578
        %4639 = vmatprep.subr.mxu0 0.0
        %4640 = vmatpush1.msra.mxu0 %v4579
        %4641 = vmatprep.subr.mxu0 0.0
        %4642 = vmatpush1.msra.mxu0 %v4580
        %4643 = vmatprep.subr.mxu0 0.0
        %4644 = vmatpush1.msra.mxu0 %v4581
        %4645 = vmatprep.subr.mxu0 0.0
        %4646 = vmatpush1.msra.mxu0 %v4582
        %4647 = vmatprep.subr.mxu0 0.0
        %4648 = vmatpush1.msra.mxu0 %v4583
        %4649 = vmatprep.subr.mxu0 0.0
        %4650 = vmatpush1.msra.mxu0 %v4584
        %4651 = vmatprep.subr.mxu0 0.0
        %4652 = vmatpush1.msra.mxu0 %v4585
        %4653 = vmatprep.subr.mxu0 0.0
        %4654 = vmatpush1.msra.mxu0 %v4586
        %4655 = vmatprep.subr.mxu0 0.0
        %4656 = vmatpush1.msra.mxu0 %v4587
        %4657 = vmatprep.subr.mxu0 0.0
        %4658 = vmatpush1.msra.mxu0 %v4588
        %4659 = vmatprep.subr.mxu0 0.0
        %4660 = vmatpush1.msra.mxu0 %v4589
        %4661 = vmatprep.mubr.f32.mxu0 %v4494
        %4662 = vmatmul.mubr.f32.gmra.mrb[0].mxu0 %v4358
        %v4663 = vpop.f32.mrb[0].mxu0
        %v4664 = vadd.f32 %v4595, %v4663
        %v4665 = vpop.f32.mrb[0].mxu0
        %4666 = vmatprep.mubr.f32.mxu0 %v4495
        %4667 = vmatmul.mubr.f32.gmra.mrb[0].mxu0 %v4359
        %v4668 = vpop.f32.mrb[0].mxu0
        %v4669 = vadd.f32 %v4595, %v4668
        %v4670 = vpop.f32.mrb[0].mxu0
        %4671 = vmatprep.mubr.f32.mxu0 %v4496
        %4672 = vmatmul.mubr.f32.gmra.mrb[0].mxu0 %v4360
        %v4673 = vpop.f32.mrb[0].mxu0
        %v4674 = vadd.f32 %v4595, %v4673
        %v4675 = vpop.f32.mrb[0].mxu0
        %4676 = vmatprep.mubr.f32.mxu0 %v4497
        %4677 = vmatmul.mubr.f32.gmra.mrb[0].mxu0 %v4361
        %v4678 = vpop.f32.mrb[0].mxu0
        %v4679 = vadd.f32 %v4595, %v4678
        %v4680 = vpop.f32.mrb[0].mxu0
        %4681 = vmatprep.mubr.f32.mxu0 %v4498
        %4682 = vmatmul.mubr.f32.gmra.mrb[0].mxu0 %v4362
        %v4683 = vpop.f32.mrb[0].mxu0
        %v4684 = vadd.f32 %v4595, %v4683
        %v4685 = vpop.f32.mrb[0].mxu0
        %4686 = vmatprep.mubr.f32.mxu0 %v4499
        %4687 = vmatmul.mubr.f32.gmra.mrb[0].mxu0 %v4363
        %v4688 = vpop.f32.mrb[0].mxu0
        %v4689 = vadd.f32 %v4595, %v4688
        %v4690 = vpop.f32.mrb[0].mxu0
        %4691 = vmatprep.mubr.f32.mxu0 %v4500
        %4692 = vmatmul.mubr.f32.gmra.mrb[0].mxu0 %v4364
        %v4693 = vpop.f32.mrb[0].mxu0
        %v4694 = vadd.f32 %v4595, %v4693
        %v4695 = vpop.f32.mrb[0].mxu0
        %4696 = vmatprep.mubr.f32.mxu0 %v4501
        %4697 = vmatmul.mubr.f32.gmra.mrb[0].mxu0 %v4365
        %v4698 = vpop.f32.mrb[0].mxu0
        %v4699 = vadd.f32 %v4595, %v4698
        %v4700 = vpop.f32.mrb[0].mxu0
        %4701 = vmatprep.mubr.f32.mxu0 %v4502
        %4702 = vmatmul.mubr.f32.gmra.mrb[0].mxu0 %v4366
        %v4703 = vpop.f32.mrb[0].mxu0
        %v4704 = vadd.f32 %v4595, %v4703
        %v4705 = vpop.f32.mrb[0].mxu0
        %4706 = vmatprep.mubr.f32.mxu0 %v4503
        %4707 = vmatmul.mubr.f32.gmra.mrb[0].mxu0 %v4367
        %v4708 = vpop.f32.mrb[0].mxu0
        %v4709 = vadd.f32 %v4595, %v4708
        %v4710 = vpop.f32.mrb[0].mxu0
        %4711 = vmatprep.mubr.f32.mxu0 %v4504
        %4712 = vmatmul.mubr.f32.gmra.mrb[0].mxu0 %v4368
        %v4713 = vpop.f32.mrb[0].mxu0
        %v4714 = vadd.f32 %v4595, %v4713
        %v4715 = vpop.f32.mrb[0].mxu0
        %4716 = vmatprep.mubr.f32.mxu0 %v4505
        %4717 = vmatmul.mubr.f32.gmra.mrb[0].mxu0 %v4369
        %v4718 = vpop.f32.mrb[0].mxu0
        %v4719 = vadd.f32 %v4595, %v4718
        %v4720 = vpop.f32.mrb[0].mxu0
        %4721 = vmatprep.mubr.f32.mxu0 %v4506
        %4722 = vmatmul.mubr.f32.gmra.mrb[0].mxu0 %v4370
        %v4723 = vpop.f32.mrb[0].mxu0
        %v4724 = vadd.f32 %v4595, %v4723
        %v4725 = vpop.f32.mrb[0].mxu0
        %4726 = vmatprep.mubr.f32.mxu0 %v4507
        %4727 = vmatmul.mubr.f32.gmra.mrb[0].mxu0 %v4371
        %v4728 = vpop.f32.mrb[0].mxu0
        %v4729 = vadd.f32 %v4595, %v4728
        %v4730 = vpop.f32.mrb[0].mxu0
        %4731 = vmatprep.mubr.f32.mxu0 %v4508
        %4732 = vmatmul.mubr.f32.gmra.mrb[0].mxu0 %v4372
        %v4733 = vpop.f32.mrb[0].mxu0
        %v4734 = vadd.f32 %v4595, %v4733
        %v4735 = vpop.f32.mrb[0].mxu0
        %4736 = vmatprep.mubr.f32.mxu0 %v4509
        %4737 = vmatmul.mubr.f32.gmra.mrb[0].mxu0 %v4373
        %v4738 = vpop.f32.mrb[0].mxu0
        %v4739 = vadd.f32 %v4595, %v4738
        %v4740 = vpop.f32.mrb[0].mxu0
        %4741 = vmatprep.mubr.f32.mxu0 %v4510
        %4742 = vmatmul.mubr.f32.gmra.mrb[0].mxu0 %v4374
        %v4743 = vpop.f32.mrb[0].mxu0
        %v4744 = vadd.f32 %v4595, %v4743
        %v4745 = vpop.f32.mrb[0].mxu0
        %4746 = vmatprep.mubr.f32.mxu0 %v4511
        %4747 = vmatmul.mubr.f32.gmra.mrb[0].mxu0 %v4375
        %v4748 = vpop.f32.mrb[0].mxu0
        %v4749 = vadd.f32 %v4595, %v4748
        %v4750 = vpop.f32.mrb[0].mxu0
        %4751 = vmatprep.mubr.f32.mxu0 %v4512
        %4752 = vmatmul.mubr.f32.gmra.mrb[0].mxu0 %v4376
        %v4753 = vpop.f32.mrb[0].mxu0
        %v4754 = vadd.f32 %v4595, %v4753
        %v4755 = vpop.f32.mrb[0].mxu0
        %4756 = vmatprep.mubr.f32.mxu0 %v4513
        %4757 = vmatmul.mubr.f32.gmra.mrb[0].mxu0 %v4377
        %v4758 = vpop.f32.mrb[0].mxu0
        %v4759 = vadd.f32 %v4595, %v4758
        %v4760 = vpop.f32.mrb[0].mxu0
        %4761 = vmatprep.mubr.f32.mxu0 %v4514
        %4762 = vmatmul.mubr.f32.gmra.mrb[0].mxu0 %v4378
        %v4763 = vpop.f32.mrb[0].mxu0
        %v4764 = vadd.f32 %v4595, %v4763
        %v4765 = vpop.f32.mrb[0].mxu0
        %4766 = vmatprep.mubr.f32.mxu0 %v4515
        %4767 = vmatmul.mubr.f32.gmra.mrb[0].mxu0 %v4379
        %v4768 = vpop.f32.mrb[0].mxu0
        %v4769 = vadd.f32 %v4595, %v4768
        %v4770 = vpop.f32.mrb[0].mxu0
        %4771 = vmatprep.mubr.f32.mxu0 %v4516
        %4772 = vmatmul.mubr.f32.gmra.mrb[0].mxu0 %v4380
        %v4773 = vpop.f32.mrb[0].mxu0
        %v4774 = vadd.f32 %v4595, %v4773
        %v4775 = vpop.f32.mrb[0].mxu0
        %4776 = vmatprep.mubr.f32.mxu0 %v4517
        %4777 = vmatmul.mubr.f32.gmra.mrb[0].mxu0 %v4381
        %v4778 = vpop.f32.mrb[0].mxu0
        %v4779 = vadd.f32 %v4595, %v4778
        %v4780 = vpop.f32.mrb[0].mxu0
        %4781 = vmatprep.mubr.f32.mxu0 %v4518
        %4782 = vmatmul.mubr.f32.gmra.mrb[0].mxu0 %v4382
        %v4783 = vpop.f32.mrb[0].mxu0
        %v4784 = vadd.f32 %v4595, %v4783
        %v4785 = vpop.f32.mrb[0].mxu0
        %4786 = vmatprep.mubr.f32.mxu0 %v4519
        %4787 = vmatmul.mubr.f32.gmra.mrb[0].mxu0 %v4383
        %v4788 = vpop.f32.mrb[0].mxu0
        %v4789 = vadd.f32 %v4595, %v4788
        %v4790 = vpop.f32.mrb[0].mxu0
        %4791 = vmatprep.mubr.f32.mxu0 %v4520
        %4792 = vmatmul.mubr.f32.gmra.mrb[0].mxu0 %v4384
        %v4793 = vpop.f32.mrb[0].mxu0
        %v4794 = vadd.f32 %v4595, %v4793
        %v4795 = vpop.f32.mrb[0].mxu0
        %4796 = vmatprep.mubr.f32.mxu0 %v4521
        %4797 = vmatmul.mubr.f32.gmra.mrb[0].mxu0 %v4385
        %v4798 = vpop.f32.mrb[0].mxu0
        %v4799 = vadd.f32 %v4595, %v4798
        %v4800 = vpop.f32.mrb[0].mxu0
        %4801 = vmatprep.mubr.f32.mxu0 %v4522
        %4802 = vmatmul.mubr.f32.gmra.mrb[0].mxu0 %v4386
        %v4803 = vpop.f32.mrb[0].mxu0
        %v4804 = vadd.f32 %v4595, %v4803
        %v4805 = vpop.f32.mrb[0].mxu0
        %4806 = vmatprep.mubr.f32.mxu0 %v4523
        %4807 = vmatmul.mubr.f32.gmra.mrb[0].mxu0 %v4387
        %v4808 = vpop.f32.mrb[0].mxu0
        %v4809 = vadd.f32 %v4595, %v4808
        %v4810 = vpop.f32.mrb[0].mxu0
        %4811 = vmatprep.mubr.f32.mxu0 %v4524
        %4812 = vmatmul.mubr.f32.gmra.mrb[0].mxu0 %v4388
        %v4813 = vpop.f32.mrb[0].mxu0
        %v4814 = vadd.f32 %v4595, %v4813
        %v4815 = vpop.f32.mrb[0].mxu0
        %4816 = vmatprep.mubr.f32.mxu0 %v4525
        %4817 = vmatmul.mubr.f32.gmra.mrb[0].mxu0 %v4389
        %v4818 = vpop.f32.mrb[0].mxu0
        %v4819 = vadd.f32 %v4595, %v4818
        %v4820 = vpop.f32.mrb[0].mxu0
        %4821 = vmatprep.mubr.f32.mxu0 %v4526
        %4822 = vmatmul.mubr.f32.gmra.mrb[0].mxu0 %v4390
        %v4823 = vpop.f32.mrb[0].mxu0
        %v4824 = vadd.f32 %v4595, %v4823
        %v4825 = vpop.f32.mrb[0].mxu0
        %4826 = vmatprep.mubr.f32.mxu0 %v4527
        %4827 = vmatmul.mubr.f32.gmra.mrb[0].mxu0 %v4391
        %v4828 = vpop.f32.mrb[0].mxu0
        %v4829 = vadd.f32 %v4595, %v4828
        %v4830 = vpop.f32.mrb[0].mxu0
        %4831 = vmatprep.mubr.f32.mxu0 %v4528
        %4832 = vmatmul.mubr.f32.gmra.mrb[0].mxu0 %v4392
        %v4833 = vpop.f32.mrb[0].mxu0
        %v4834 = vadd.f32 %v4595, %v4833
        %v4835 = vpop.f32.mrb[0].mxu0
        %4836 = vmatprep.mubr.f32.mxu0 %v4529
        %4837 = vmatmul.mubr.f32.gmra.mrb[0].mxu0 %v4393
        %v4838 = vpop.f32.mrb[0].mxu0
        %v4839 = vadd.f32 %v4595, %v4838
        %v4840 = vpop.f32.mrb[0].mxu0
        %4841 = vmatprep.mubr.f32.mxu0 %v4530
        %4842 = vmatmul.mubr.f32.gmra.mrb[0].mxu0 %v4394
        %v4843 = vpop.f32.mrb[0].mxu0
        %v4844 = vadd.f32 %v4595, %v4843
        %v4845 = vpop.f32.mrb[0].mxu0
        %4846 = vmatprep.mubr.f32.mxu0 %v4531
        %4847 = vmatmul.mubr.f32.gmra.mrb[0].mxu0 %v4395
        %v4848 = vpop.f32.mrb[0].mxu0
        %v4849 = vadd.f32 %v4595, %v4848
        %v4850 = vpop.f32.mrb[0].mxu0
        %4851 = vmatprep.mubr.f32.mxu0 %v4532
        %4852 = vmatmul.mubr.f32.gmra.mrb[0].mxu0 %v4396
        %v4853 = vpop.f32.mrb[0].mxu0
        %v4854 = vadd.f32 %v4595, %v4853
        %v4855 = vpop.f32.mrb[0].mxu0
        %4856 = vmatprep.mubr.f32.mxu0 %v4533
        %4857 = vmatmul.mubr.f32.gmra.mrb[0].mxu0 %v4397
        %v4858 = vpop.f32.mrb[0].mxu0
        %v4859 = vadd.f32 %v4595, %v4858
        %v4860 = vpop.f32.mrb[0].mxu0
        %4861 = vmatprep.mubr.f32.mxu0 %v4534
        %4862 = vmatmul.mubr.f32.gmra.mrb[0].mxu0 %v4398
        %v4863 = vpop.f32.mrb[0].mxu0
        %v4864 = vadd.f32 %v4595, %v4863
        %v4865 = vpop.f32.mrb[0].mxu0
        %4866 = vmatprep.mubr.f32.mxu0 %v4535
        %4867 = vmatmul.mubr.f32.gmra.mrb[0].mxu0 %v4399
        %v4868 = vpop.f32.mrb[0].mxu0
        %v4869 = vadd.f32 %v4595, %v4868
        %v4870 = vpop.f32.mrb[0].mxu0
        %4871 = vmatprep.mubr.f32.mxu0 %v4536
        %4872 = vmatmul.mubr.f32.gmra.mrb[0].mxu0 %v4400
        %v4873 = vpop.f32.mrb[0].mxu0
        %v4874 = vadd.f32 %v4595, %v4873
        %v4875 = vpop.f32.mrb[0].mxu0
        %4876 = vmatprep.mubr.f32.mxu0 %v4537
        %4877 = vmatmul.mubr.f32.gmra.mrb[0].mxu0 %v4401
        %v4878 = vpop.f32.mrb[0].mxu0
        %v4879 = vadd.f32 %v4595, %v4878
        %v4880 = vpop.f32.mrb[0].mxu0
        %4881 = vmatprep.mubr.f32.mxu0 %v4538
        %4882 = vmatmul.mubr.f32.gmra.mrb[0].mxu0 %v4402
        %v4883 = vpop.f32.mrb[0].mxu0
        %v4884 = vadd.f32 %v4595, %v4883
        %v4885 = vpop.f32.mrb[0].mxu0
        %4886 = vmatprep.mubr.f32.mxu0 %v4539
        %4887 = vmatmul.mubr.f32.gmra.mrb[0].mxu0 %v4403
        %v4888 = vpop.f32.mrb[0].mxu0
        %v4889 = vadd.f32 %v4595, %v4888
        %v4890 = vpop.f32.mrb[0].mxu0
        %4891 = vmatprep.mubr.f32.mxu0 %v4540
        %4892 = vmatmul.mubr.f32.gmra.mrb[0].mxu0 %v4404
        %v4893 = vpop.f32.mrb[0].mxu0
        %v4894 = vadd.f32 %v4595, %v4893
        %v4895 = vpop.f32.mrb[0].mxu0
        %4896 = vmatprep.mubr.f32.mxu0 %v4541
        %4897 = vmatmul.mubr.f32.gmra.mrb[0].mxu0 %v4405
        %v4898 = vpop.f32.mrb[0].mxu0
        %v4899 = vadd.f32 %v4595, %v4898
        %v4900 = vpop.f32.mrb[0].mxu0
        %4901 = vmatprep.mubr.f32.mxu0 %v4542
        %4902 = vmatmul.mubr.f32.gmra.mrb[0].mxu0 %v4406
        %v4903 = vpop.f32.mrb[0].mxu0
        %v4904 = vadd.f32 %v4595, %v4903
        %v4905 = vpop.f32.mrb[0].mxu0
        %4906 = vmatprep.mubr.f32.mxu0 %v4543
        %4907 = vmatmul.mubr.f32.gmra.mrb[0].mxu0 %v4407
        %v4908 = vpop.f32.mrb[0].mxu0
        %v4909 = vadd.f32 %v4595, %v4908
        %v4910 = vpop.f32.mrb[0].mxu0
        %4911 = vmatprep.mubr.f32.mxu0 %v4544
        %4912 = vmatmul.mubr.f32.gmra.mrb[0].mxu0 %v4408
        %v4913 = vpop.f32.mrb[0].mxu0
        %v4914 = vadd.f32 %v4595, %v4913
        %v4915 = vpop.f32.mrb[0].mxu0
        %4916 = vmatprep.mubr.f32.mxu0 %v4545
        %4917 = vmatmul.mubr.f32.gmra.mrb[0].mxu0 %v4409
        %v4918 = vpop.f32.mrb[0].mxu0
        %v4919 = vadd.f32 %v4595, %v4918
        %v4920 = vpop.f32.mrb[0].mxu0
        %4921 = vmatprep.mubr.f32.mxu0 %v4546
        %4922 = vmatmul.mubr.f32.gmra.mrb[0].mxu0 %v4410
        %v4923 = vpop.f32.mrb[0].mxu0
        %v4924 = vadd.f32 %v4595, %v4923
        %v4925 = vpop.f32.mrb[0].mxu0
        %4926 = vmatprep.mubr.f32.mxu0 %v4547
        %4927 = vmatmul.mubr.f32.gmra.mrb[0].mxu0 %v4411
        %v4928 = vpop.f32.mrb[0].mxu0
        %v4929 = vadd.f32 %v4595, %v4928
        %v4930 = vpop.f32.mrb[0].mxu0
        %4931 = vmatprep.mubr.f32.mxu0 %v4548
        %4932 = vmatmul.mubr.f32.gmra.mrb[0].mxu0 %v4412
        %v4933 = vpop.f32.mrb[0].mxu0
        %v4934 = vadd.f32 %v4595, %v4933
        %v4935 = vpop.f32.mrb[0].mxu0
        %4936 = vmatprep.mubr.f32.mxu0 %v4549
        %4937 = vmatmul.mubr.f32.gmra.mrb[0].mxu0 %v4413
        %v4938 = vpop.f32.mrb[0].mxu0
        %v4939 = vadd.f32 %v4595, %v4938
        %v4940 = vpop.f32.mrb[0].mxu0
        %4941 = vmatprep.mubr.f32.mxu0 %v4550
        %4942 = vmatmul.mubr.f32.gmra.mrb[0].mxu0 %v4414
        %v4943 = vpop.f32.mrb[0].mxu0
        %v4944 = vadd.f32 %v4595, %v4943
        %v4945 = vpop.f32.mrb[0].mxu0
        %4946 = vmatprep.mubr.f32.mxu0 %v4551
        %4947 = vmatmul.mubr.f32.gmra.mrb[0].mxu0 %v4415
        %v4948 = vpop.f32.mrb[0].mxu0
        %v4949 = vadd.f32 %v4595, %v4948
        %v4950 = vpop.f32.mrb[0].mxu0
        %4951 = vmatprep.mubr.f32.mxu0 %v4552
        %4952 = vmatmul.mubr.f32.gmra.mrb[0].mxu0 %v4416
        %v4953 = vpop.f32.mrb[0].mxu0
        %v4954 = vadd.f32 %v4595, %v4953
        %v4955 = vpop.f32.mrb[0].mxu0
        %4956 = vmatprep.mubr.f32.mxu0 %v4553
        %4957 = vmatmul.mubr.f32.gmra.mrb[0].mxu0 %v4417
        %v4958 = vpop.f32.mrb[0].mxu0
        %v4959 = vadd.f32 %v4595, %v4958
        %v4960 = vpop.f32.mrb[0].mxu0
        %4961 = vmatprep.mubr.f32.mxu0 %v4554
        %4962 = vmatmul.mubr.f32.gmra.mrb[0].mxu0 %v4418
        %v4963 = vpop.f32.mrb[0].mxu0
        %v4964 = vadd.f32 %v4595, %v4963
        %v4965 = vpop.f32.mrb[0].mxu0
        %4966 = vmatprep.mubr.f32.mxu0 %v4555
        %4967 = vmatmul.mubr.f32.gmra.mrb[0].mxu0 %v4419
        %v4968 = vpop.f32.mrb[0].mxu0
        %v4969 = vadd.f32 %v4595, %v4968
        %v4970 = vpop.f32.mrb[0].mxu0
        %4971 = vmatprep.mubr.f32.mxu0 %v4556
        %4972 = vmatmul.mubr.f32.gmra.mrb[0].mxu0 %v4420
        %v4973 = vpop.f32.mrb[0].mxu0
        %v4974 = vadd.f32 %v4595, %v4973
        %v4975 = vpop.f32.mrb[0].mxu0
        %4976 = vmatprep.mubr.f32.mxu0 %v4557
        %4977 = vmatmul.mubr.f32.gmra.mrb[0].mxu0 %v4421
        %v4978 = vpop.f32.mrb[0].mxu0
        %v4979 = vadd.f32 %v4595, %v4978
        %v4980 = vpop.f32.mrb[0].mxu0
        %4981 = vdwg.mxu0
        %v4982 = vmax.f32 %v4664, 0.0
        %v4983 = vmax.f32 %v4669, 0.0
        %v4984 = vmax.f32 %v4674, 0.0
        %v4985 = vmax.f32 %v4679, 0.0
        %v4986 = vmax.f32 %v4684, 0.0
        %v4987 = vmax.f32 %v4689, 0.0
        %v4988 = vmax.f32 %v4694, 0.0
        %v4989 = vmax.f32 %v4699, 0.0
        %v4990 = vmax.f32 %v4704, 0.0
        %v4991 = vmax.f32 %v4709, 0.0
        %v4992 = vmax.f32 %v4714, 0.0
        %v4993 = vmax.f32 %v4719, 0.0
        %v4994 = vmax.f32 %v4724, 0.0
        %v4995 = vmax.f32 %v4729, 0.0
        %v4996 = vmax.f32 %v4734, 0.0
        %v4997 = vmax.f32 %v4739, 0.0
        %v4998 = vmax.f32 %v4744, 0.0
        %v4999 = vmax.f32 %v4749, 0.0
        %v5000 = vmax.f32 %v4754, 0.0
        %v5001 = vmax.f32 %v4759, 0.0
        %v5002 = vmax.f32 %v4764, 0.0
        %v5003 = vmax.f32 %v4769, 0.0
        %v5004 = vmax.f32 %v4774, 0.0
        %v5005 = vmax.f32 %v4779, 0.0
        %v5006 = vmax.f32 %v4784, 0.0
        %v5007 = vmax.f32 %v4789, 0.0
        %v5008 = vmax.f32 %v4794, 0.0
        %v5009 = vmax.f32 %v4799, 0.0
        %v5010 = vmax.f32 %v4804, 0.0
        %v5011 = vmax.f32 %v4809, 0.0
        %v5012 = vmax.f32 %v4814, 0.0
        %v5013 = vmax.f32 %v4819, 0.0
        %v5014 = vmax.f32 %v4824, 0.0
        %v5015 = vmax.f32 %v4829, 0.0
        %v5016 = vmax.f32 %v4834, 0.0
        %v5017 = vmax.f32 %v4839, 0.0
        %v5018 = vmax.f32 %v4844, 0.0
        %v5019 = vmax.f32 %v4849, 0.0
        %v5020 = vmax.f32 %v4854, 0.0
        %v5021 = vmax.f32 %v4859, 0.0
        %v5022 = vmax.f32 %v4864, 0.0
        %v5023 = vmax.f32 %v4869, 0.0
        %v5024 = vmax.f32 %v4874, 0.0
        %v5025 = vmax.f32 %v4879, 0.0
        %v5026 = vmax.f32 %v4884, 0.0
        %v5027 = vmax.f32 %v4889, 0.0
        %v5028 = vmax.f32 %v4894, 0.0
        %v5029 = vmax.f32 %v4899, 0.0
        %v5030 = vmax.f32 %v4904, 0.0
        %v5031 = vmax.f32 %v4909, 0.0
        %v5032 = vmax.f32 %v4914, 0.0
        %v5033 = vmax.f32 %v4919, 0.0
        %v5034 = vmax.f32 %v4924, 0.0
        %v5035 = vmax.f32 %v4929, 0.0
        %v5036 = vmax.f32 %v4934, 0.0
        %v5037 = vmax.f32 %v4939, 0.0
        %v5038 = vmax.f32 %v4944, 0.0
        %v5039 = vmax.f32 %v4949, 0.0
        %v5040 = vmax.f32 %v4954, 0.0
        %v5041 = vmax.f32 %v4959, 0.0
        %v5042 = vmax.f32 %v4964, 0.0
        %v5043 = vmax.f32 %v4969, 0.0
        %v5044 = vmax.f32 %v4974, 0.0
        %v5045 = vmax.f32 %v4979, 0.0
        %5046 = vmatprep.subr.mxu0 0.0
        %5047 = vmatpush1.msra.mxu0 %v4982
        %5048 = vmatprep.subr.mxu0 0.0
        %5049 = vmatpush1.msra.mxu0 %v4983
        %5050 = vmatprep.subr.mxu0 0.0
        %5051 = vmatpush1.msra.mxu0 %v4984
        %5052 = vmatprep.subr.mxu0 0.0
        %5053 = vmatpush1.msra.mxu0 %v4985
        %5054 = vmatprep.subr.mxu0 0.0
        %5055 = vmatpush1.msra.mxu0 %v4986
        %5056 = vmatprep.subr.mxu0 0.0
        %5057 = vmatpush1.msra.mxu0 %v4987
        %5058 = vmatprep.subr.mxu0 0.0
        %5059 = vmatpush1.msra.mxu0 %v4988
        %5060 = vmatprep.subr.mxu0 0.0
        %5061 = vmatpush1.msra.mxu0 %v4989
        %5062 = vmatprep.subr.mxu0 0.0
        %5063 = vmatpush1.msra.mxu0 %v4990
        %5064 = vmatprep.subr.mxu0 0.0
        %5065 = vmatpush1.msra.mxu0 %v4991
        %5066 = vmatprep.subr.mxu0 0.0
        %5067 = vmatpush1.msra.mxu0 %v4992
        %5068 = vmatprep.subr.mxu0 0.0
        %5069 = vmatpush1.msra.mxu0 %v4993
        %5070 = vmatprep.subr.mxu0 0.0
        %5071 = vmatpush1.msra.mxu0 %v4994
        %5072 = vmatprep.subr.mxu0 0.0
        %5073 = vmatpush1.msra.mxu0 %v4995
        %5074 = vmatprep.subr.mxu0 0.0
        %5075 = vmatpush1.msra.mxu0 %v4996
        %5076 = vmatprep.subr.mxu0 0.0
        %5077 = vmatpush1.msra.mxu0 %v4997
        %5078 = vmatprep.subr.mxu0 0.0
        %5079 = vmatpush1.msra.mxu0 %v4998
        %5080 = vmatprep.subr.mxu0 0.0
        %5081 = vmatpush1.msra.mxu0 %v4999
        %5082 = vmatprep.subr.mxu0 0.0
        %5083 = vmatpush1.msra.mxu0 %v5000
        %5084 = vmatprep.subr.mxu0 0.0
        %5085 = vmatpush1.msra.mxu0 %v5001
        %5086 = vmatprep.subr.mxu0 0.0
        %5087 = vmatpush1.msra.mxu0 %v5002
        %5088 = vmatprep.subr.mxu0 0.0
        %5089 = vmatpush1.msra.mxu0 %v5003
        %5090 = vmatprep.subr.mxu0 0.0
        %5091 = vmatpush1.msra.mxu0 %v5004
        %5092 = vmatprep.subr.mxu0 0.0
        %5093 = vmatpush1.msra.mxu0 %v5005
        %5094 = vmatprep.subr.mxu0 0.0
        %5095 = vmatpush1.msra.mxu0 %v5006
        %5096 = vmatprep.subr.mxu0 0.0
        %5097 = vmatpush1.msra.mxu0 %v5007
        %5098 = vmatprep.subr.mxu0 0.0
        %5099 = vmatpush1.msra.mxu0 %v5008
        %5100 = vmatprep.subr.mxu0 0.0
        %5101 = vmatpush1.msra.mxu0 %v5009
        %5102 = vmatprep.subr.mxu0 0.0
        %5103 = vmatpush1.msra.mxu0 %v5010
        %5104 = vmatprep.subr.mxu0 0.0
        %5105 = vmatpush1.msra.mxu0 %v5011
        %5106 = vmatprep.subr.mxu0 0.0
        %5107 = vmatpush1.msra.mxu0 %v5012
        %5108 = vmatprep.subr.mxu0 0.0
        %5109 = vmatpush1.msra.mxu0 %v5013
        %5110 = vmatprep.mubr.f32.mxu0 1.0
        %5111 = vmatmul.mubr.f32.gmra.mrb[0].mxu0 1.0
        %v5112 = vpop.f32.mrb[0].mxu0
        %v5113 = vadd.f32 0.0, %v5112
        %v5114 = vpop.f32.mrb[0].mxu0
        %5115 = vdwg.mxu0
        %5116 = vmatprep.subr.mxu0 0.0
        %5117 = vmatpush1.msra.mxu0 %v5014
        %5118 = vmatprep.subr.mxu0 0.0
        %5119 = vmatpush1.msra.mxu0 %v5015
        %5120 = vmatprep.subr.mxu0 0.0
        %5121 = vmatpush1.msra.mxu0 %v5016
        %5122 = vmatprep.subr.mxu0 0.0
        %5123 = vmatpush1.msra.mxu0 %v5017
        %5124 = vmatprep.subr.mxu0 0.0
        %5125 = vmatpush1.msra.mxu0 %v5018
        %5126 = vmatprep.subr.mxu0 0.0
        %5127 = vmatpush1.msra.mxu0 %v5019
        %5128 = vmatprep.subr.mxu0 0.0
        %5129 = vmatpush1.msra.mxu0 %v5020
        %5130 = vmatprep.subr.mxu0 0.0
        %5131 = vmatpush1.msra.mxu0 %v5021
        %5132 = vmatprep.subr.mxu0 0.0
        %5133 = vmatpush1.msra.mxu0 %v5022
        %5134 = vmatprep.subr.mxu0 0.0
        %5135 = vmatpush1.msra.mxu0 %v5023
        %5136 = vmatprep.subr.mxu0 0.0
        %5137 = vmatpush1.msra.mxu0 %v5024
        %5138 = vmatprep.subr.mxu0 0.0
        %5139 = vmatpush1.msra.mxu0 %v5025
        %5140 = vmatprep.subr.mxu0 0.0
        %5141 = vmatpush1.msra.mxu0 %v5026
        %5142 = vmatprep.subr.mxu0 0.0
        %5143 = vmatpush1.msra.mxu0 %v5027
        %5144 = vmatprep.subr.mxu0 0.0
        %5145 = vmatpush1.msra.mxu0 %v5028
        %5146 = vmatprep.subr.mxu0 0.0
        %5147 = vmatpush1.msra.mxu0 %v5029
        %5148 = vmatprep.subr.mxu0 0.0
        %5149 = vmatpush1.msra.mxu0 %v5030
        %5150 = vmatprep.subr.mxu0 0.0
        %5151 = vmatpush1.msra.mxu0 %v5031
        %5152 = vmatprep.subr.mxu0 0.0
        %5153 = vmatpush1.msra.mxu0 %v5032
        %5154 = vmatprep.subr.mxu0 0.0
        %5155 = vmatpush1.msra.mxu0 %v5033
        %5156 = vmatprep.subr.mxu0 0.0
        %5157 = vmatpush1.msra.mxu0 %v5034
        %5158 = vmatprep.subr.mxu0 0.0
        %5159 = vmatpush1.msra.mxu0 %v5035
        %5160 = vmatprep.subr.mxu0 0.0
        %5161 = vmatpush1.msra.mxu0 %v5036
        %5162 = vmatprep.subr.mxu0 0.0
        %5163 = vmatpush1.msra.mxu0 %v5037
        %5164 = vmatprep.subr.mxu0 0.0
        %5165 = vmatpush1.msra.mxu0 %v5038
        %5166 = vmatprep.subr.mxu0 0.0
        %5167 = vmatpush1.msra.mxu0 %v5039
        %5168 = vmatprep.subr.mxu0 0.0
        %5169 = vmatpush1.msra.mxu0 %v5040
        %5170 = vmatprep.subr.mxu0 0.0
        %5171 = vmatpush1.msra.mxu0 %v5041
        %5172 = vmatprep.subr.mxu0 0.0
        %5173 = vmatpush1.msra.mxu0 %v5042
        %5174 = vmatprep.subr.mxu0 0.0
        %5175 = vmatpush1.msra.mxu0 %v5043
        %5176 = vmatprep.subr.mxu0 0.0
        %5177 = vmatpush1.msra.mxu0 %v5044
        %5178 = vmatprep.subr.mxu0 0.0
        %5179 = vmatpush1.msra.mxu0 %v5045
        %5180 = vmatprep.mubr.f32.mxu0 1.0
        %5181 = vmatmul.mubr.f32.gmra.mrb[0].mxu0 1.0
        %v5182 = vpop.f32.mrb[0].mxu0
        %v5183 = vadd.f32 %v5113, %v5182
        %v5184 = vpop.f32.mrb[0].mxu0
        %5185 = vdwg.mxu0
        %v5186 = vmax.f32 %v5183, 0.0
        %vm5187 = vcmask 122880
        %5188 = vst.msk [vmem:[%s322] sm:$0x1] %vm5187, %v5186
        %s5189 = sand.u32 %s225, 1
        %s5190 = scalar_lea.sflag [#allocation3], %s5189
        %s5191 = sand.u32 %s225, 1
        %s5192 = scalar_lea.vmem [#allocation2], %s5191
        // Predicated region
        $region57: #{tpu_custom_call.1} parent=55 // pred_check
          %p5193 = pneg %p235
        $region58: #{tpu_custom_call.1} parent=55 // pred_check_branch
          %5195 = sbr.rel (%p5193) target = $region60
        $region59: #{tpu_custom_call.1} parent=55 // pred_region
          %s5197 = ssub.s32 16, 16
          %5198 = vsyncadd %s5190, %s5197
          %s5199 = smul.addr %s23, 16
          %s5200 = scalar_lea.hbm %s9, %s5199
          %s5202 = sshll.u32 %s5192, 4
          %s5203 = int_to_ptr.vmem [resolvable:$true] %s5202
          %5205 = dma.vmem_to_hbm [thread:$0]  %s5203, 16, %s5200, %s5190
        $region60: #{tpu_custom_call.1} parent=55 // pred_fallthru
          _
      $region56: #{tpu_custom_call.1} parent=5 // pred_fallthru
        _
      %p5206 = scmp.le.s32.totalorder 2, %s18
      // Predicated region
      $region61: #{tpu_custom_call.1} parent=5 // pred_check
        %p5207 = pneg %p5206
      $region62: #{tpu_custom_call.1} parent=5 // pred_check_branch
        %5209 = sbr.rel (%p5207) target = $region64
      $region63: #{tpu_custom_call.1} parent=5 // pred_region
        %s5210 = ssub.s32 %s18, 2
        // Predicated region
        $region65: #{tpu_custom_call.1} parent=63 // pred_check
          %p5211 = pneg %p241
        $region66: #{tpu_custom_call.1} parent=63 // pred_check_branch
          %5213 = sbr.rel (%p5211) target = $region68
        $region67: #{tpu_custom_call.1} parent=63 // pred_region
          %s5214 = sand.u32 %s226, 1
          %s5215 = scalar_lea.sflag [#allocation3], %s5214
          %s5216 = sand.u32 %s226, 1
          %s5217 = scalar_lea.vmem [#allocation2], %s5216
          %5218 = dma.done %s5215, 16
        $region68: #{tpu_custom_call.1} parent=63 // pred_fallthru
          _
      $region64: #{tpu_custom_call.1} parent=5 // pred_fallthru
        _
    $region6: #{tpu_custom_call.1} parent=1 // loop_footer
      %s22 = sadd.s32 1, %s18
    $region7: #{tpu_custom_call.1} parent=1 // loop_footer_branch
      %17 = sbr.rel target = $region3
    $region8: #{tpu_custom_call.1} parent=1 // loop_exit
      _
    %5219 = vsyncpa [#allocation3], 1
    %s5220 = scalar_lea.sflag [#allocation3], 1
    %5221 = vsyncpa %s5220, 1

</llo_original>
